<compile_context>
chip_gen: v6e
topology: v6e:2x2x1
jax: 0.10.0
libtpu: 0.0.40
codegen_flags: <defaults>
</compile_context>

<pallas_src>
import functools

import jax
import jax.numpy as jnp
from jax.experimental import pallas as pl
from jax.experimental.pallas import tpu as pltpu

D = 768       # hidden size (hardcoded in the torch module)
FF = 1024     # feed-forward size (hardcoded in the torch module)
EPS = 1e-5    # nn.LayerNorm default eps

ROW_TILE_CAP = 256            # rows per grid step (v5e-friendly; scales to big B*S)
VOCAB_TILE_CAP = 512          # vocab rows per grid step in the cls head (v7x VMEM)
VMEM_LIMIT = 64 * 1024 * 1024 # raised scoped-VMEM limit for the fused kernels


def _row_tile(m, cap=ROW_TILE_CAP):
    # Full-array block when small (always a legal block shape), otherwise a
    # (8,128)-aligned cap; the grid uses pl.cdiv so partial tail tiles are
    # masked by Pallas (all ops are row-independent).
    return m if m <= cap else cap


def _layernorm(x, g, b):
    mean = jnp.mean(x, axis=-1, keepdims=True)
    xc = x - mean
    var = jnp.mean(xc * xc, axis=-1, keepdims=True)     # biased variance (torch)
    return xc * jax.lax.rsqrt(var + EPS) * g + b


# ---------------------------------------------------------------------------
# Kernels
# ---------------------------------------------------------------------------
def _add_ln_kernel(a_ref, b_ref, g_ref, beta_ref, o_ref):
    """o = LayerNorm(a + b) over the last dim."""
    o_ref[...] = _layernorm(a_ref[...] + b_ref[...], g_ref[...], beta_ref[...])


def _ln_ffn_kernel(x_ref, p_ref, g2_ref, be2_ref, w1_ref, b1_ref, w2_ref, b2_ref,
                   g3_ref, be3_ref, o_ref):
    """Fused:  t2 = LN2(x + p);  o = LN3(t2 + Linear2(ReLU(Linear1(t2))))."""
    t2 = _layernorm(x_ref[...] + p_ref[...], g2_ref[...], be2_ref[...])   # (tm, D) f32
    h = jnp.dot(t2.astype(jnp.bfloat16), w1_ref[...],
                preferred_element_type=jnp.float32) + b1_ref[...]         # (tm, FF)
    h = jnp.maximum(h, 0.0)
    y = jnp.dot(h.astype(jnp.bfloat16), w2_ref[...],
                preferred_element_type=jnp.float32) + b2_ref[...]         # (tm, D)
    o_ref[...] = _layernorm(t2 + y, g3_ref[...], be3_ref[...])


def _cls_argmax_kernel(x_ref, wc_ref, bc_ref, o_ref, max_sc, idx_sc, *, vocab, tv):
    """Vocab-tiled logits + running argmax; lane-dense (1, tm) int32 output."""
    j = pl.program_id(1)

    @pl.when(j == 0)
    def _():
        max_sc[...] = jnp.full(max_sc.shape, -jnp.inf, jnp.float32)
        idx_sc[...] = jnp.zeros(idx_sc.shape, jnp.int32)

    x = x_ref[...].astype(jnp.bfloat16)        # (tm, D)
    w = wc_ref[...]                            # (tv, D) bf16 (torch (out, in) layout)
    # logits_T[v, t] = sum_d w[v, d] * x[t, d]  -> (tv, tm); rows live on lanes so
    # the reduction + output are lane-dense (no narrow (tm,1) masked stores).
    logits = jax.lax.dot_general(w, x, (((1,), (1,)), ((), ())),
                                 preferred_element_type=jnp.float32)
    logits = logits + bc_ref[...]              # (tv, 1) bias broadcast over rows
    v_idx = jax.lax.broadcasted_iota(jnp.int32, logits.shape, 0) + j * tv
    logits = jnp.where(v_idx < vocab, logits, -jnp.inf)   # mask padded vocab rows

    m_loc = jnp.max(logits, axis=0, keepdims=True)                    # (1, tm)
    cand = jnp.where(logits == m_loc, v_idx, jnp.int32(vocab))
    i_loc = jnp.min(cand, axis=0, keepdims=True)                      # (1, tm)

    better = m_loc > max_sc[...]               # strict > keeps earliest tie index
    idx_sc[...] = jnp.where(better, i_loc, idx_sc[...])
    max_sc[...] = jnp.maximum(max_sc[...], m_loc)

    @pl.when(j == pl.num_programs(1) - 1)
    def _():
        o_ref[...] = idx_sc[...]


# ---------------------------------------------------------------------------
# pallas_call wrappers
# ---------------------------------------------------------------------------
def add_layernorm(a, b, gamma, beta):
    M, d = a.shape
    tm = _row_tile(M)
    return pl.pallas_call(
        _add_ln_kernel,
        out_shape=jax.ShapeDtypeStruct((M, d), jnp.float32),
        grid=(pl.cdiv(M, tm),),
        in_specs=[pl.BlockSpec((tm, d), lambda i: (i, 0)),
                  pl.BlockSpec((tm, d), lambda i: (i, 0)),
                  pl.BlockSpec((1, d), lambda i: (0, 0)),
                  pl.BlockSpec((1, d), lambda i: (0, 0))],
        out_specs=pl.BlockSpec((tm, d), lambda i: (i, 0)),
        compiler_params=pltpu.CompilerParams(
            dimension_semantics=("parallel",),
            vmem_limit_bytes=VMEM_LIMIT),
    )(a, b, gamma, beta)


def ln_ffn_block(x, perm, g2, be2, w1, b1, w2, b2, g3, be3):
    M, d = x.shape
    ff = w1.shape[1]
    tm = _row_tile(M)
    return pl.pallas_call(
        _ln_ffn_kernel,
        out_shape=jax.ShapeDtypeStruct((M, d), jnp.float32),
        grid=(pl.cdiv(M, tm),),
        in_specs=[pl.BlockSpec((tm, d), lambda i: (i, 0)),
                  pl.BlockSpec((tm, d), lambda i: (i, 0)),
                  pl.BlockSpec((1, d), lambda i: (0, 0)),
                  pl.BlockSpec((1, d), lambda i: (0, 0)),
                  pl.BlockSpec((d, ff), lambda i: (0, 0)),
                  pl.BlockSpec((1, ff), lambda i: (0, 0)),
                  pl.BlockSpec((ff, d), lambda i: (0, 0)),
                  pl.BlockSpec((1, d), lambda i: (0, 0)),
                  pl.BlockSpec((1, d), lambda i: (0, 0)),
                  pl.BlockSpec((1, d), lambda i: (0, 0))],
        out_specs=pl.BlockSpec((tm, d), lambda i: (i, 0)),
        compiler_params=pltpu.CompilerParams(
            dimension_semantics=("parallel",),
            vmem_limit_bytes=VMEM_LIMIT),
    )(x, perm, g2, be2, w1, b1, w2, b2, g3, be3)


def cls_argmax(x, wc, bc):
    M, d = x.shape
    vocab = wc.shape[0]
    tm = _row_tile(M)
    tv = vocab if vocab <= VOCAB_TILE_CAP else VOCAB_TILE_CAP
    kernel = functools.partial(_cls_argmax_kernel, vocab=vocab, tv=tv)
    return pl.pallas_call(
        kernel,
        out_shape=jax.ShapeDtypeStruct((1, M), jnp.int32),
        grid=(pl.cdiv(M, tm), pl.cdiv(vocab, tv)),
        in_specs=[pl.BlockSpec((tm, d), lambda i, j: (i, 0)),
                  pl.BlockSpec((tv, d), lambda i, j: (j, 0)),
                  pl.BlockSpec((tv, 1), lambda i, j: (j, 0))],
        out_specs=pl.BlockSpec((1, tm), lambda i, j: (0, i)),
        scratch_shapes=[pltpu.VMEM((1, tm), jnp.float32),
                        pltpu.VMEM((1, tm), jnp.int32)],
        compiler_params=pltpu.CompilerParams(
            dimension_semantics=("parallel", "arbitrary"),
            vmem_limit_bytes=VMEM_LIMIT),
    )(x, wc, bc)


# ---------------------------------------------------------------------------
# Parameters (deterministic synthetic init — no checkpoint loading)
# ---------------------------------------------------------------------------
def init_params(key, vocab_len, seq_max_len, n_layers=3):
    scale = 0.02
    keys = iter(jax.random.split(key, 3 + 2 * n_layers))
    params = {
        "token_emb": scale * jax.random.normal(next(keys), (vocab_len, D), jnp.float32),
        "pos_emb": scale * jax.random.normal(next(keys), (seq_max_len, D), jnp.float32),
        "layers": [],
        # cls weight kept in torch (out, in) layout, bf16 MXU operand.
        "cls_w": (scale * jax.random.normal(next(keys), (vocab_len, D),
                                            jnp.float32)).astype(jnp.bfloat16),
        "cls_b": jnp.zeros((vocab_len, 1), jnp.float32),
    }
    for _ in range(n_layers):
        # NOTE: Q/K/V weights of MultiHeadAttention are dead w.r.t. the output
        # (see faithfulness note above), so they are not allocated.
        layer = {
            "ln1_g": jnp.ones((1, D), jnp.float32),
            "ln1_b": jnp.zeros((1, D), jnp.float32),
            "ln2_g": jnp.ones((1, D), jnp.float32),
            "ln2_b": jnp.zeros((1, D), jnp.float32),
            "ff_w1": (scale * jax.random.normal(next(keys), (D, FF),
                                                jnp.float32)).astype(jnp.bfloat16),
            "ff_b1": jnp.zeros((1, FF), jnp.float32),
            "ff_w2": (scale * jax.random.normal(next(keys), (FF, D),
                                                jnp.float32)).astype(jnp.bfloat16),
            "ff_b2": jnp.zeros((1, D), jnp.float32),
            "ff_ln_g": jnp.ones((1, D), jnp.float32),
            "ff_ln_b": jnp.zeros((1, D), jnp.float32),
        }
        params["layers"].append(layer)
    return params


# ---------------------------------------------------------------------------
# Forward pass (inference branch: label is None -> argmax over vocab)
# ---------------------------------------------------------------------------
def gpt_forward(params, tokens):
    B, S = tokens.shape
    M = B * S
    # EmbeddingLayer: token_emb(x) + pos_emb(arange(S) broadcast to x's shape)
    pos = jnp.arange(S, dtype=jnp.int32)
    emb = params["token_emb"][tokens] + params["pos_emb"][pos][None, :, :]
    x = emb.astype(jnp.float32)                                    # (B, S, D)

    # TODO(synk): the padding/causal attention masks and Q/K/V projections of
    # the reference only feed a result that is immediately overwritten (dead
    # code), so they are omitted; the transpose(1,2)+reshape permute stays at
    # the XLA level (no clean Mosaic lowering for that (D,S)->(S,D) relayout
    # in-kernel), and everything downstream of each permute is fused.
    for lyr in params["layers"]:
        xf = x.reshape(M, D)
        perm = jnp.transpose(x, (0, 2, 1)).reshape(M, D)
        # "attention" sublayer 1:  LN1(x + P(x))
        t1 = add_layernorm(xf, perm, lyr["ln1_g"], lyr["ln1_b"])
        # fused "attention" sublayer 2 + Feed_Forward:
        #   t2 = LN2(t1 + P(t1));  out = LN3(t2 + FFN(t2))
        perm2 = jnp.transpose(t1.reshape(B, S, D), (0, 2, 1)).reshape(M, D)
        out = ln_ffn_block(t1, perm2, lyr["ln2_g"], lyr["ln2_b"],
                           lyr["ff_w1"], lyr["ff_b1"], lyr["ff_w2"], lyr["ff_b2"],
                           lyr["ff_ln_g"], lyr["ff_ln_b"])
        x = out.reshape(B, S, D)

    # cls head + argmax(dim=-1), vocab-tiled, lane-dense (1, M) output
    pred = cls_argmax(x.reshape(M, D), params["cls_w"], params["cls_b"])
    return pred.reshape(B, S)


if __name__ == "__main__":
    vocab_len = 128
    seq_max_len = 32
    B, S = 2, 8

    key = jax.random.PRNGKey(0)
    kp, kt = jax.random.split(key)
    params = init_params(kp, vocab_len, seq_max_len, n_layers=3)
    tokens = jax.random.randint(kt, (B, S), 0, vocab_len, dtype=jnp.int32)

    out = jax.jit(gpt_forward)(params, tokens)
    out = jax.block_until_ready(out)
    assert out.shape == (B, S)
    assert out.dtype == jnp.int32
    print("KERNEL_OK")
</pallas_src>

<mosaic_0001>
module attributes {stable_mosaic.version = 11 : i64} {
  func.func @_add_ln_kernel(%arg0: i32, %arg1: memref<16x768xf32, #tpu.memory_space<vmem>>, %arg2: memref<16x768xf32, #tpu.memory_space<vmem>>, %arg3: memref<1x768xf32, #tpu.memory_space<vmem>>, %arg4: memref<1x768xf32, #tpu.memory_space<vmem>>, %arg5: memref<16x768xf32, #tpu.memory_space<vmem>>) attributes {dimension_semantics = [#tpu.dimension_semantics<parallel>], iteration_bounds = array<i64: 1>, scalar_prefetch = 0 : i64, scratch_operands = 0 : i64, tpu.core_type = #tpu.core_type<tc>, window_params = [{transform_indices = @transform_0, window_bounds = array<i64: 16, 768>}, {transform_indices = @transform_1, window_bounds = array<i64: 16, 768>}, {pipeline_mode = #tpu.pipeline_mode<synchronous>, transform_indices = @transform_2, window_bounds = array<i64: 1, 768>}, {pipeline_mode = #tpu.pipeline_mode<synchronous>, transform_indices = @transform_3, window_bounds = array<i64: 1, 768>}, {transform_indices = @transform_4, window_bounds = array<i64: 16, 768>}]} {
    %c0 = arith.constant 0 : index
    %c0_0 = arith.constant 0 : index
    %0 = vector.load %arg1[%c0, %c0_0] : memref<16x768xf32, #tpu.memory_space<vmem>>, vector<16x768xf32>
    %c0_1 = arith.constant 0 : index
    %c0_2 = arith.constant 0 : index
    %1 = vector.load %arg2[%c0_1, %c0_2] : memref<16x768xf32, #tpu.memory_space<vmem>>, vector<16x768xf32>
    %2 = arith.addf %0, %1 : vector<16x768xf32>
    %c0_3 = arith.constant 0 : index
    %c0_4 = arith.constant 0 : index
    %3 = vector.load %arg3[%c0_3, %c0_4] : memref<1x768xf32, #tpu.memory_space<vmem>>, vector<1x768xf32>
    %c0_5 = arith.constant 0 : index
    %c0_6 = arith.constant 0 : index
    %4 = vector.load %arg4[%c0_5, %c0_6] : memref<1x768xf32, #tpu.memory_space<vmem>>, vector<1x768xf32>
    %cst = arith.constant dense<0.000000e+00> : vector<16xf32>
    %5 = vector.multi_reduction <add>, %2, %cst [1] : vector<16x768xf32> to vector<16xf32>
    %6 = vector.shape_cast %5 : vector<16xf32> to vector<16x1xf32>
    %cst_7 = arith.constant 7.680000e+02 : f32
    %7 = vector.broadcast %cst_7 : f32 to vector<16x1xf32>
    %8 = arith.divf %6, %7 : vector<16x1xf32>
    %9 = vector.broadcast %8 : vector<16x1xf32> to vector<16x768xf32>
    %10 = arith.subf %2, %9 : vector<16x768xf32>
    %11 = arith.mulf %10, %10 : vector<16x768xf32>
    %cst_8 = arith.constant dense<0.000000e+00> : vector<16xf32>
    %12 = vector.multi_reduction <add>, %11, %cst_8 [1] : vector<16x768xf32> to vector<16xf32>
    %13 = vector.shape_cast %12 : vector<16xf32> to vector<16x1xf32>
    %cst_9 = arith.constant 7.680000e+02 : f32
    %14 = vector.broadcast %cst_9 : f32 to vector<16x1xf32>
    %15 = arith.divf %13, %14 : vector<16x1xf32>
    %cst_10 = arith.constant 9.99999974E-6 : f32
    %16 = vector.broadcast %cst_10 : f32 to vector<16x1xf32>
    %17 = arith.addf %15, %16 : vector<16x1xf32>
    %18 = math.rsqrt %17 : vector<16x1xf32>
    %19 = vector.broadcast %18 : vector<16x1xf32> to vector<16x768xf32>
    %20 = arith.mulf %10, %19 : vector<16x768xf32>
    %21 = vector.broadcast %3 : vector<1x768xf32> to vector<16x768xf32>
    %22 = arith.mulf %20, %21 : vector<16x768xf32>
    %23 = vector.broadcast %4 : vector<1x768xf32> to vector<16x768xf32>
    %24 = arith.addf %22, %23 : vector<16x768xf32>
    %c0_11 = arith.constant 0 : index
    %c0_12 = arith.constant 0 : index
    %25 = vector.load %arg5[%c0_11, %c0_12] : memref<16x768xf32, #tpu.memory_space<vmem>>, vector<16x768xf32>
    tpu.vector_store %arg5[%c0_11, %c0_12], %24 {strides = array<i32>} : memref<16x768xf32, #tpu.memory_space<vmem>>, vector<16x768xf32>,
    return
  }
  func.func @transform_0(%arg0: i32) -> (i32, i32) {
    %c0_i32 = arith.constant 0 : i32
    %c0_i32_0 = arith.constant 0 : i32
    return %arg0, %c0_i32 : i32, i32
  }
  func.func @transform_1(%arg0: i32) -> (i32, i32) {
    %c0_i32 = arith.constant 0 : i32
    %c0_i32_0 = arith.constant 0 : i32
    return %arg0, %c0_i32 : i32, i32
  }
  func.func @transform_2(%arg0: i32) -> (i32, i32) {
    %c0_i32 = arith.constant 0 : i32
    %c0_i32_0 = arith.constant 0 : i32
    %c0_i32_1 = arith.constant 0 : i32
    return %c0_i32, %c0_i32_0 : i32, i32
  }
  func.func @transform_3(%arg0: i32) -> (i32, i32) {
    %c0_i32 = arith.constant 0 : i32
    %c0_i32_0 = arith.constant 0 : i32
    %c0_i32_1 = arith.constant 0 : i32
    return %c0_i32, %c0_i32_0 : i32, i32
  }
  func.func @transform_4(%arg0: i32) -> (i32, i32) {
    %c0_i32 = arith.constant 0 : i32
    %c0_i32_0 = arith.constant 0 : i32
    return %arg0, %c0_i32 : i32, i32
  }
}

module attributes {stable_mosaic.version = 11 : i64} {
  func.func @_ln_ffn_kernel(%arg0: i32, %arg1: memref<16x768xf32, #tpu.memory_space<vmem>>, %arg2: memref<16x768xf32, #tpu.memory_space<vmem>>, %arg3: memref<1x768xf32, #tpu.memory_space<vmem>>, %arg4: memref<1x768xf32, #tpu.memory_space<vmem>>, %arg5: memref<768x1024xbf16, #tpu.memory_space<vmem>>, %arg6: memref<1x1024xf32, #tpu.memory_space<vmem>>, %arg7: memref<1024x768xbf16, #tpu.memory_space<vmem>>, %arg8: memref<1x768xf32, #tpu.memory_space<vmem>>, %arg9: memref<1x768xf32, #tpu.memory_space<vmem>>, %arg10: memref<1x768xf32, #tpu.memory_space<vmem>>, %arg11: memref<16x768xf32, #tpu.memory_space<vmem>>) attributes {dimension_semantics = [#tpu.dimension_semantics<parallel>], iteration_bounds = array<i64: 1>, scalar_prefetch = 0 : i64, scratch_operands = 0 : i64, tpu.core_type = #tpu.core_type<tc>, window_params = [{transform_indices = @transform_0, window_bounds = array<i64: 16, 768>}, {transform_indices = @transform_1, window_bounds = array<i64: 16, 768>}, {pipeline_mode = #tpu.pipeline_mode<synchronous>, transform_indices = @transform_2, window_bounds = array<i64: 1, 768>}, {pipeline_mode = #tpu.pipeline_mode<synchronous>, transform_indices = @transform_3, window_bounds = array<i64: 1, 768>}, {pipeline_mode = #tpu.pipeline_mode<synchronous>, transform_indices = @transform_4, window_bounds = array<i64: 768, 1024>}, {pipeline_mode = #tpu.pipeline_mode<synchronous>, transform_indices = @transform_5, window_bounds = array<i64: 1, 1024>}, {pipeline_mode = #tpu.pipeline_mode<synchronous>, transform_indices = @transform_6, window_bounds = array<i64: 1024, 768>}, {pipeline_mode = #tpu.pipeline_mode<synchronous>, transform_indices = @transform_7, window_bounds = array<i64: 1, 768>}, {pipeline_mode = #tpu.pipeline_mode<synchronous>, transform_indices = @transform_8, window_bounds = array<i64: 1, 768>}, {pipeline_mode = #tpu.pipeline_mode<synchronous>, transform_indices = @transform_9, window_bounds = array<i64: 1, 768>}, {transform_indices = @transform_10, window_bounds = array<i64: 16, 768>}]} {
    %c0 = arith.constant 0 : index
    %c0_0 = arith.constant 0 : index
    %0 = vector.load %arg1[%c0, %c0_0] : memref<16x768xf32, #tpu.memory_space<vmem>>, vector<16x768xf32>
    %c0_1 = arith.constant 0 : index
    %c0_2 = arith.constant 0 : index
    %1 = vector.load %arg2[%c0_1, %c0_2] : memref<16x768xf32, #tpu.memory_space<vmem>>, vector<16x768xf32>
    %2 = arith.addf %0, %1 : vector<16x768xf32>
    %c0_3 = arith.constant 0 : index
    %c0_4 = arith.constant 0 : index
    %3 = vector.load %arg3[%c0_3, %c0_4] : memref<1x768xf32, #tpu.memory_space<vmem>>, vector<1x768xf32>
    %c0_5 = arith.constant 0 : index
    %c0_6 = arith.constant 0 : index
    %4 = vector.load %arg4[%c0_5, %c0_6] : memref<1x768xf32, #tpu.memory_space<vmem>>, vector<1x768xf32>
    %cst = arith.constant dense<0.000000e+00> : vector<16xf32>
    %5 = vector.multi_reduction <add>, %2, %cst [1] : vector<16x768xf32> to vector<16xf32>
    %6 = vector.shape_cast %5 : vector<16xf32> to vector<16x1xf32>
    %cst_7 = arith.constant 7.680000e+02 : f32
    %7 = vector.broadcast %cst_7 : f32 to vector<16x1xf32>
    %8 = arith.divf %6, %7 : vector<16x1xf32>
    %9 = vector.broadcast %8 : vector<16x1xf32> to vector<16x768xf32>
    %10 = arith.subf %2, %9 : vector<16x768xf32>
    %11 = arith.mulf %10, %10 : vector<16x768xf32>
    %cst_8 = arith.constant dense<0.000000e+00> : vector<16xf32>
    %12 = vector.multi_reduction <add>, %11, %cst_8 [1] : vector<16x768xf32> to vector<16xf32>
    %13 = vector.shape_cast %12 : vector<16xf32> to vector<16x1xf32>
    %cst_9 = arith.constant 7.680000e+02 : f32
    %14 = vector.broadcast %cst_9 : f32 to vector<16x1xf32>
    %15 = arith.divf %13, %14 : vector<16x1xf32>
    %cst_10 = arith.constant 9.99999974E-6 : f32
    %16 = vector.broadcast %cst_10 : f32 to vector<16x1xf32>
    %17 = arith.addf %15, %16 : vector<16x1xf32>
    %18 = math.rsqrt %17 : vector<16x1xf32>
    %19 = vector.broadcast %18 : vector<16x1xf32> to vector<16x768xf32>
    %20 = arith.mulf %10, %19 : vector<16x768xf32>
    %21 = vector.broadcast %3 : vector<1x768xf32> to vector<16x768xf32>
    %22 = arith.mulf %20, %21 : vector<16x768xf32>
    %23 = vector.broadcast %4 : vector<1x768xf32> to vector<16x768xf32>
    %24 = arith.addf %22, %23 : vector<16x768xf32>
    %25 = arith.truncf %24 : vector<16x768xf32> to vector<16x768xbf16>
    %c0_11 = arith.constant 0 : index
    %c0_12 = arith.constant 0 : index
    %26 = vector.load %arg5[%c0_11, %c0_12] : memref<768x1024xbf16, #tpu.memory_space<vmem>>, vector<768x1024xbf16>
    %cst_13 = arith.constant dense<0.000000e+00> : vector<16x1024xf32>
    %27 = tpu.matmul %25, %26, %cst_13 {dimension_numbers = #tpu.dot_dimension_numbers<[1], [0], [0], [1], [0, 0, 1, 1], [], []>} : vector<16x768xbf16>, vector<768x1024xbf16>, vector<16x1024xf32> -> vector<16x1024xf32>
    %c0_14 = arith.constant 0 : index
    %c0_15 = arith.constant 0 : index
    %28 = vector.load %arg6[%c0_14, %c0_15] : memref<1x1024xf32, #tpu.memory_space<vmem>>, vector<1x1024xf32>
    %29 = vector.broadcast %28 : vector<1x1024xf32> to vector<16x1024xf32>
    %30 = arith.addf %27, %29 : vector<16x1024xf32>
    %cst_16 = arith.constant 0.000000e+00 : f32
    %31 = vector.broadcast %cst_16 : f32 to vector<16x1024xf32>
    %32 = arith.maximumf %30, %31 : vector<16x1024xf32>
    %33 = arith.truncf %32 : vector<16x1024xf32> to vector<16x1024xbf16>
    %c0_17 = arith.constant 0 : index
    %c0_18 = arith.constant 0 : index
    %34 = vector.load %arg7[%c0_17, %c0_18] : memref<1024x768xbf16, #tpu.memory_space<vmem>>, vector<1024x768xbf16>
    %cst_19 = arith.constant dense<0.000000e+00> : vector<16x768xf32>
    %35 = tpu.matmul %33, %34, %cst_19 {dimension_numbers = #tpu.dot_dimension_numbers<[1], [0], [0], [1], [0, 0, 1, 1], [], []>} : vector<16x1024xbf16>, vector<1024x768xbf16>, vector<16x768xf32> -> vector<16x768xf32>
    %c0_20 = arith.constant 0 : index
    %c0_21 = arith.constant 0 : index
    %36 = vector.load %arg8[%c0_20, %c0_21] : memref<1x768xf32, #tpu.memory_space<vmem>>, vector<1x768xf32>
    %37 = vector.broadcast %36 : vector<1x768xf32> to vector<16x768xf32>
    %38 = arith.addf %35, %37 : vector<16x768xf32>
    %39 = arith.addf %24, %38 : vector<16x768xf32>
    %c0_22 = arith.constant 0 : index
    %c0_23 = arith.constant 0 : index
    %40 = vector.load %arg9[%c0_22, %c0_23] : memref<1x768xf32, #tpu.memory_space<vmem>>, vector<1x768xf32>
    %c0_24 = arith.constant 0 : index
    %c0_25 = arith.constant 0 : index
    %41 = vector.load %arg10[%c0_24, %c0_25] : memref<1x768xf32, #tpu.memory_space<vmem>>, vector<1x768xf32>
    %cst_26 = arith.constant dense<0.000000e+00> : vector<16xf32>
    %42 = vector.multi_reduction <add>, %39, %cst_26 [1] : vector<16x768xf32> to vector<16xf32>
    %43 = vector.shape_cast %42 : vector<16xf32> to vector<16x1xf32>
    %cst_27 = arith.constant 7.680000e+02 : f32
    %44 = vector.broadcast %cst_27 : f32 to vector<16x1xf32>
    %45 = arith.divf %43, %44 : vector<16x1xf32>
    %46 = vector.broadcast %45 : vector<16x1xf32> to vector<16x768xf32>
    %47 = arith.subf %39, %46 : vector<16x768xf32>
    %48 = arith.mulf %47, %47 : vector<16x768xf32>
    %cst_28 = arith.constant dense<0.000000e+00> : vector<16xf32>
    %49 = vector.multi_reduction <add>, %48, %cst_28 [1] : vector<16x768xf32> to vector<16xf32>
    %50 = vector.shape_cast %49 : vector<16xf32> to vector<16x1xf32>
    %cst_29 = arith.constant 7.680000e+02 : f32
    %51 = vector.broadcast %cst_29 : f32 to vector<16x1xf32>
    %52 = arith.divf %50, %51 : vector<16x1xf32>
    %cst_30 = arith.constant 9.99999974E-6 : f32
    %53 = vector.broadcast %cst_30 : f32 to vector<16x1xf32>
    %54 = arith.addf %52, %53 : vector<16x1xf32>
    %55 = math.rsqrt %54 : vector<16x1xf32>
    %56 = vector.broadcast %55 : vector<16x1xf32> to vector<16x768xf32>
    %57 = arith.mulf %47, %56 : vector<16x768xf32>
    %58 = vector.broadcast %40 : vector<1x768xf32> to vector<16x768xf32>
    %59 = arith.mulf %57, %58 : vector<16x768xf32>
    %60 = vector.broadcast %41 : vector<1x768xf32> to vector<16x768xf32>
    %61 = arith.addf %59, %60 : vector<16x768xf32>
    %c0_31 = arith.constant 0 : index
    %c0_32 = arith.constant 0 : index
    %62 = vector.load %arg11[%c0_31, %c0_32] : memref<16x768xf32, #tpu.memory_space<vmem>>, vector<16x768xf32>
    tpu.vector_store %arg11[%c0_31, %c0_32], %61 {strides = array<i32>} : memref<16x768xf32, #tpu.memory_space<vmem>>, vector<16x768xf32>,
    return
  }
  func.func @transform_0(%arg0: i32) -> (i32, i32) {
    %c0_i32 = arith.constant 0 : i32
    %c0_i32_0 = arith.constant 0 : i32
    return %arg0, %c0_i32 : i32, i32
  }
  func.func @transform_1(%arg0: i32) -> (i32, i32) {
    %c0_i32 = arith.constant 0 : i32
    %c0_i32_0 = arith.constant 0 : i32
    return %arg0, %c0_i32 : i32, i32
  }
  func.func @transform_2(%arg0: i32) -> (i32, i32) {
    %c0_i32 = arith.constant 0 : i32
    %c0_i32_0 = arith.constant 0 : i32
    %c0_i32_1 = arith.constant 0 : i32
    return %c0_i32, %c0_i32_0 : i32, i32
  }
  func.func @transform_3(%arg0: i32) -> (i32, i32) {
    %c0_i32 = arith.constant 0 : i32
    %c0_i32_0 = arith.constant 0 : i32
    %c0_i32_1 = arith.constant 0 : i32
    return %c0_i32, %c0_i32_0 : i32, i32
  }
  func.func @transform_4(%arg0: i32) -> (i32, i32) {
    %c0_i32 = arith.constant 0 : i32
    %c0_i32_0 = arith.constant 0 : i32
    %c0_i32_1 = arith.constant 0 : i32
    return %c0_i32, %c0_i32_0 : i32, i32
  }
  func.func @transform_5(%arg0: i32) -> (i32, i32) {
    %c0_i32 = arith.constant 0 : i32
    %c0_i32_0 = arith.constant 0 : i32
    %c0_i32_1 = arith.constant 0 : i32
    return %c0_i32, %c0_i32_0 : i32, i32
  }
  func.func @transform_6(%arg0: i32) -> (i32, i32) {
    %c0_i32 = arith.constant 0 : i32
    %c0_i32_0 = arith.constant 0 : i32
    %c0_i32_1 = arith.constant 0 : i32
    return %c0_i32, %c0_i32_0 : i32, i32
  }
  func.func @transform_7(%arg0: i32) -> (i32, i32) {
    %c0_i32 = arith.constant 0 : i32
    %c0_i32_0 = arith.constant 0 : i32
    %c0_i32_1 = arith.constant 0 : i32
    return %c0_i32, %c0_i32_0 : i32, i32
  }
  func.func @transform_8(%arg0: i32) -> (i32, i32) {
    %c0_i32 = arith.constant 0 : i32
    %c0_i32_0 = arith.constant 0 : i32
    %c0_i32_1 = arith.constant 0 : i32
    return %c0_i32, %c0_i32_0 : i32, i32
  }
  func.func @transform_9(%arg0: i32) -> (i32, i32) {
    %c0_i32 = arith.constant 0 : i32
    %c0_i32_0 = arith.constant 0 : i32
    %c0_i32_1 = arith.constant 0 : i32
    return %c0_i32, %c0_i32_0 : i32, i32
  }
  func.func @transform_10(%arg0: i32) -> (i32, i32) {
    %c0_i32 = arith.constant 0 : i32
    %c0_i32_0 = arith.constant 0 : i32
    return %arg0, %c0_i32 : i32, i32
  }
}

module attributes {stable_mosaic.version = 11 : i64} {
  func.func @_cls_argmax_kernel(%arg0: i32, %arg1: i32, %arg2: memref<16x768xf32, #tpu.memory_space<vmem>>, %arg3: memref<128x768xbf16, #tpu.memory_space<vmem>>, %arg4: memref<128x1xf32, #tpu.memory_space<vmem>>, %arg5: memref<1x16xi32, #tpu.memory_space<vmem>>, %arg6: memref<1x16xf32, #tpu.memory_space<vmem>>, %arg7: memref<1x16xi32, #tpu.memory_space<vmem>>) attributes {dimension_semantics = [#tpu.dimension_semantics<parallel>, #tpu.dimension_semantics<arbitrary>], iteration_bounds = array<i64: 1, 1>, scalar_prefetch = 0 : i64, scratch_operands = 2 : i64, tpu.core_type = #tpu.core_type<tc>, window_params = [{transform_indices = @transform_0, window_bounds = array<i64: 16, 768>}, {transform_indices = @transform_1, window_bounds = array<i64: 128, 768>}, {transform_indices = @transform_2, window_bounds = array<i64: 128, 1>}, {transform_indices = @transform_3, window_bounds = array<i64: 1, 16>}]} {
    %c0_i32 = arith.constant 0 : i32
    %0 = arith.cmpi eq, %arg1, %c0_i32 : i32
    %1 = arith.extui %0 : i1 to i32
    %c0_i32_0 = arith.constant 0 : i32
    %2 = arith.cmpi ne, %1, %c0_i32_0 : i32
    scf.if %2 {
      %cst_23 = arith.constant 0xFF800000 : f32
      %37 = vector.broadcast %cst_23 : f32 to vector<1x16xf32>
      %c0_24 = arith.constant 0 : index
      %c0_25 = arith.constant 0 : index
      %38 = vector.load %arg6[%c0_24, %c0_25] : memref<1x16xf32, #tpu.memory_space<vmem>>, vector<1x16xf32>
      tpu.vector_store %arg6[%c0_24, %c0_25], %37 {strides = array<i32>} : memref<1x16xf32, #tpu.memory_space<vmem>>, vector<1x16xf32>,
      %c0_i32_26 = arith.constant 0 : i32
      %39 = vector.broadcast %c0_i32_26 : i32 to vector<1x16xi32>
      %c0_27 = arith.constant 0 : index
      %c0_28 = arith.constant 0 : index
      %40 = vector.load %arg7[%c0_27, %c0_28] : memref<1x16xi32, #tpu.memory_space<vmem>>, vector<1x16xi32>
      tpu.vector_store %arg7[%c0_27, %c0_28], %39 {strides = array<i32>} : memref<1x16xi32, #tpu.memory_space<vmem>>, vector<1x16xi32>,
    } else {
    }
    %c0 = arith.constant 0 : index
    %c0_1 = arith.constant 0 : index
    %3 = vector.load %arg2[%c0, %c0_1] : memref<16x768xf32, #tpu.memory_space<vmem>>, vector<16x768xf32>
    %4 = arith.truncf %3 : vector<16x768xf32> to vector<16x768xbf16>
    %c0_2 = arith.constant 0 : index
    %c0_3 = arith.constant 0 : index
    %5 = vector.load %arg3[%c0_2, %c0_3] : memref<128x768xbf16, #tpu.memory_space<vmem>>, vector<128x768xbf16>
    %cst = arith.constant dense<0.000000e+00> : vector<128x16xf32>
    %6 = tpu.matmul %5, %4, %cst {dimension_numbers = #tpu.dot_dimension_numbers<[1], [1], [0], [0], [0, 0, 1, 0], [], []>} : vector<128x768xbf16>, vector<16x768xbf16>, vector<128x16xf32> -> vector<128x16xf32>
    %c0_4 = arith.constant 0 : index
    %c0_5 = arith.constant 0 : index
    %7 = vector.load %arg4[%c0_4, %c0_5] : memref<128x1xf32, #tpu.memory_space<vmem>>, vector<128x1xf32>
    %8 = vector.broadcast %7 : vector<128x1xf32> to vector<128x16xf32>
    %9 = arith.addf %6, %8 : vector<128x16xf32>
    %10 = tpu.iota {dimensions = array<i32: 0>} : vector<128x16xi32>
    %c128_i32 = arith.constant 128 : i32
    %11 = arith.muli %arg1, %c128_i32 : i32
    %12 = vector.broadcast %11 : i32 to vector<128x16xi32>
    %13 = arith.addi %10, %12 : vector<128x16xi32>
    %c128_i32_6 = arith.constant 128 : i32
    %14 = vector.broadcast %c128_i32_6 : i32 to vector<128x16xi32>
    %15 = arith.cmpi slt, %13, %14 : vector<128x16xi32>
    %cst_7 = arith.constant 0xFF800000 : f32
    %16 = vector.broadcast %cst_7 : f32 to vector<128x16xf32>
    %17 = arith.select %15, %9, %16 : vector<128x16xi1>, vector<128x16xf32>
    %cst_8 = arith.constant dense<0xFF800000> : vector<16xf32>
    %18 = vector.multi_reduction <maximumf>, %17, %cst_8 [0] : vector<128x16xf32> to vector<16xf32>
    %19 = vector.shape_cast %18 : vector<16xf32> to vector<1x16xf32>
    %20 = vector.broadcast %19 : vector<1x16xf32> to vector<128x16xf32>
    %21 = arith.cmpf oeq, %17, %20 : vector<128x16xf32>
    %c128_i32_9 = arith.constant 128 : i32
    %22 = vector.broadcast %c128_i32_9 : i32 to vector<128x16xi32>
    %23 = arith.select %21, %13, %22 : vector<128x16xi1>, vector<128x16xi32>
    %cst_10 = arith.constant dense<2147483647> : vector<16xi32>
    %24 = vector.multi_reduction <minsi>, %23, %cst_10 [0] : vector<128x16xi32> to vector<16xi32>
    %25 = vector.shape_cast %24 : vector<16xi32> to vector<1x16xi32>
    %c0_11 = arith.constant 0 : index
    %c0_12 = arith.constant 0 : index
    %26 = vector.load %arg6[%c0_11, %c0_12] : memref<1x16xf32, #tpu.memory_space<vmem>>, vector<1x16xf32>
    %27 = arith.cmpf ogt, %19, %26 : vector<1x16xf32>
    %c0_13 = arith.constant 0 : index
    %c0_14 = arith.constant 0 : index
    %28 = vector.load %arg7[%c0_13, %c0_14] : memref<1x16xi32, #tpu.memory_space<vmem>>, vector<1x16xi32>
    %29 = arith.select %27, %25, %28 : vector<1x16xi1>, vector<1x16xi32>
    %c0_15 = arith.constant 0 : index
    %c0_16 = arith.constant 0 : index
    %30 = vector.load %arg7[%c0_15, %c0_16] : memref<1x16xi32, #tpu.memory_space<vmem>>, vector<1x16xi32>
    tpu.vector_store %arg7[%c0_15, %c0_16], %29 {strides = array<i32>} : memref<1x16xi32, #tpu.memory_space<vmem>>, vector<1x16xi32>,
    %c0_17 = arith.constant 0 : index
    %c0_18 = arith.constant 0 : index
    %31 = vector.load %arg6[%c0_17, %c0_18] : memref<1x16xf32, #tpu.memory_space<vmem>>, vector<1x16xf32>
    %32 = arith.maximumf %31, %19 : vector<1x16xf32>
    %c0_19 = arith.constant 0 : index
    %c0_20 = arith.constant 0 : index
    %33 = vector.load %arg6[%c0_19, %c0_20] : memref<1x16xf32, #tpu.memory_space<vmem>>, vector<1x16xf32>
    tpu.vector_store %arg6[%c0_19, %c0_20], %32 {strides = array<i32>} : memref<1x16xf32, #tpu.memory_space<vmem>>, vector<1x16xf32>,
    %c0_i32_21 = arith.constant 0 : i32
    %34 = arith.cmpi eq, %arg1, %c0_i32_21 : i32
    %35 = arith.extui %34 : i1 to i32
    %c0_i32_22 = arith.constant 0 : i32
    %36 = arith.cmpi ne, %35, %c0_i32_22 : i32
    scf.if %36 {
      %c0_23 = arith.constant 0 : index
      %c0_24 = arith.constant 0 : index
      %37 = vector.load %arg7[%c0_23, %c0_24] : memref<1x16xi32, #tpu.memory_space<vmem>>, vector<1x16xi32>
      %c0_25 = arith.constant 0 : index
      %c0_26 = arith.constant 0 : index
      %38 = vector.load %arg5[%c0_25, %c0_26] : memref<1x16xi32, #tpu.memory_space<vmem>>, vector<1x16xi32>
      tpu.vector_store %arg5[%c0_25, %c0_26], %37 {strides = array<i32>} : memref<1x16xi32, #tpu.memory_space<vmem>>, vector<1x16xi32>,
    } else {
    }
    return
  }
  func.func @transform_0(%arg0: i32, %arg1: i32) -> (i32, i32) {
    %c0_i32 = arith.constant 0 : i32
    %c0_i32_0 = arith.constant 0 : i32
    return %arg0, %c0_i32 : i32, i32
  }
  func.func @transform_1(%arg0: i32, %arg1: i32) -> (i32, i32) {
    %c0_i32 = arith.constant 0 : i32
    %c0_i32_0 = arith.constant 0 : i32
    return %arg1, %c0_i32 : i32, i32
  }
  func.func @transform_2(%arg0: i32, %arg1: i32) -> (i32, i32) {
    %c0_i32 = arith.constant 0 : i32
    %c0_i32_0 = arith.constant 0 : i32
    return %arg1, %c0_i32 : i32, i32
  }
  func.func @transform_3(%arg0: i32, %arg1: i32) -> (i32, i32) {
    %c0_i32 = arith.constant 0 : i32
    %c0_i32_0 = arith.constant 0 : i32
    return %c0_i32, %arg0 : i32, i32
  }
}

</mosaic_0001>

<llo_original>
// kernel: gpt_forward.7
$region0: #{gpt_forward.7}
  #allocation0 [shape = 'u32[]', space=smem, size = 0x4, offset = 0x4, fixed_abs, tag = 'smem constant byte address 0x4 - core index']
  #allocation1 [shape = 'u32[144,128]{1,0:T(1,128)}', space=vmem, size = 0x12000, scoped, tag = 'internal scratch']
  %s0 = inlined_call_operand.vmem [shape: f32[16,768], index: 0, kind: input, shape index: {}]
  %s1 = inlined_call_operand.vmem [shape: f32[16,768], index: 1, kind: input, shape index: {}]
  %s2 = inlined_call_operand.vmem [shape: f32[1,768], index: 2, kind: input, shape index: {}]
  %s3 = inlined_call_operand.vmem [shape: f32[1,768], index: 3, kind: input, shape index: {}]
  %s4 = inlined_call_operand.vmem [shape: f32[16,768], index: 4, kind: output, shape index: {}]
  %s5 = sld [smem:[#allocation0]]
  $region26: #{gpt_forward.7} parent=0
    _
  %s7 = ssub.s32 1, %s5
  %s8 = scalar_select 0, %s7, %s5
  // Predicated region
  $region2: #{gpt_forward.7} parent=0 // pred_check
    _
  $region3: #{gpt_forward.7} parent=0 // pred_check_branch
    %10 = sbr.rel (0) target = $region5
  $region4: #{gpt_forward.7} parent=0 // pred_region
    _
  $region5: #{gpt_forward.7} parent=0 // pred_fallthru
    _
  // Predicated region
  $region6: #{gpt_forward.7} parent=0 // pred_check
    _
  $region7: #{gpt_forward.7} parent=0 // pred_check_branch
    %12 = sbr.rel (0) target = $region9
  $region8: #{gpt_forward.7} parent=0 // pred_region
    _
  $region9: #{gpt_forward.7} parent=0 // pred_fallthru
    _
  // Predicated region
  $region10: #{gpt_forward.7} parent=0 // pred_check
    _
  $region11: #{gpt_forward.7} parent=0 // pred_check_branch
    %14 = sbr.rel (0) target = $region13
  $region12: #{gpt_forward.7} parent=0 // pred_region
    _
  $region13: #{gpt_forward.7} parent=0 // pred_fallthru
    _
  // Predicated region
  $region14: #{gpt_forward.7} parent=0 // pred_check
    _
  $region15: #{gpt_forward.7} parent=0 // pred_check_branch
    %16 = sbr.rel (0) target = $region17
  $region16: #{gpt_forward.7} parent=0 // pred_region
    _
  $region17: #{gpt_forward.7} parent=0 // pred_fallthru
    _
  %v17 = vld [vmem:[%s0] sm:$0xff]
  %v18 = vld [vmem:[%s0 + $0x8] sm:$0xff]
  %v19 = vld [vmem:[%s0 + $0x10] sm:$0xff]
  %v20 = vld [vmem:[%s0 + $0x18] sm:$0xff]
  %v21 = vld [vmem:[%s0 + $0x20] sm:$0xff]
  %v22 = vld [vmem:[%s0 + $0x28] sm:$0xff]
  %v23 = vld [vmem:[%s0 + $0x30] sm:$0xff]
  %v24 = vld [vmem:[%s0 + $0x38] sm:$0xff]
  %v25 = vld [vmem:[%s0 + $0x40] sm:$0xff]
  %v26 = vld [vmem:[%s0 + $0x48] sm:$0xff]
  %v27 = vld [vmem:[%s0 + $0x50] sm:$0xff]
  %v28 = vld [vmem:[%s0 + $0x58] sm:$0xff]
  %v29 = vld [vmem:[%s1] sm:$0xff]
  %v30 = vld [vmem:[%s1 + $0x8] sm:$0xff]
  %v31 = vld [vmem:[%s1 + $0x10] sm:$0xff]
  %v32 = vld [vmem:[%s1 + $0x18] sm:$0xff]
  %v33 = vld [vmem:[%s1 + $0x20] sm:$0xff]
  %v34 = vld [vmem:[%s1 + $0x28] sm:$0xff]
  %v35 = vld [vmem:[%s1 + $0x30] sm:$0xff]
  %v36 = vld [vmem:[%s1 + $0x38] sm:$0xff]
  %v37 = vld [vmem:[%s1 + $0x40] sm:$0xff]
  %v38 = vld [vmem:[%s1 + $0x48] sm:$0xff]
  %v39 = vld [vmem:[%s1 + $0x50] sm:$0xff]
  %v40 = vld [vmem:[%s1 + $0x58] sm:$0xff]
  %v41 = vadd.f32 %v17, %v29
  %v42 = vadd.f32 %v18, %v30
  %v43 = vadd.f32 %v19, %v31
  %v44 = vadd.f32 %v20, %v32
  %v45 = vadd.f32 %v21, %v33
  %v46 = vadd.f32 %v22, %v34
  %v47 = vadd.f32 %v23, %v35
  %v48 = vadd.f32 %v24, %v36
  %v49 = vadd.f32 %v25, %v37
  %v50 = vadd.f32 %v26, %v38
  %v51 = vadd.f32 %v27, %v39
  %v52 = vadd.f32 %v28, %v40
  %v53 = vld [vmem:[%s2] sm:$0x3f]
  %v54 = vld [vmem:[%s3] sm:$0x3f]
  %v55 = vadd.f32 %v41, %v42
  %v56 = vadd.f32 %v55, %v43
  %v57 = vadd.f32 %v56, %v44
  %v58 = vadd.f32 %v57, %v45
  %v59 = vadd.f32 %v58, %v46
  %60 = vadd.xlane.f32.xlu0 %v59
  %v61 = vpop.xlane.xlu0 %60
  %v62 = vadd.f32 %v47, %v48
  %v63 = vadd.f32 %v62, %v49
  %v64 = vadd.f32 %v63, %v50
  %v65 = vadd.f32 %v64, %v51
  %v66 = vadd.f32 %v65, %v52
  %67 = vadd.xlane.f32.xlu0 %v66
  %v68 = vpop.xlane.xlu0 %67
  %v69 = vrcp.pop 768.0
  %v70 = vmul.f32 %v61, %v69
  %v71 = vmul.f32 %v68, %v69
  %v72 = vsub.f32 %v41, %v70
  %v73 = vsub.f32 %v42, %v70
  %v74 = vsub.f32 %v43, %v70
  %v75 = vsub.f32 %v44, %v70
  %v76 = vsub.f32 %v45, %v70
  %v77 = vsub.f32 %v46, %v70
  %v78 = vsub.f32 %v47, %v71
  %v79 = vsub.f32 %v48, %v71
  %v80 = vsub.f32 %v49, %v71
  %v81 = vsub.f32 %v50, %v71
  %v82 = vsub.f32 %v51, %v71
  %v83 = vsub.f32 %v52, %v71
  %v84 = vmul.f32 %v72, %v72
  %v85 = vmul.f32 %v73, %v73
  %v86 = vmul.f32 %v74, %v74
  %v87 = vmul.f32 %v75, %v75
  %v88 = vmul.f32 %v76, %v76
  %v89 = vmul.f32 %v77, %v77
  %v90 = vmul.f32 %v78, %v78
  %v91 = vmul.f32 %v79, %v79
  %v92 = vmul.f32 %v80, %v80
  %v93 = vmul.f32 %v81, %v81
  %v94 = vmul.f32 %v82, %v82
  %v95 = vmul.f32 %v83, %v83
  %v96 = vadd.f32 %v84, %v85
  %v97 = vadd.f32 %v96, %v86
  %v98 = vadd.f32 %v97, %v87
  %v99 = vadd.f32 %v98, %v88
  %v100 = vadd.f32 %v99, %v89
  %101 = vadd.xlane.f32.xlu0 %v100
  %v102 = vpop.xlane.xlu0 %101
  %v103 = vadd.f32 %v90, %v91
  %v104 = vadd.f32 %v103, %v92
  %v105 = vadd.f32 %v104, %v93
  %v106 = vadd.f32 %v105, %v94
  %v107 = vadd.f32 %v106, %v95
  %108 = vadd.xlane.f32.xlu0 %v107
  %v109 = vpop.xlane.xlu0 %108
  %v110 = vmul.f32 %v102, %v69
  %v111 = vmul.f32 %v109, %v69
  %v112 = vadd.f32 %v110, 1e-05
  %v113 = vadd.f32 %v111, 1e-05
  %v114 = vrsqrt.pop %v112
  %v115 = vrsqrt.pop %v113
  %v116 = vmul.f32 %v72, %v114
  %v117 = vmul.f32 %v73, %v114
  %v118 = vmul.f32 %v74, %v114
  %v119 = vmul.f32 %v75, %v114
  %v120 = vmul.f32 %v76, %v114
  %v121 = vmul.f32 %v77, %v114
  %v122 = vmul.f32 %v78, %v115
  %v123 = vmul.f32 %v79, %v115
  %v124 = vmul.f32 %v80, %v115
  %v125 = vmul.f32 %v81, %v115
  %v126 = vmul.f32 %v82, %v115
  %v127 = vmul.f32 %v83, %v115
  %v129 = vlaneseq
  %v130 = vshrl.u32 %v129, 7
  %v131 = vsub.s32 0, %v130
  %v132 = vrot.slane %v53, %v131
  %v133 = vlaneseq
  %v134 = vshrl.u32 %v133, 7
  %v135 = vsub.s32 1, %v134
  %v136 = vrot.slane %v53, %v135
  %v137 = vlaneseq
  %v138 = vshrl.u32 %v137, 7
  %v139 = vsub.s32 2, %v138
  %v140 = vrot.slane %v53, %v139
  %v141 = vlaneseq
  %v142 = vshrl.u32 %v141, 7
  %v143 = vsub.s32 3, %v142
  %v144 = vrot.slane %v53, %v143
  %v145 = vlaneseq
  %v146 = vshrl.u32 %v145, 7
  %v147 = vsub.s32 4, %v146
  %v148 = vrot.slane %v53, %v147
  %v149 = vlaneseq
  %v150 = vshrl.u32 %v149, 7
  %v151 = vsub.s32 5, %v150
  %v152 = vrot.slane %v53, %v151
  %v159 = vmul.f32 %v116, %v132
  %v160 = vmul.f32 %v117, %v136
  %v161 = vmul.f32 %v118, %v140
  %v162 = vmul.f32 %v119, %v144
  %v163 = vmul.f32 %v120, %v148
  %v164 = vmul.f32 %v121, %v152
  %v165 = vmul.f32 %v122, %v132
  %v166 = vmul.f32 %v123, %v136
  %v167 = vmul.f32 %v124, %v140
  %v168 = vmul.f32 %v125, %v144
  %v169 = vmul.f32 %v126, %v148
  %v170 = vmul.f32 %v127, %v152
  %v172 = vlaneseq
  %v173 = vshrl.u32 %v172, 7
  %v174 = vsub.s32 0, %v173
  %v175 = vrot.slane %v54, %v174
  %v176 = vlaneseq
  %v177 = vshrl.u32 %v176, 7
  %v178 = vsub.s32 1, %v177
  %v179 = vrot.slane %v54, %v178
  %v180 = vlaneseq
  %v181 = vshrl.u32 %v180, 7
  %v182 = vsub.s32 2, %v181
  %v183 = vrot.slane %v54, %v182
  %v184 = vlaneseq
  %v185 = vshrl.u32 %v184, 7
  %v186 = vsub.s32 3, %v185
  %v187 = vrot.slane %v54, %v186
  %v188 = vlaneseq
  %v189 = vshrl.u32 %v188, 7
  %v190 = vsub.s32 4, %v189
  %v191 = vrot.slane %v54, %v190
  %v192 = vlaneseq
  %v193 = vshrl.u32 %v192, 7
  %v194 = vsub.s32 5, %v193
  %v195 = vrot.slane %v54, %v194
  %v202 = vadd.f32 %v159, %v175
  %v203 = vadd.f32 %v160, %v179
  %v204 = vadd.f32 %v161, %v183
  %v205 = vadd.f32 %v162, %v187
  %v206 = vadd.f32 %v163, %v191
  %v207 = vadd.f32 %v164, %v195
  %v208 = vadd.f32 %v165, %v175
  %v209 = vadd.f32 %v166, %v179
  %v210 = vadd.f32 %v167, %v183
  %v211 = vadd.f32 %v168, %v187
  %v212 = vadd.f32 %v169, %v191
  %v213 = vadd.f32 %v170, %v195
  %214 = vst [vmem:[%s4] sm:$0xff] %v202
  %215 = vst [vmem:[%s4 + $0x8] sm:$0xff] %v203
  %216 = vst [vmem:[%s4 + $0x10] sm:$0xff] %v204
  %217 = vst [vmem:[%s4 + $0x18] sm:$0xff] %v205
  %218 = vst [vmem:[%s4 + $0x20] sm:$0xff] %v206
  %219 = vst [vmem:[%s4 + $0x28] sm:$0xff] %v207
  %220 = vst [vmem:[%s4 + $0x30] sm:$0xff] %v208
  %221 = vst [vmem:[%s4 + $0x38] sm:$0xff] %v209
  %222 = vst [vmem:[%s4 + $0x40] sm:$0xff] %v210
  %223 = vst [vmem:[%s4 + $0x48] sm:$0xff] %v211
  %224 = vst [vmem:[%s4 + $0x50] sm:$0xff] %v212
  %225 = vst [vmem:[%s4 + $0x58] sm:$0xff] %v213
  // Predicated region
  $region18: #{gpt_forward.7} parent=0 // pred_check
    _
  $region19: #{gpt_forward.7} parent=0 // pred_check_branch
    %227 = sbr.rel (0) target = $region21
  $region20: #{gpt_forward.7} parent=0 // pred_region
    _
  $region21: #{gpt_forward.7} parent=0 // pred_fallthru
    _
  // Predicated region
  $region22: #{gpt_forward.7} parent=0 // pred_check
    _
  $region23: #{gpt_forward.7} parent=0 // pred_check_branch
    %229 = sbr.rel (0) target = $region25
  $region24: #{gpt_forward.7} parent=0 // pred_region
    _
  $region25: #{gpt_forward.7} parent=0 // pred_fallthru
    _

// kernel: gpt_forward.13
$region0: #{gpt_forward.13}
  #allocation0 [shape = 'u32[]', space=smem, size = 0x4, offset = 0x4, fixed_abs, tag = 'smem constant byte address 0x4 - core index']
  #allocation1 [shape = 'u32[144,128]{1,0:T(1,128)}', space=vmem, size = 0x12000, scoped, tag = 'internal scratch']
  #allocation2 [shape = 'f32[1,16]{1,0:T(1,128)}', space=vmem, size = 0x200, scoped, tag = 'scratch operand']
  #allocation3 [shape = 's32[1,16]{1,0:T(1,128)}', space=vmem, size = 0x200, scoped, tag = 'scratch operand']
  %s0 = inlined_call_operand.vmem [shape: f32[16,768], index: 0, kind: input, shape index: {}]
  %s1 = inlined_call_operand.vmem [shape: bf16[128,768], index: 1, kind: input, shape index: {}]
  %s2 = inlined_call_operand.vmem [shape: f32[128,1], index: 2, kind: input, shape index: {}]
  %s3 = inlined_call_operand.vmem [shape: s32[1,16], index: 3, kind: output, shape index: {}]
  %s4 = sld [smem:[#allocation0]]
  $region30: #{gpt_forward.13} parent=0
    _
  %s6 = ssub.s32 1, %s4
  %s7 = scalar_select 0, %s6, %s4
  // Predicated region
  $region2: #{gpt_forward.13} parent=0 // pred_check
    _
  $region3: #{gpt_forward.13} parent=0 // pred_check_branch
    %9 = sbr.rel (0) target = $region5
  $region4: #{gpt_forward.13} parent=0 // pred_region
    _
  $region5: #{gpt_forward.13} parent=0 // pred_fallthru
    _
  // Predicated region
  $region6: #{gpt_forward.13} parent=0 // pred_check
    _
  $region7: #{gpt_forward.13} parent=0 // pred_check_branch
    %11 = sbr.rel (0) target = $region9
  $region8: #{gpt_forward.13} parent=0 // pred_region
    _
  $region9: #{gpt_forward.13} parent=0 // pred_fallthru
    _
  // Predicated region
  $region10: #{gpt_forward.13} parent=0 // pred_check
    _
  $region11: #{gpt_forward.13} parent=0 // pred_check_branch
    %13 = sbr.rel (0) target = $region13
  $region12: #{gpt_forward.13} parent=0 // pred_region
    _
  $region13: #{gpt_forward.13} parent=0 // pred_fallthru
    _
  %p15 = scmp.eq.s32.totalorder 0, 0
  // Predicated region
  $region14: #{gpt_forward.13} parent=0 // pred_check
    %p16 = pneg %p15
  $region15: #{gpt_forward.13} parent=0 // pred_check_branch
    %18 = sbr.rel (%p16) target = $region17
  $region16: #{gpt_forward.13} parent=0 // pred_region
    %vm19 = vcmask 122880
    %20 = vst.msk [vmem:[#allocation2] sm:$0x1] %vm19, -inf
    %21 = vst.msk [vmem:[#allocation3] sm:$0x1] %vm19, 0
  $region17: #{gpt_forward.13} parent=0 // pred_fallthru
    _
  %v22 = vld [vmem:[%s0] sm:$0xff]
  %v23 = vld [vmem:[%s0 + $0x8] sm:$0xff]
  %v24 = vld [vmem:[%s0 + $0x10] sm:$0xff]
  %v25 = vld [vmem:[%s0 + $0x18] sm:$0xff]
  %v26 = vld [vmem:[%s0 + $0x20] sm:$0xff]
  %v27 = vld [vmem:[%s0 + $0x28] sm:$0xff]
  %v28 = vld [vmem:[%s0 + $0x30] sm:$0xff]
  %v29 = vld [vmem:[%s0 + $0x38] sm:$0xff]
  %v30 = vld [vmem:[%s0 + $0x40] sm:$0xff]
  %v31 = vld [vmem:[%s0 + $0x48] sm:$0xff]
  %v32 = vld [vmem:[%s0 + $0x50] sm:$0xff]
  %v33 = vld [vmem:[%s0 + $0x58] sm:$0xff]
  %v34 = vpack.c.bf16 %v28, %v22
  %v35 = vpack.c.bf16 %v29, %v23
  %v36 = vpack.c.bf16 %v30, %v24
  %v37 = vpack.c.bf16 %v31, %v25
  %v38 = vpack.c.bf16 %v32, %v26
  %v39 = vpack.c.bf16 %v33, %v27
  %v40 = vld [vmem:[%s1] sm:$0xff]
  %v41 = vld [vmem:[%s1 + $0x8] sm:$0xff]
  %v42 = vld [vmem:[%s1 + $0x10] sm:$0xff]
  %v43 = vld [vmem:[%s1 + $0x18] sm:$0xff]
  %v44 = vld [vmem:[%s1 + $0x20] sm:$0xff]
  %v45 = vld [vmem:[%s1 + $0x28] sm:$0xff]
  %v46 = vld [vmem:[%s1 + $0x30] sm:$0xff]
  %v47 = vld [vmem:[%s1 + $0x38] sm:$0xff]
  %v48 = vld [vmem:[%s1 + $0x40] sm:$0xff]
  %v49 = vld [vmem:[%s1 + $0x48] sm:$0xff]
  %v50 = vld [vmem:[%s1 + $0x50] sm:$0xff]
  %v51 = vld [vmem:[%s1 + $0x58] sm:$0xff]
  %v52 = vld [vmem:[%s1 + $0x60] sm:$0xff]
  %v53 = vld [vmem:[%s1 + $0x68] sm:$0xff]
  %v54 = vld [vmem:[%s1 + $0x70] sm:$0xff]
  %v55 = vld [vmem:[%s1 + $0x78] sm:$0xff]
  %v56 = vld [vmem:[%s1 + $0x80] sm:$0xff]
  %v57 = vld [vmem:[%s1 + $0x88] sm:$0xff]
  %v58 = vld [vmem:[%s1 + $0x90] sm:$0xff]
  %v59 = vld [vmem:[%s1 + $0x98] sm:$0xff]
  %v60 = vld [vmem:[%s1 + $0xa0] sm:$0xff]
  %v61 = vld [vmem:[%s1 + $0xa8] sm:$0xff]
  %v62 = vld [vmem:[%s1 + $0xb0] sm:$0xff]
  %v63 = vld [vmem:[%s1 + $0xb8] sm:$0xff]
  %v64 = vld [vmem:[%s1 + $0xc0] sm:$0xff]
  %v65 = vld [vmem:[%s1 + $0xc8] sm:$0xff]
  %v66 = vld [vmem:[%s1 + $0xd0] sm:$0xff]
  %v67 = vld [vmem:[%s1 + $0xd8] sm:$0xff]
  %v68 = vld [vmem:[%s1 + $0xe0] sm:$0xff]
  %v69 = vld [vmem:[%s1 + $0xe8] sm:$0xff]
  %v70 = vld [vmem:[%s1 + $0xf0] sm:$0xff]
  %v71 = vld [vmem:[%s1 + $0xf8] sm:$0xff]
  %v72 = vld [vmem:[%s1 + $0x100] sm:$0xff]
  %v73 = vld [vmem:[%s1 + $0x108] sm:$0xff]
  %v74 = vld [vmem:[%s1 + $0x110] sm:$0xff]
  %v75 = vld [vmem:[%s1 + $0x118] sm:$0xff]
  %v76 = vld [vmem:[%s1 + $0x120] sm:$0xff]
  %v77 = vld [vmem:[%s1 + $0x128] sm:$0xff]
  %v78 = vld [vmem:[%s1 + $0x130] sm:$0xff]
  %v79 = vld [vmem:[%s1 + $0x138] sm:$0xff]
  %v80 = vld [vmem:[%s1 + $0x140] sm:$0xff]
  %v81 = vld [vmem:[%s1 + $0x148] sm:$0xff]
  %v82 = vld [vmem:[%s1 + $0x150] sm:$0xff]
  %v83 = vld [vmem:[%s1 + $0x158] sm:$0xff]
  %v84 = vld [vmem:[%s1 + $0x160] sm:$0xff]
  %v85 = vld [vmem:[%s1 + $0x168] sm:$0xff]
  %v86 = vld [vmem:[%s1 + $0x170] sm:$0xff]
  %v87 = vld [vmem:[%s1 + $0x178] sm:$0xff]
  %v88 = vld [vmem:[%s2] sm:$0xff]
  %v89 = vld [vmem:[%s2 + $0x8] sm:$0xff]
  %v90 = vld [vmem:[%s2 + $0x10] sm:$0xff]
  %v91 = vld [vmem:[%s2 + $0x18] sm:$0xff]
  %v92 = vld [vmem:[%s2 + $0x20] sm:$0xff]
  %v93 = vld [vmem:[%s2 + $0x28] sm:$0xff]
  %v94 = vld [vmem:[%s2 + $0x30] sm:$0xff]
  %v95 = vld [vmem:[%s2 + $0x38] sm:$0xff]
  %v96 = vld [vmem:[%s2 + $0x40] sm:$0xff]
  %v97 = vld [vmem:[%s2 + $0x48] sm:$0xff]
  %v98 = vld [vmem:[%s2 + $0x50] sm:$0xff]
  %v99 = vld [vmem:[%s2 + $0x58] sm:$0xff]
  %v100 = vld [vmem:[%s2 + $0x60] sm:$0xff]
  %v101 = vld [vmem:[%s2 + $0x68] sm:$0xff]
  %v102 = vld [vmem:[%s2 + $0x70] sm:$0xff]
  %v103 = vld [vmem:[%s2 + $0x78] sm:$0xff]
  %105 = vset.pattern.permute.xlu0 0
  %106 = vperm.xlu0 %105, %v88
  %v107 = vpop.permute.xlu0 %106
  %110 = vset.pattern.permute.xlu0 0
  %111 = vperm.xlu0 %110, %v89
  %v112 = vpop.permute.xlu0 %111
  %115 = vset.pattern.permute.xlu0 0
  %116 = vperm.xlu0 %115, %v90
  %v117 = vpop.permute.xlu0 %116
  %120 = vset.pattern.permute.xlu0 0
  %121 = vperm.xlu0 %120, %v91
  %v122 = vpop.permute.xlu0 %121
  %125 = vset.pattern.permute.xlu0 0
  %126 = vperm.xlu0 %125, %v92
  %v127 = vpop.permute.xlu0 %126
  %130 = vset.pattern.permute.xlu0 0
  %131 = vperm.xlu0 %130, %v93
  %v132 = vpop.permute.xlu0 %131
  %135 = vset.pattern.permute.xlu0 0
  %136 = vperm.xlu0 %135, %v94
  %v137 = vpop.permute.xlu0 %136
  %140 = vset.pattern.permute.xlu0 0
  %141 = vperm.xlu0 %140, %v95
  %v142 = vpop.permute.xlu0 %141
  %145 = vset.pattern.permute.xlu0 0
  %146 = vperm.xlu0 %145, %v96
  %v147 = vpop.permute.xlu0 %146
  %150 = vset.pattern.permute.xlu0 0
  %151 = vperm.xlu0 %150, %v97
  %v152 = vpop.permute.xlu0 %151
  %155 = vset.pattern.permute.xlu0 0
  %156 = vperm.xlu0 %155, %v98
  %v157 = vpop.permute.xlu0 %156
  %160 = vset.pattern.permute.xlu0 0
  %161 = vperm.xlu0 %160, %v99
  %v162 = vpop.permute.xlu0 %161
  %165 = vset.pattern.permute.xlu0 0
  %166 = vperm.xlu0 %165, %v100
  %v167 = vpop.permute.xlu0 %166
  %170 = vset.pattern.permute.xlu0 0
  %171 = vperm.xlu0 %170, %v101
  %v172 = vpop.permute.xlu0 %171
  %175 = vset.pattern.permute.xlu0 0
  %176 = vperm.xlu0 %175, %v102
  %v177 = vpop.permute.xlu0 %176
  %180 = vset.pattern.permute.xlu0 0
  %181 = vperm.xlu0 %180, %v103
  %v182 = vpop.permute.xlu0 %181
  %v232 = vunpack.c.l.b16 %v40
  %v233 = vunpack.c.h.b16 %v40
  %v234 = vunpack.c.l.b16 %v41
  %v235 = vunpack.c.h.b16 %v41
  %v236 = vunpack.c.l.b16 %v42
  %v237 = vunpack.c.h.b16 %v42
  %v238 = vunpack.c.l.b16 %v43
  %v239 = vunpack.c.h.b16 %v43
  %v240 = vunpack.c.l.b16 %v44
  %v241 = vunpack.c.h.b16 %v44
  %v242 = vunpack.c.l.b16 %v45
  %v243 = vunpack.c.h.b16 %v45
  %v244 = vunpack.c.l.b16 %v46
  %v245 = vunpack.c.h.b16 %v46
  %v246 = vunpack.c.l.b16 %v47
  %v247 = vunpack.c.h.b16 %v47
  %v248 = vunpack.c.l.b16 %v48
  %v249 = vunpack.c.h.b16 %v48
  %v250 = vunpack.c.l.b16 %v49
  %v251 = vunpack.c.h.b16 %v49
  %v252 = vunpack.c.l.b16 %v50
  %v253 = vunpack.c.h.b16 %v50
  %v254 = vunpack.c.l.b16 %v51
  %v255 = vunpack.c.h.b16 %v51
  %v256 = vunpack.c.l.b16 %v52
  %v257 = vunpack.c.h.b16 %v52
  %v258 = vunpack.c.l.b16 %v53
  %v259 = vunpack.c.h.b16 %v53
  %v260 = vunpack.c.l.b16 %v54
  %v261 = vunpack.c.h.b16 %v54
  %v262 = vunpack.c.l.b16 %v55
  %v263 = vunpack.c.h.b16 %v55
  %v264 = vunpack.c.l.b16 %v56
  %v265 = vunpack.c.h.b16 %v56
  %v266 = vunpack.c.l.b16 %v57
  %v267 = vunpack.c.h.b16 %v57
  %v268 = vunpack.c.l.b16 %v58
  %v269 = vunpack.c.h.b16 %v58
  %v270 = vunpack.c.l.b16 %v59
  %v271 = vunpack.c.h.b16 %v59
  %v272 = vunpack.c.l.b16 %v60
  %v273 = vunpack.c.h.b16 %v60
  %v274 = vunpack.c.l.b16 %v61
  %v275 = vunpack.c.h.b16 %v61
  %v276 = vunpack.c.l.b16 %v62
  %v277 = vunpack.c.h.b16 %v62
  %v278 = vunpack.c.l.b16 %v63
  %v279 = vunpack.c.h.b16 %v63
  %v280 = vunpack.c.l.b16 %v64
  %v281 = vunpack.c.h.b16 %v64
  %v282 = vunpack.c.l.b16 %v65
  %v283 = vunpack.c.h.b16 %v65
  %v284 = vunpack.c.l.b16 %v66
  %v285 = vunpack.c.h.b16 %v66
  %v286 = vunpack.c.l.b16 %v67
  %v287 = vunpack.c.h.b16 %v67
  %v288 = vunpack.c.l.b16 %v68
  %v289 = vunpack.c.h.b16 %v68
  %v290 = vunpack.c.l.b16 %v69
  %v291 = vunpack.c.h.b16 %v69
  %v292 = vunpack.c.l.b16 %v70
  %v293 = vunpack.c.h.b16 %v70
  %v294 = vunpack.c.l.b16 %v71
  %v295 = vunpack.c.h.b16 %v71
  %v296 = vunpack.c.l.b16 %v72
  %v297 = vunpack.c.h.b16 %v72
  %v298 = vunpack.c.l.b16 %v73
  %v299 = vunpack.c.h.b16 %v73
  %v300 = vunpack.c.l.b16 %v74
  %v301 = vunpack.c.h.b16 %v74
  %v302 = vunpack.c.l.b16 %v75
  %v303 = vunpack.c.h.b16 %v75
  %v304 = vunpack.c.l.b16 %v76
  %v305 = vunpack.c.h.b16 %v76
  %v306 = vunpack.c.l.b16 %v77
  %v307 = vunpack.c.h.b16 %v77
  %v308 = vunpack.c.l.b16 %v78
  %v309 = vunpack.c.h.b16 %v78
  %v310 = vunpack.c.l.b16 %v79
  %v311 = vunpack.c.h.b16 %v79
  %v312 = vunpack.c.l.b16 %v80
  %v313 = vunpack.c.h.b16 %v80
  %v314 = vunpack.c.l.b16 %v81
  %v315 = vunpack.c.h.b16 %v81
  %v316 = vunpack.c.l.b16 %v82
  %v317 = vunpack.c.h.b16 %v82
  %v318 = vunpack.c.l.b16 %v83
  %v319 = vunpack.c.h.b16 %v83
  %v320 = vunpack.c.l.b16 %v84
  %v321 = vunpack.c.h.b16 %v84
  %v322 = vunpack.c.l.b16 %v85
  %v323 = vunpack.c.h.b16 %v85
  %v324 = vunpack.c.l.b16 %v86
  %v325 = vunpack.c.h.b16 %v86
  %v326 = vunpack.c.l.b16 %v87
  %v327 = vunpack.c.h.b16 %v87
  %v328 = vpack.c.b16 %v238, %v232
  %v329 = vpack.c.b16 %v239, %v233
  %v330 = vpack.c.b16 %v240, %v234
  %v331 = vpack.c.b16 %v241, %v235
  %v332 = vpack.c.b16 %v242, %v236
  %v333 = vpack.c.b16 %v243, %v237
  %v334 = vpack.c.b16 %v250, %v244
  %v335 = vpack.c.b16 %v251, %v245
  %v336 = vpack.c.b16 %v252, %v246
  %v337 = vpack.c.b16 %v253, %v247
  %v338 = vpack.c.b16 %v254, %v248
  %v339 = vpack.c.b16 %v255, %v249
  %v340 = vpack.c.b16 %v262, %v256
  %v341 = vpack.c.b16 %v263, %v257
  %v342 = vpack.c.b16 %v264, %v258
  %v343 = vpack.c.b16 %v265, %v259
  %v344 = vpack.c.b16 %v266, %v260
  %v345 = vpack.c.b16 %v267, %v261
  %v346 = vpack.c.b16 %v274, %v268
  %v347 = vpack.c.b16 %v275, %v269
  %v348 = vpack.c.b16 %v276, %v270
  %v349 = vpack.c.b16 %v277, %v271
  %v350 = vpack.c.b16 %v278, %v272
  %v351 = vpack.c.b16 %v279, %v273
  %v352 = vpack.c.b16 %v286, %v280
  %v353 = vpack.c.b16 %v287, %v281
  %v354 = vpack.c.b16 %v288, %v282
  %v355 = vpack.c.b16 %v289, %v283
  %v356 = vpack.c.b16 %v290, %v284
  %v357 = vpack.c.b16 %v291, %v285
  %v358 = vpack.c.b16 %v298, %v292
  %v359 = vpack.c.b16 %v299, %v293
  %v360 = vpack.c.b16 %v300, %v294
  %v361 = vpack.c.b16 %v301, %v295
  %v362 = vpack.c.b16 %v302, %v296
  %v363 = vpack.c.b16 %v303, %v297
  %v364 = vpack.c.b16 %v310, %v304
  %v365 = vpack.c.b16 %v311, %v305
  %v366 = vpack.c.b16 %v312, %v306
  %v367 = vpack.c.b16 %v313, %v307
  %v368 = vpack.c.b16 %v314, %v308
  %v369 = vpack.c.b16 %v315, %v309
  %v370 = vpack.c.b16 %v322, %v316
  %v371 = vpack.c.b16 %v323, %v317
  %v372 = vpack.c.b16 %v324, %v318
  %v373 = vpack.c.b16 %v325, %v319
  %v374 = vpack.c.b16 %v326, %v320
  %v375 = vpack.c.b16 %v327, %v321
  %424 = vmatprep.subr.bf16.mxu0 0
  %425 = vmatpush1.bf16.xpose.msra.mxu0 0
  %426 = vmatprep.subr.bf16.mxu0 0
  %427 = vmatpush1.bf16.xpose.msra.mxu0 0
  %428 = vmatprep.subr.bf16.mxu0 0
  %429 = vmatpush1.bf16.xpose.msra.mxu0 0
  %430 = vmatprep.subr.bf16.mxu0 0
  %431 = vmatpush1.bf16.xpose.msra.mxu0 0
  %432 = vmatprep.subr.bf16.mxu0 0
  %433 = vmatpush1.bf16.xpose.msra.mxu0 0
  %434 = vmatprep.subr.bf16.mxu0 0
  %435 = vmatpush1.bf16.xpose.msra.mxu0 0
  %436 = vmatprep.subr.bf16.mxu0 0
  %437 = vmatpush1.bf16.xpose.msra.mxu0 0
  %438 = vmatprep.subr.bf16.mxu0 %v35
  %439 = vmatpush1.bf16.xpose.msra.mxu0 %v34
  %440 = vmatprep.subr.bf16.mxu0 0
  %441 = vmatpush2.bf16.xpose.msra.mxu0 0
  %442 = vmatprep.subr.bf16.mxu0 0
  %443 = vmatpush2.bf16.xpose.msra.mxu0 0
  %444 = vmatprep.subr.bf16.mxu0 0
  %445 = vmatpush2.bf16.xpose.msra.mxu0 0
  %446 = vmatprep.subr.bf16.mxu0 0
  %447 = vmatpush2.bf16.xpose.msra.mxu0 0
  %448 = vmatprep.subr.bf16.mxu0 0
  %449 = vmatpush2.bf16.xpose.msra.mxu0 0
  %450 = vmatprep.subr.bf16.mxu0 0
  %451 = vmatpush2.bf16.xpose.msra.mxu0 0
  %452 = vmatprep.subr.bf16.mxu0 0
  %453 = vmatpush2.bf16.xpose.msra.mxu0 0
  %454 = vmatprep.subr.bf16.mxu0 0
  %455 = vmatpush2.bf16.xpose.msra.mxu0 0
  %456 = vmatprep.mubr.bf16.mxu0 %v329
  %457 = vmatmul.mubr.bf16.gmra.mxu0 %v328
  %v458 = vpop.f32.mrf.mxu0
  %v459 = vadd.f32 %v107, %v458
  %v460 = vpop.f32.mrf.mxu0
  %v461 = vpop.f32.mrf.mxu0
  %v462 = vadd.f32 %v112, %v461
  %v463 = vpop.f32.mrf.mxu0
  %464 = vmatprep.mubr.bf16.mxu0 %v335
  %465 = vmatmul.mubr.bf16.gmra.mxu0 %v334
  %v466 = vpop.f32.mrf.mxu0
  %v467 = vadd.f32 %v117, %v466
  %v468 = vpop.f32.mrf.mxu0
  %v469 = vpop.f32.mrf.mxu0
  %v470 = vadd.f32 %v122, %v469
  %v471 = vpop.f32.mrf.mxu0
  %472 = vmatprep.mubr.bf16.mxu0 %v341
  %473 = vmatmul.mubr.bf16.gmra.mxu0 %v340
  %v474 = vpop.f32.mrf.mxu0
  %v475 = vadd.f32 %v127, %v474
  %v476 = vpop.f32.mrf.mxu0
  %v477 = vpop.f32.mrf.mxu0
  %v478 = vadd.f32 %v132, %v477
  %v479 = vpop.f32.mrf.mxu0
  %480 = vmatprep.mubr.bf16.mxu0 %v347
  %481 = vmatmul.mubr.bf16.gmra.mxu0 %v346
  %v482 = vpop.f32.mrf.mxu0
  %v483 = vadd.f32 %v137, %v482
  %v484 = vpop.f32.mrf.mxu0
  %v485 = vpop.f32.mrf.mxu0
  %v486 = vadd.f32 %v142, %v485
  %v487 = vpop.f32.mrf.mxu0
  %488 = vmatprep.mubr.bf16.mxu0 %v353
  %489 = vmatmul.mubr.bf16.gmra.mxu0 %v352
  %v490 = vpop.f32.mrf.mxu0
  %v491 = vadd.f32 %v147, %v490
  %v492 = vpop.f32.mrf.mxu0
  %v493 = vpop.f32.mrf.mxu0
  %v494 = vadd.f32 %v152, %v493
  %v495 = vpop.f32.mrf.mxu0
  %496 = vmatprep.mubr.bf16.mxu0 %v359
  %497 = vmatmul.mubr.bf16.gmra.mxu0 %v358
  %v498 = vpop.f32.mrf.mxu0
  %v499 = vadd.f32 %v157, %v498
  %v500 = vpop.f32.mrf.mxu0
  %v501 = vpop.f32.mrf.mxu0
  %v502 = vadd.f32 %v162, %v501
  %v503 = vpop.f32.mrf.mxu0
  %504 = vmatprep.mubr.bf16.mxu0 %v365
  %505 = vmatmul.mubr.bf16.gmra.mxu0 %v364
  %v506 = vpop.f32.mrf.mxu0
  %v507 = vadd.f32 %v167, %v506
  %v508 = vpop.f32.mrf.mxu0
  %v509 = vpop.f32.mrf.mxu0
  %v510 = vadd.f32 %v172, %v509
  %v511 = vpop.f32.mrf.mxu0
  %512 = vmatprep.mubr.bf16.mxu0 %v371
  %513 = vmatmul.mubr.bf16.gmra.mxu0 %v370
  %v514 = vpop.f32.mrf.mxu0
  %v515 = vadd.f32 %v177, %v514
  %v516 = vpop.f32.mrf.mxu0
  %v517 = vpop.f32.mrf.mxu0
  %v518 = vadd.f32 %v182, %v517
  %v519 = vpop.f32.mrf.mxu0
  %520 = vdwg.mxu0
  %521 = vmatprep.subr.bf16.mxu0 0
  %522 = vmatpush1.bf16.xpose.msra.mxu0 0
  %523 = vmatprep.subr.bf16.mxu0 0
  %524 = vmatpush1.bf16.xpose.msra.mxu0 0
  %525 = vmatprep.subr.bf16.mxu0 0
  %526 = vmatpush1.bf16.xpose.msra.mxu0 0
  %527 = vmatprep.subr.bf16.mxu0 0
  %528 = vmatpush1.bf16.xpose.msra.mxu0 0
  %529 = vmatprep.subr.bf16.mxu0 0
  %530 = vmatpush1.bf16.xpose.msra.mxu0 0
  %531 = vmatprep.subr.bf16.mxu0 0
  %532 = vmatpush1.bf16.xpose.msra.mxu0 0
  %533 = vmatprep.subr.bf16.mxu0 0
  %534 = vmatpush1.bf16.xpose.msra.mxu0 0
  %535 = vmatprep.subr.bf16.mxu0 %v37
  %536 = vmatpush1.bf16.xpose.msra.mxu0 %v36
  %537 = vmatprep.subr.bf16.mxu0 0
  %538 = vmatpush2.bf16.xpose.msra.mxu0 0
  %539 = vmatprep.subr.bf16.mxu0 0
  %540 = vmatpush2.bf16.xpose.msra.mxu0 0
  %541 = vmatprep.subr.bf16.mxu0 0
  %542 = vmatpush2.bf16.xpose.msra.mxu0 0
  %543 = vmatprep.subr.bf16.mxu0 0
  %544 = vmatpush2.bf16.xpose.msra.mxu0 0
  %545 = vmatprep.subr.bf16.mxu0 0
  %546 = vmatpush2.bf16.xpose.msra.mxu0 0
  %547 = vmatprep.subr.bf16.mxu0 0
  %548 = vmatpush2.bf16.xpose.msra.mxu0 0
  %549 = vmatprep.subr.bf16.mxu0 0
  %550 = vmatpush2.bf16.xpose.msra.mxu0 0
  %551 = vmatprep.subr.bf16.mxu0 0
  %552 = vmatpush2.bf16.xpose.msra.mxu0 0
  %553 = vmatprep.mubr.bf16.mxu0 %v331
  %554 = vmatmul.mubr.bf16.gmra.mxu0 %v330
  %v555 = vpop.f32.mrf.mxu0
  %v556 = vadd.f32 %v459, %v555
  %v557 = vpop.f32.mrf.mxu0
  %v558 = vpop.f32.mrf.mxu0
  %v559 = vadd.f32 %v462, %v558
  %v560 = vpop.f32.mrf.mxu0
  %561 = vmatprep.mubr.bf16.mxu0 %v337
  %562 = vmatmul.mubr.bf16.gmra.mxu0 %v336
  %v563 = vpop.f32.mrf.mxu0
  %v564 = vadd.f32 %v467, %v563
  %v565 = vpop.f32.mrf.mxu0
  %v566 = vpop.f32.mrf.mxu0
  %v567 = vadd.f32 %v470, %v566
  %v568 = vpop.f32.mrf.mxu0
  %569 = vmatprep.mubr.bf16.mxu0 %v343
  %570 = vmatmul.mubr.bf16.gmra.mxu0 %v342
  %v571 = vpop.f32.mrf.mxu0
  %v572 = vadd.f32 %v475, %v571
  %v573 = vpop.f32.mrf.mxu0
  %v574 = vpop.f32.mrf.mxu0
  %v575 = vadd.f32 %v478, %v574
  %v576 = vpop.f32.mrf.mxu0
  %577 = vmatprep.mubr.bf16.mxu0 %v349
  %578 = vmatmul.mubr.bf16.gmra.mxu0 %v348
  %v579 = vpop.f32.mrf.mxu0
  %v580 = vadd.f32 %v483, %v579
  %v581 = vpop.f32.mrf.mxu0
  %v582 = vpop.f32.mrf.mxu0
  %v583 = vadd.f32 %v486, %v582
  %v584 = vpop.f32.mrf.mxu0
  %585 = vmatprep.mubr.bf16.mxu0 %v355
  %586 = vmatmul.mubr.bf16.gmra.mxu0 %v354
  %v587 = vpop.f32.mrf.mxu0
  %v588 = vadd.f32 %v491, %v587
  %v589 = vpop.f32.mrf.mxu0
  %v590 = vpop.f32.mrf.mxu0
  %v591 = vadd.f32 %v494, %v590
  %v592 = vpop.f32.mrf.mxu0
  %593 = vmatprep.mubr.bf16.mxu0 %v361
  %594 = vmatmul.mubr.bf16.gmra.mxu0 %v360
  %v595 = vpop.f32.mrf.mxu0
  %v596 = vadd.f32 %v499, %v595
  %v597 = vpop.f32.mrf.mxu0
  %v598 = vpop.f32.mrf.mxu0
  %v599 = vadd.f32 %v502, %v598
  %v600 = vpop.f32.mrf.mxu0
  %601 = vmatprep.mubr.bf16.mxu0 %v367
  %602 = vmatmul.mubr.bf16.gmra.mxu0 %v366
  %v603 = vpop.f32.mrf.mxu0
  %v604 = vadd.f32 %v507, %v603
  %v605 = vpop.f32.mrf.mxu0
  %v606 = vpop.f32.mrf.mxu0
  %v607 = vadd.f32 %v510, %v606
  %v608 = vpop.f32.mrf.mxu0
  %609 = vmatprep.mubr.bf16.mxu0 %v373
  %610 = vmatmul.mubr.bf16.gmra.mxu0 %v372
  %v611 = vpop.f32.mrf.mxu0
  %v612 = vadd.f32 %v515, %v611
  %v613 = vpop.f32.mrf.mxu0
  %v614 = vpop.f32.mrf.mxu0
  %v615 = vadd.f32 %v518, %v614
  %v616 = vpop.f32.mrf.mxu0
  %617 = vdwg.mxu0
  %618 = vmatprep.subr.bf16.mxu0 0
  %619 = vmatpush1.bf16.xpose.msra.mxu0 0
  %620 = vmatprep.subr.bf16.mxu0 0
  %621 = vmatpush1.bf16.xpose.msra.mxu0 0
  %622 = vmatprep.subr.bf16.mxu0 0
  %623 = vmatpush1.bf16.xpose.msra.mxu0 0
  %624 = vmatprep.subr.bf16.mxu0 0
  %625 = vmatpush1.bf16.xpose.msra.mxu0 0
  %626 = vmatprep.subr.bf16.mxu0 0
  %627 = vmatpush1.bf16.xpose.msra.mxu0 0
  %628 = vmatprep.subr.bf16.mxu0 0
  %629 = vmatpush1.bf16.xpose.msra.mxu0 0
  %630 = vmatprep.subr.bf16.mxu0 0
  %631 = vmatpush1.bf16.xpose.msra.mxu0 0
  %632 = vmatprep.subr.bf16.mxu0 %v39
  %633 = vmatpush1.bf16.xpose.msra.mxu0 %v38
  %634 = vmatprep.subr.bf16.mxu0 0
  %635 = vmatpush2.bf16.xpose.msra.mxu0 0
  %636 = vmatprep.subr.bf16.mxu0 0
  %637 = vmatpush2.bf16.xpose.msra.mxu0 0
  %638 = vmatprep.subr.bf16.mxu0 0
  %639 = vmatpush2.bf16.xpose.msra.mxu0 0
  %640 = vmatprep.subr.bf16.mxu0 0
  %641 = vmatpush2.bf16.xpose.msra.mxu0 0
  %642 = vmatprep.subr.bf16.mxu0 0
  %643 = vmatpush2.bf16.xpose.msra.mxu0 0
  %644 = vmatprep.subr.bf16.mxu0 0
  %645 = vmatpush2.bf16.xpose.msra.mxu0 0
  %646 = vmatprep.subr.bf16.mxu0 0
  %647 = vmatpush2.bf16.xpose.msra.mxu0 0
  %648 = vmatprep.subr.bf16.mxu0 0
  %649 = vmatpush2.bf16.xpose.msra.mxu0 0
  %650 = vmatprep.mubr.bf16.mxu0 %v333
  %651 = vmatmul.mubr.bf16.gmra.mxu0 %v332
  %v652 = vpop.f32.mrf.mxu0
  %v653 = vadd.f32 %v556, %v652
  %v654 = vpop.f32.mrf.mxu0
  %v655 = vpop.f32.mrf.mxu0
  %v656 = vadd.f32 %v559, %v655
  %v657 = vpop.f32.mrf.mxu0
  %658 = vmatprep.mubr.bf16.mxu0 %v339
  %659 = vmatmul.mubr.bf16.gmra.mxu0 %v338
  %v660 = vpop.f32.mrf.mxu0
  %v661 = vadd.f32 %v564, %v660
  %v662 = vpop.f32.mrf.mxu0
  %v663 = vpop.f32.mrf.mxu0
  %v664 = vadd.f32 %v567, %v663
  %v665 = vpop.f32.mrf.mxu0
  %666 = vmatprep.mubr.bf16.mxu0 %v345
  %667 = vmatmul.mubr.bf16.gmra.mxu0 %v344
  %v668 = vpop.f32.mrf.mxu0
  %v669 = vadd.f32 %v572, %v668
  %v670 = vpop.f32.mrf.mxu0
  %v671 = vpop.f32.mrf.mxu0
  %v672 = vadd.f32 %v575, %v671
  %v673 = vpop.f32.mrf.mxu0
  %674 = vmatprep.mubr.bf16.mxu0 %v351
  %675 = vmatmul.mubr.bf16.gmra.mxu0 %v350
  %v676 = vpop.f32.mrf.mxu0
  %v677 = vadd.f32 %v580, %v676
  %v678 = vpop.f32.mrf.mxu0
  %v679 = vpop.f32.mrf.mxu0
  %v680 = vadd.f32 %v583, %v679
  %v681 = vpop.f32.mrf.mxu0
  %682 = vmatprep.mubr.bf16.mxu0 %v357
  %683 = vmatmul.mubr.bf16.gmra.mxu0 %v356
  %v684 = vpop.f32.mrf.mxu0
  %v685 = vadd.f32 %v588, %v684
  %v686 = vpop.f32.mrf.mxu0
  %v687 = vpop.f32.mrf.mxu0
  %v688 = vadd.f32 %v591, %v687
  %v689 = vpop.f32.mrf.mxu0
  %690 = vmatprep.mubr.bf16.mxu0 %v363
  %691 = vmatmul.mubr.bf16.gmra.mxu0 %v362
  %v692 = vpop.f32.mrf.mxu0
  %v693 = vadd.f32 %v596, %v692
  %v694 = vpop.f32.mrf.mxu0
  %v695 = vpop.f32.mrf.mxu0
  %v696 = vadd.f32 %v599, %v695
  %v697 = vpop.f32.mrf.mxu0
  %698 = vmatprep.mubr.bf16.mxu0 %v369
  %699 = vmatmul.mubr.bf16.gmra.mxu0 %v368
  %v700 = vpop.f32.mrf.mxu0
  %v701 = vadd.f32 %v604, %v700
  %v702 = vpop.f32.mrf.mxu0
  %v703 = vpop.f32.mrf.mxu0
  %v704 = vadd.f32 %v607, %v703
  %v705 = vpop.f32.mrf.mxu0
  %706 = vmatprep.mubr.bf16.mxu0 %v375
  %707 = vmatmul.mubr.bf16.gmra.mxu0 %v374
  %v708 = vpop.f32.mrf.mxu0
  %v709 = vadd.f32 %v612, %v708
  %v710 = vpop.f32.mrf.mxu0
  %v711 = vpop.f32.mrf.mxu0
  %v712 = vadd.f32 %v615, %v711
  %v713 = vpop.f32.mrf.mxu0
  %714 = vdwg.mxu0
  %v715 = vlaneseq
  %v716 = vshrl.u32 %v715, 7
  %v717 = vadd.s32 %v716, 8
  %v718 = vadd.s32 %v716, 16
  %v719 = vadd.s32 %v716, 24
  %v720 = vadd.s32 %v716, 32
  %v721 = vadd.s32 %v716, 40
  %v722 = vadd.s32 %v716, 48
  %v723 = vadd.s32 %v716, 56
  %v724 = vadd.s32 %v716, 64
  %v725 = vadd.s32 %v716, 72
  %v726 = vadd.s32 %v716, 80
  %v727 = vadd.s32 %v716, 88
  %v728 = vadd.s32 %v716, 96
  %v729 = vadd.s32 %v716, 104
  %v730 = vadd.s32 %v716, 112
  %v731 = vadd.s32 %v716, 120
  %s732 = smul.u32 0, 128
  %v733 = vstv %s732
  %v734 = vadd.s32 %v716, %v733
  %v735 = vadd.s32 %v717, %v733
  %v736 = vadd.s32 %v718, %v733
  %v737 = vadd.s32 %v719, %v733
  %v738 = vadd.s32 %v720, %v733
  %v739 = vadd.s32 %v721, %v733
  %v740 = vadd.s32 %v722, %v733
  %v741 = vadd.s32 %v723, %v733
  %v742 = vadd.s32 %v724, %v733
  %v743 = vadd.s32 %v725, %v733
  %v744 = vadd.s32 %v726, %v733
  %v745 = vadd.s32 %v727, %v733
  %v746 = vadd.s32 %v728, %v733
  %v747 = vadd.s32 %v729, %v733
  %v748 = vadd.s32 %v730, %v733
  %v749 = vadd.s32 %v731, %v733
  %vm750 = vcmp.lt.s32.totalorder %v734, 128
  %vm751 = vcmp.lt.s32.totalorder %v735, 128
  %vm752 = vcmp.lt.s32.totalorder %v736, 128
  %vm753 = vcmp.lt.s32.totalorder %v737, 128
  %vm754 = vcmp.lt.s32.totalorder %v738, 128
  %vm755 = vcmp.lt.s32.totalorder %v739, 128
  %vm756 = vcmp.lt.s32.totalorder %v740, 128
  %vm757 = vcmp.lt.s32.totalorder %v741, 128
  %vm758 = vcmp.lt.s32.totalorder %v742, 128
  %vm759 = vcmp.lt.s32.totalorder %v743, 128
  %vm760 = vcmp.lt.s32.totalorder %v744, 128
  %vm761 = vcmp.lt.s32.totalorder %v745, 128
  %vm762 = vcmp.lt.s32.totalorder %v746, 128
  %vm763 = vcmp.lt.s32.totalorder %v747, 128
  %vm764 = vcmp.lt.s32.totalorder %v748, 128
  %vm765 = vcmp.lt.s32.totalorder %v749, 128
  %v766 = vsel %vm750, %v653, -inf
  %v767 = vsel %vm751, %v656, -inf
  %v768 = vsel %vm752, %v661, -inf
  %v769 = vsel %vm753, %v664, -inf
  %v770 = vsel %vm754, %v669, -inf
  %v771 = vsel %vm755, %v672, -inf
  %v772 = vsel %vm756, %v677, -inf
  %v773 = vsel %vm757, %v680, -inf
  %v774 = vsel %vm758, %v685, -inf
  %v775 = vsel %vm759, %v688, -inf
  %v776 = vsel %vm760, %v693, -inf
  %v777 = vsel %vm761, %v696, -inf
  %v778 = vsel %vm762, %v701, -inf
  %v779 = vsel %vm763, %v704, -inf
  %v780 = vsel %vm764, %v709, -inf
  %v781 = vsel %vm765, %v712, -inf
  %vm782 = vcmask 130048
  %v783 = vsel %vm782, %v766, -inf
  %v784 = vsel %vm782, %v767, -inf
  %v785 = vsel %vm782, %v768, -inf
  %v786 = vsel %vm782, %v769, -inf
  %v787 = vsel %vm782, %v770, -inf
  %v788 = vmax.f32 %v783, %v787
  %v789 = vsel %vm782, %v771, -inf
  %v790 = vmax.f32 %v784, %v789
  %v791 = vsel %vm782, %v772, -inf
  %v792 = vmax.f32 %v785, %v791
  %v793 = vsel %vm782, %v773, -inf
  %v794 = vmax.f32 %v786, %v793
  %v795 = vsel %vm782, %v774, -inf
  %v796 = vmax.f32 %v788, %v795
  %v797 = vsel %vm782, %v775, -inf
  %v798 = vmax.f32 %v790, %v797
  %v799 = vsel %vm782, %v776, -inf
  %v800 = vmax.f32 %v792, %v799
  %v801 = vsel %vm782, %v777, -inf
  %v802 = vmax.f32 %v794, %v801
  %v803 = vsel %vm782, %v778, -inf
  %v804 = vmax.f32 %v796, %v803
  %v805 = vsel %vm782, %v779, -inf
  %v806 = vmax.f32 %v798, %v805
  %v807 = vsel %vm782, %v780, -inf
  %v808 = vmax.f32 %v800, %v807
  %v809 = vsel %vm782, %v781, -inf
  %v810 = vmax.f32 %v802, %v809
  %v811 = vmax.f32 %v804, %v806
  %v812 = vmax.f32 %v808, %v810
  %v813 = vmax.f32 %v811, %v812
  %v814 = vrot.slane %v813, 4
  %v815 = vmax.f32 %v813, %v814
  %v816 = vrot.slane %v815, 2
  %v817 = vmax.f32 %v815, %v816
  %v818 = vrot.slane %v817, 1
  %v819 = vmax.f32 %v817, %v818
  %vm820 = vcmp.eq.f32.partialorder %v766, %v819
  %vm821 = vcmp.eq.f32.partialorder %v767, %v819
  %vm822 = vcmp.eq.f32.partialorder %v768, %v819
  %vm823 = vcmp.eq.f32.partialorder %v769, %v819
  %vm824 = vcmp.eq.f32.partialorder %v770, %v819
  %vm825 = vcmp.eq.f32.partialorder %v771, %v819
  %vm826 = vcmp.eq.f32.partialorder %v772, %v819
  %vm827 = vcmp.eq.f32.partialorder %v773, %v819
  %vm828 = vcmp.eq.f32.partialorder %v774, %v819
  %vm829 = vcmp.eq.f32.partialorder %v775, %v819
  %vm830 = vcmp.eq.f32.partialorder %v776, %v819
  %vm831 = vcmp.eq.f32.partialorder %v777, %v819
  %vm832 = vcmp.eq.f32.partialorder %v778, %v819
  %vm833 = vcmp.eq.f32.partialorder %v779, %v819
  %vm834 = vcmp.eq.f32.partialorder %v780, %v819
  %vm835 = vcmp.eq.f32.partialorder %v781, %v819
  %v836 = vsel %vm820, %v734, 128
  %v837 = vsel %vm821, %v735, 128
  %v838 = vsel %vm822, %v736, 128
  %v839 = vsel %vm823, %v737, 128
  %v840 = vsel %vm824, %v738, 128
  %v841 = vsel %vm825, %v739, 128
  %v842 = vsel %vm826, %v740, 128
  %v843 = vsel %vm827, %v741, 128
  %v844 = vsel %vm828, %v742, 128
  %v845 = vsel %vm829, %v743, 128
  %v846 = vsel %vm830, %v744, 128
  %v847 = vsel %vm831, %v745, 128
  %v848 = vsel %vm832, %v746, 128
  %v849 = vsel %vm833, %v747, 128
  %v850 = vsel %vm834, %v748, 128
  %v851 = vsel %vm835, %v749, 128
  %v852 = vsel %vm782, %v836, 2147483647
  %v853 = vsel %vm782, %v837, 2147483647
  %v854 = vsel %vm782, %v838, 2147483647
  %v855 = vsel %vm782, %v839, 2147483647
  %v856 = vsel %vm782, %v840, 2147483647
  %vm857 = vcmp.lt.s32.totalorder %v852, %v856
  %v858 = vsel %vm857, %v852, %v856
  %v859 = vsel %vm782, %v841, 2147483647
  %vm860 = vcmp.lt.s32.totalorder %v853, %v859
  %v861 = vsel %vm860, %v853, %v859
  %v862 = vsel %vm782, %v842, 2147483647
  %vm863 = vcmp.lt.s32.totalorder %v854, %v862
  %v864 = vsel %vm863, %v854, %v862
  %v865 = vsel %vm782, %v843, 2147483647
  %vm866 = vcmp.lt.s32.totalorder %v855, %v865
  %v867 = vsel %vm866, %v855, %v865
  %v868 = vsel %vm782, %v844, 2147483647
  %vm869 = vcmp.lt.s32.totalorder %v858, %v868
  %v870 = vsel %vm869, %v858, %v868
  %v871 = vsel %vm782, %v845, 2147483647
  %vm872 = vcmp.lt.s32.totalorder %v861, %v871
  %v873 = vsel %vm872, %v861, %v871
  %v874 = vsel %vm782, %v846, 2147483647
  %vm875 = vcmp.lt.s32.totalorder %v864, %v874
  %v876 = vsel %vm875, %v864, %v874
  %v877 = vsel %vm782, %v847, 2147483647
  %vm878 = vcmp.lt.s32.totalorder %v867, %v877
  %v879 = vsel %vm878, %v867, %v877
  %v880 = vsel %vm782, %v848, 2147483647
  %vm881 = vcmp.lt.s32.totalorder %v870, %v880
  %v882 = vsel %vm881, %v870, %v880
  %v883 = vsel %vm782, %v849, 2147483647
  %vm884 = vcmp.lt.s32.totalorder %v873, %v883
  %v885 = vsel %vm884, %v873, %v883
  %v886 = vsel %vm782, %v850, 2147483647
  %vm887 = vcmp.lt.s32.totalorder %v876, %v886
  %v888 = vsel %vm887, %v876, %v886
  %v889 = vsel %vm782, %v851, 2147483647
  %vm890 = vcmp.lt.s32.totalorder %v879, %v889
  %v891 = vsel %vm890, %v879, %v889
  %vm892 = vcmp.lt.s32.totalorder %v882, %v885
  %v893 = vsel %vm892, %v882, %v885
  %vm894 = vcmp.lt.s32.totalorder %v888, %v891
  %v895 = vsel %vm894, %v888, %v891
  %vm896 = vcmp.lt.s32.totalorder %v893, %v895
  %v897 = vsel %vm896, %v893, %v895
  %v898 = vrot.slane %v897, 4
  %vm899 = vcmp.lt.s32.totalorder %v897, %v898
  %v900 = vsel %vm899, %v897, %v898
  %v901 = vrot.slane %v900, 2
  %vm902 = vcmp.lt.s32.totalorder %v900, %v901
  %v903 = vsel %vm902, %v900, %v901
  %v904 = vrot.slane %v903, 1
  %vm905 = vcmp.lt.s32.totalorder %v903, %v904
  %v906 = vsel %vm905, %v903, %v904
  %v907 = vld [vmem:[#allocation2] sm:$0x1]
  %vm908 = vcmp.gt.f32.partialorder %v819, %v907
  %v909 = vld [vmem:[#allocation3] sm:$0x1]
  %v910 = vsel %vm908, %v906, %v909
  %vm911 = vcmask 122880
  %912 = vst.msk [vmem:[#allocation3] sm:$0x1] %vm911, %v910
  %v913 = vld [vmem:[#allocation2] sm:$0x1]
  %v914 = vmax.f32 %v913, %v819
  %915 = vst.msk [vmem:[#allocation2] sm:$0x1] %vm911, %v914
  // Predicated region
  $region18: #{gpt_forward.13} parent=0 // pred_check
    %p916 = pneg %p15
  $region19: #{gpt_forward.13} parent=0 // pred_check_branch
    %918 = sbr.rel (%p916) target = $region21
  $region20: #{gpt_forward.13} parent=0 // pred_region
    %v919 = vld [vmem:[#allocation3] sm:$0x1]
    %920 = vst.msk [vmem:[%s3] sm:$0x1] %vm911, %v919
  $region21: #{gpt_forward.13} parent=0 // pred_fallthru
    _
  // Predicated region
  $region22: #{gpt_forward.13} parent=0 // pred_check
    _
  $region23: #{gpt_forward.13} parent=0 // pred_check_branch
    %922 = sbr.rel (0) target = $region25
  $region24: #{gpt_forward.13} parent=0 // pred_region
    _
  $region25: #{gpt_forward.13} parent=0 // pred_fallthru
    _
  // Predicated region
  $region26: #{gpt_forward.13} parent=0 // pred_check
    _
  $region27: #{gpt_forward.13} parent=0 // pred_check_branch
    %924 = sbr.rel (0) target = $region29
  $region28: #{gpt_forward.13} parent=0 // pred_region
    _
  $region29: #{gpt_forward.13} parent=0 // pred_fallthru
    _

// kernel: gpt_forward.8
$region0: #{gpt_forward.8}
  #allocation0 [shape = 'u32[]', space=smem, size = 0x4, offset = 0x4, fixed_abs, tag = 'smem constant byte address 0x4 - core index']
  #allocation1 [shape = 'u32[144,128]{1,0:T(1,128)}', space=vmem, size = 0x12000, scoped, tag = 'internal scratch']
  %s0 = inlined_call_operand.vmem [shape: f32[16,768], index: 0, kind: input, shape index: {}]
  %s1 = inlined_call_operand.vmem [shape: f32[16,768], index: 1, kind: input, shape index: {}]
  %s2 = inlined_call_operand.vmem [shape: f32[1,768], index: 2, kind: input, shape index: {}]
  %s3 = inlined_call_operand.vmem [shape: f32[1,768], index: 3, kind: input, shape index: {}]
  %s4 = inlined_call_operand.vmem [shape: bf16[768,1024], index: 4, kind: input, shape index: {}]
  %s5 = inlined_call_operand.vmem [shape: f32[1,1024], index: 5, kind: input, shape index: {}]
  %s6 = inlined_call_operand.vmem [shape: bf16[1024,768], index: 6, kind: input, shape index: {}]
  %s7 = inlined_call_operand.vmem [shape: f32[1,768], index: 7, kind: input, shape index: {}]
  %s8 = inlined_call_operand.vmem [shape: f32[1,768], index: 8, kind: input, shape index: {}]
  %s9 = inlined_call_operand.vmem [shape: f32[1,768], index: 9, kind: input, shape index: {}]
  %s10 = inlined_call_operand.vmem [shape: f32[16,768], index: 10, kind: output, shape index: {}]
  %s11 = sld [smem:[#allocation0]]
  $region50: #{gpt_forward.8} parent=0
    _
  %s13 = ssub.s32 1, %s11
  %s14 = scalar_select 0, %s13, %s11
  // Predicated region
  $region2: #{gpt_forward.8} parent=0 // pred_check
    _
  $region3: #{gpt_forward.8} parent=0 // pred_check_branch
    %16 = sbr.rel (0) target = $region5
  $region4: #{gpt_forward.8} parent=0 // pred_region
    _
  $region5: #{gpt_forward.8} parent=0 // pred_fallthru
    _
  // Predicated region
  $region6: #{gpt_forward.8} parent=0 // pred_check
    _
  $region7: #{gpt_forward.8} parent=0 // pred_check_branch
    %18 = sbr.rel (0) target = $region9
  $region8: #{gpt_forward.8} parent=0 // pred_region
    _
  $region9: #{gpt_forward.8} parent=0 // pred_fallthru
    _
  // Predicated region
  $region10: #{gpt_forward.8} parent=0 // pred_check
    _
  $region11: #{gpt_forward.8} parent=0 // pred_check_branch
    %20 = sbr.rel (0) target = $region13
  $region12: #{gpt_forward.8} parent=0 // pred_region
    _
  $region13: #{gpt_forward.8} parent=0 // pred_fallthru
    _
  // Predicated region
  $region14: #{gpt_forward.8} parent=0 // pred_check
    _
  $region15: #{gpt_forward.8} parent=0 // pred_check_branch
    %22 = sbr.rel (0) target = $region17
  $region16: #{gpt_forward.8} parent=0 // pred_region
    _
  $region17: #{gpt_forward.8} parent=0 // pred_fallthru
    _
  // Predicated region
  $region18: #{gpt_forward.8} parent=0 // pred_check
    _
  $region19: #{gpt_forward.8} parent=0 // pred_check_branch
    %24 = sbr.rel (0) target = $region21
  $region20: #{gpt_forward.8} parent=0 // pred_region
    _
  $region21: #{gpt_forward.8} parent=0 // pred_fallthru
    _
  // Predicated region
  $region22: #{gpt_forward.8} parent=0 // pred_check
    _
  $region23: #{gpt_forward.8} parent=0 // pred_check_branch
    %26 = sbr.rel (0) target = $region25
  $region24: #{gpt_forward.8} parent=0 // pred_region
    _
  $region25: #{gpt_forward.8} parent=0 // pred_fallthru
    _
  // Predicated region
  $region26: #{gpt_forward.8} parent=0 // pred_check
    _
  $region27: #{gpt_forward.8} parent=0 // pred_check_branch
    %28 = sbr.rel (0) target = $region29
  $region28: #{gpt_forward.8} parent=0 // pred_region
    _
  $region29: #{gpt_forward.8} parent=0 // pred_fallthru
    _
  // Predicated region
  $region30: #{gpt_forward.8} parent=0 // pred_check
    _
  $region31: #{gpt_forward.8} parent=0 // pred_check_branch
    %30 = sbr.rel (0) target = $region33
  $region32: #{gpt_forward.8} parent=0 // pred_region
    _
  $region33: #{gpt_forward.8} parent=0 // pred_fallthru
    _
  // Predicated region
  $region34: #{gpt_forward.8} parent=0 // pred_check
    _
  $region35: #{gpt_forward.8} parent=0 // pred_check_branch
    %32 = sbr.rel (0) target = $region37
  $region36: #{gpt_forward.8} parent=0 // pred_region
    _
  $region37: #{gpt_forward.8} parent=0 // pred_fallthru
    _
  // Predicated region
  $region38: #{gpt_forward.8} parent=0 // pred_check
    _
  $region39: #{gpt_forward.8} parent=0 // pred_check_branch
    %34 = sbr.rel (0) target = $region41
  $region40: #{gpt_forward.8} parent=0 // pred_region
    _
  $region41: #{gpt_forward.8} parent=0 // pred_fallthru
    _
  %v35 = vld [vmem:[%s0] sm:$0xff]
  %v36 = vld [vmem:[%s0 + $0x8] sm:$0xff]
  %v37 = vld [vmem:[%s0 + $0x10] sm:$0xff]
  %v38 = vld [vmem:[%s0 + $0x18] sm:$0xff]
  %v39 = vld [vmem:[%s0 + $0x20] sm:$0xff]
  %v40 = vld [vmem:[%s0 + $0x28] sm:$0xff]
  %v41 = vld [vmem:[%s0 + $0x30] sm:$0xff]
  %v42 = vld [vmem:[%s0 + $0x38] sm:$0xff]
  %v43 = vld [vmem:[%s0 + $0x40] sm:$0xff]
  %v44 = vld [vmem:[%s0 + $0x48] sm:$0xff]
  %v45 = vld [vmem:[%s0 + $0x50] sm:$0xff]
  %v46 = vld [vmem:[%s0 + $0x58] sm:$0xff]
  %v47 = vld [vmem:[%s1] sm:$0xff]
  %v48 = vld [vmem:[%s1 + $0x8] sm:$0xff]
  %v49 = vld [vmem:[%s1 + $0x10] sm:$0xff]
  %v50 = vld [vmem:[%s1 + $0x18] sm:$0xff]
  %v51 = vld [vmem:[%s1 + $0x20] sm:$0xff]
  %v52 = vld [vmem:[%s1 + $0x28] sm:$0xff]
  %v53 = vld [vmem:[%s1 + $0x30] sm:$0xff]
  %v54 = vld [vmem:[%s1 + $0x38] sm:$0xff]
  %v55 = vld [vmem:[%s1 + $0x40] sm:$0xff]
  %v56 = vld [vmem:[%s1 + $0x48] sm:$0xff]
  %v57 = vld [vmem:[%s1 + $0x50] sm:$0xff]
  %v58 = vld [vmem:[%s1 + $0x58] sm:$0xff]
  %v59 = vadd.f32 %v35, %v47
  %v60 = vadd.f32 %v36, %v48
  %v61 = vadd.f32 %v37, %v49
  %v62 = vadd.f32 %v38, %v50
  %v63 = vadd.f32 %v39, %v51
  %v64 = vadd.f32 %v40, %v52
  %v65 = vadd.f32 %v41, %v53
  %v66 = vadd.f32 %v42, %v54
  %v67 = vadd.f32 %v43, %v55
  %v68 = vadd.f32 %v44, %v56
  %v69 = vadd.f32 %v45, %v57
  %v70 = vadd.f32 %v46, %v58
  %v71 = vld [vmem:[%s2] sm:$0x3f]
  %v72 = vld [vmem:[%s3] sm:$0x3f]
  %v73 = vadd.f32 %v59, %v60
  %v74 = vadd.f32 %v73, %v61
  %v75 = vadd.f32 %v74, %v62
  %v76 = vadd.f32 %v75, %v63
  %v77 = vadd.f32 %v76, %v64
  %78 = vadd.xlane.f32.xlu0 %v77
  %v79 = vpop.xlane.xlu0 %78
  %v80 = vadd.f32 %v65, %v66
  %v81 = vadd.f32 %v80, %v67
  %v82 = vadd.f32 %v81, %v68
  %v83 = vadd.f32 %v82, %v69
  %v84 = vadd.f32 %v83, %v70
  %85 = vadd.xlane.f32.xlu0 %v84
  %v86 = vpop.xlane.xlu0 %85
  %v87 = vrcp.pop 768.0
  %v88 = vmul.f32 %v79, %v87
  %v89 = vmul.f32 %v86, %v87
  %v90 = vsub.f32 %v59, %v88
  %v91 = vsub.f32 %v60, %v88
  %v92 = vsub.f32 %v61, %v88
  %v93 = vsub.f32 %v62, %v88
  %v94 = vsub.f32 %v63, %v88
  %v95 = vsub.f32 %v64, %v88
  %v96 = vsub.f32 %v65, %v89
  %v97 = vsub.f32 %v66, %v89
  %v98 = vsub.f32 %v67, %v89
  %v99 = vsub.f32 %v68, %v89
  %v100 = vsub.f32 %v69, %v89
  %v101 = vsub.f32 %v70, %v89
  %v102 = vmul.f32 %v90, %v90
  %v103 = vmul.f32 %v91, %v91
  %v104 = vmul.f32 %v92, %v92
  %v105 = vmul.f32 %v93, %v93
  %v106 = vmul.f32 %v94, %v94
  %v107 = vmul.f32 %v95, %v95
  %v108 = vmul.f32 %v96, %v96
  %v109 = vmul.f32 %v97, %v97
  %v110 = vmul.f32 %v98, %v98
  %v111 = vmul.f32 %v99, %v99
  %v112 = vmul.f32 %v100, %v100
  %v113 = vmul.f32 %v101, %v101
  %v114 = vadd.f32 %v102, %v103
  %v115 = vadd.f32 %v114, %v104
  %v116 = vadd.f32 %v115, %v105
  %v117 = vadd.f32 %v116, %v106
  %v118 = vadd.f32 %v117, %v107
  %119 = vadd.xlane.f32.xlu0 %v118
  %v120 = vpop.xlane.xlu0 %119
  %v121 = vadd.f32 %v108, %v109
  %v122 = vadd.f32 %v121, %v110
  %v123 = vadd.f32 %v122, %v111
  %v124 = vadd.f32 %v123, %v112
  %v125 = vadd.f32 %v124, %v113
  %126 = vadd.xlane.f32.xlu0 %v125
  %v127 = vpop.xlane.xlu0 %126
  %v128 = vmul.f32 %v120, %v87
  %v129 = vmul.f32 %v127, %v87
  %v130 = vadd.f32 %v128, 1e-05
  %v131 = vadd.f32 %v129, 1e-05
  %v132 = vrsqrt.pop %v130
  %v133 = vrsqrt.pop %v131
  %v134 = vmul.f32 %v90, %v132
  %v135 = vmul.f32 %v91, %v132
  %v136 = vmul.f32 %v92, %v132
  %v137 = vmul.f32 %v93, %v132
  %v138 = vmul.f32 %v94, %v132
  %v139 = vmul.f32 %v95, %v132
  %v140 = vmul.f32 %v96, %v133
  %v141 = vmul.f32 %v97, %v133
  %v142 = vmul.f32 %v98, %v133
  %v143 = vmul.f32 %v99, %v133
  %v144 = vmul.f32 %v100, %v133
  %v145 = vmul.f32 %v101, %v133
  %v147 = vlaneseq
  %v148 = vshrl.u32 %v147, 7
  %v149 = vsub.s32 0, %v148
  %v150 = vrot.slane %v71, %v149
  %v151 = vlaneseq
  %v152 = vshrl.u32 %v151, 7
  %v153 = vsub.s32 1, %v152
  %v154 = vrot.slane %v71, %v153
  %v155 = vlaneseq
  %v156 = vshrl.u32 %v155, 7
  %v157 = vsub.s32 2, %v156
  %v158 = vrot.slane %v71, %v157
  %v159 = vlaneseq
  %v160 = vshrl.u32 %v159, 7
  %v161 = vsub.s32 3, %v160
  %v162 = vrot.slane %v71, %v161
  %v163 = vlaneseq
  %v164 = vshrl.u32 %v163, 7
  %v165 = vsub.s32 4, %v164
  %v166 = vrot.slane %v71, %v165
  %v167 = vlaneseq
  %v168 = vshrl.u32 %v167, 7
  %v169 = vsub.s32 5, %v168
  %v170 = vrot.slane %v71, %v169
  %v177 = vmul.f32 %v134, %v150
  %v178 = vmul.f32 %v135, %v154
  %v179 = vmul.f32 %v136, %v158
  %v180 = vmul.f32 %v137, %v162
  %v181 = vmul.f32 %v138, %v166
  %v182 = vmul.f32 %v139, %v170
  %v183 = vmul.f32 %v140, %v150
  %v184 = vmul.f32 %v141, %v154
  %v185 = vmul.f32 %v142, %v158
  %v186 = vmul.f32 %v143, %v162
  %v187 = vmul.f32 %v144, %v166
  %v188 = vmul.f32 %v145, %v170
  %v190 = vlaneseq
  %v191 = vshrl.u32 %v190, 7
  %v192 = vsub.s32 0, %v191
  %v193 = vrot.slane %v72, %v192
  %v194 = vlaneseq
  %v195 = vshrl.u32 %v194, 7
  %v196 = vsub.s32 1, %v195
  %v197 = vrot.slane %v72, %v196
  %v198 = vlaneseq
  %v199 = vshrl.u32 %v198, 7
  %v200 = vsub.s32 2, %v199
  %v201 = vrot.slane %v72, %v200
  %v202 = vlaneseq
  %v203 = vshrl.u32 %v202, 7
  %v204 = vsub.s32 3, %v203
  %v205 = vrot.slane %v72, %v204
  %v206 = vlaneseq
  %v207 = vshrl.u32 %v206, 7
  %v208 = vsub.s32 4, %v207
  %v209 = vrot.slane %v72, %v208
  %v210 = vlaneseq
  %v211 = vshrl.u32 %v210, 7
  %v212 = vsub.s32 5, %v211
  %v213 = vrot.slane %v72, %v212
  %v220 = vadd.f32 %v177, %v193
  %v221 = vadd.f32 %v178, %v197
  %v222 = vadd.f32 %v179, %v201
  %v223 = vadd.f32 %v180, %v205
  %v224 = vadd.f32 %v181, %v209
  %v225 = vadd.f32 %v182, %v213
  %v226 = vadd.f32 %v183, %v193
  %v227 = vadd.f32 %v184, %v197
  %v228 = vadd.f32 %v185, %v201
  %v229 = vadd.f32 %v186, %v205
  %v230 = vadd.f32 %v187, %v209
  %v231 = vadd.f32 %v188, %v213
  %v232 = vpack.c.bf16 %v226, %v220
  %v233 = vpack.c.bf16 %v227, %v221
  %v234 = vpack.c.bf16 %v228, %v222
  %v235 = vpack.c.bf16 %v229, %v223
  %v236 = vpack.c.bf16 %v230, %v224
  %v237 = vpack.c.bf16 %v231, %v225
  %v238 = vld [vmem:[%s4] sm:$0xff]
  %v239 = vld [vmem:[%s4 + $0x8] sm:$0xff]
  %v240 = vld [vmem:[%s4 + $0x10] sm:$0xff]
  %v241 = vld [vmem:[%s4 + $0x18] sm:$0xff]
  %v242 = vld [vmem:[%s4 + $0x20] sm:$0xff]
  %v243 = vld [vmem:[%s4 + $0x28] sm:$0xff]
  %v244 = vld [vmem:[%s4 + $0x30] sm:$0xff]
  %v245 = vld [vmem:[%s4 + $0x38] sm:$0xff]
  %v246 = vld [vmem:[%s4 + $0x40] sm:$0xff]
  %v247 = vld [vmem:[%s4 + $0x48] sm:$0xff]
  %v248 = vld [vmem:[%s4 + $0x50] sm:$0xff]
  %v249 = vld [vmem:[%s4 + $0x58] sm:$0xff]
  %v250 = vld [vmem:[%s4 + $0x60] sm:$0xff]
  %v251 = vld [vmem:[%s4 + $0x68] sm:$0xff]
  %v252 = vld [vmem:[%s4 + $0x70] sm:$0xff]
  %v253 = vld [vmem:[%s4 + $0x78] sm:$0xff]
  %v254 = vld [vmem:[%s4 + $0x80] sm:$0xff]
  %v255 = vld [vmem:[%s4 + $0x88] sm:$0xff]
  %v256 = vld [vmem:[%s4 + $0x90] sm:$0xff]
  %v257 = vld [vmem:[%s4 + $0x98] sm:$0xff]
  %v258 = vld [vmem:[%s4 + $0xa0] sm:$0xff]
  %v259 = vld [vmem:[%s4 + $0xa8] sm:$0xff]
  %v260 = vld [vmem:[%s4 + $0xb0] sm:$0xff]
  %v261 = vld [vmem:[%s4 + $0xb8] sm:$0xff]
  %v262 = vld [vmem:[%s4 + $0xc0] sm:$0xff]
  %v263 = vld [vmem:[%s4 + $0xc8] sm:$0xff]
  %v264 = vld [vmem:[%s4 + $0xd0] sm:$0xff]
  %v265 = vld [vmem:[%s4 + $0xd8] sm:$0xff]
  %v266 = vld [vmem:[%s4 + $0xe0] sm:$0xff]
  %v267 = vld [vmem:[%s4 + $0xe8] sm:$0xff]
  %v268 = vld [vmem:[%s4 + $0xf0] sm:$0xff]
  %v269 = vld [vmem:[%s4 + $0xf8] sm:$0xff]
  %v270 = vld [vmem:[%s4 + $0x100] sm:$0xff]
  %v271 = vld [vmem:[%s4 + $0x108] sm:$0xff]
  %v272 = vld [vmem:[%s4 + $0x110] sm:$0xff]
  %v273 = vld [vmem:[%s4 + $0x118] sm:$0xff]
  %v274 = vld [vmem:[%s4 + $0x120] sm:$0xff]
  %v275 = vld [vmem:[%s4 + $0x128] sm:$0xff]
  %v276 = vld [vmem:[%s4 + $0x130] sm:$0xff]
  %v277 = vld [vmem:[%s4 + $0x138] sm:$0xff]
  %v278 = vld [vmem:[%s4 + $0x140] sm:$0xff]
  %v279 = vld [vmem:[%s4 + $0x148] sm:$0xff]
  %v280 = vld [vmem:[%s4 + $0x150] sm:$0xff]
  %v281 = vld [vmem:[%s4 + $0x158] sm:$0xff]
  %v282 = vld [vmem:[%s4 + $0x160] sm:$0xff]
  %v283 = vld [vmem:[%s4 + $0x168] sm:$0xff]
  %v284 = vld [vmem:[%s4 + $0x170] sm:$0xff]
  %v285 = vld [vmem:[%s4 + $0x178] sm:$0xff]
  %v286 = vld [vmem:[%s4 + $0x180] sm:$0xff]
  %v287 = vld [vmem:[%s4 + $0x188] sm:$0xff]
  %v288 = vld [vmem:[%s4 + $0x190] sm:$0xff]
  %v289 = vld [vmem:[%s4 + $0x198] sm:$0xff]
  %v290 = vld [vmem:[%s4 + $0x1a0] sm:$0xff]
  %v291 = vld [vmem:[%s4 + $0x1a8] sm:$0xff]
  %v292 = vld [vmem:[%s4 + $0x1b0] sm:$0xff]
  %v293 = vld [vmem:[%s4 + $0x1b8] sm:$0xff]
  %v294 = vld [vmem:[%s4 + $0x1c0] sm:$0xff]
  %v295 = vld [vmem:[%s4 + $0x1c8] sm:$0xff]
  %v296 = vld [vmem:[%s4 + $0x1d0] sm:$0xff]
  %v297 = vld [vmem:[%s4 + $0x1d8] sm:$0xff]
  %v298 = vld [vmem:[%s4 + $0x1e0] sm:$0xff]
  %v299 = vld [vmem:[%s4 + $0x1e8] sm:$0xff]
  %v300 = vld [vmem:[%s4 + $0x1f0] sm:$0xff]
  %v301 = vld [vmem:[%s4 + $0x1f8] sm:$0xff]
  %v302 = vld [vmem:[%s4 + $0x200] sm:$0xff]
  %v303 = vld [vmem:[%s4 + $0x208] sm:$0xff]
  %v304 = vld [vmem:[%s4 + $0x210] sm:$0xff]
  %v305 = vld [vmem:[%s4 + $0x218] sm:$0xff]
  %v306 = vld [vmem:[%s4 + $0x220] sm:$0xff]
  %v307 = vld [vmem:[%s4 + $0x228] sm:$0xff]
  %v308 = vld [vmem:[%s4 + $0x230] sm:$0xff]
  %v309 = vld [vmem:[%s4 + $0x238] sm:$0xff]
  %v310 = vld [vmem:[%s4 + $0x240] sm:$0xff]
  %v311 = vld [vmem:[%s4 + $0x248] sm:$0xff]
  %v312 = vld [vmem:[%s4 + $0x250] sm:$0xff]
  %v313 = vld [vmem:[%s4 + $0x258] sm:$0xff]
  %v314 = vld [vmem:[%s4 + $0x260] sm:$0xff]
  %v315 = vld [vmem:[%s4 + $0x268] sm:$0xff]
  %v316 = vld [vmem:[%s4 + $0x270] sm:$0xff]
  %v317 = vld [vmem:[%s4 + $0x278] sm:$0xff]
  %v318 = vld [vmem:[%s4 + $0x280] sm:$0xff]
  %v319 = vld [vmem:[%s4 + $0x288] sm:$0xff]
  %v320 = vld [vmem:[%s4 + $0x290] sm:$0xff]
  %v321 = vld [vmem:[%s4 + $0x298] sm:$0xff]
  %v322 = vld [vmem:[%s4 + $0x2a0] sm:$0xff]
  %v323 = vld [vmem:[%s4 + $0x2a8] sm:$0xff]
  %v324 = vld [vmem:[%s4 + $0x2b0] sm:$0xff]
  %v325 = vld [vmem:[%s4 + $0x2b8] sm:$0xff]
  %v326 = vld [vmem:[%s4 + $0x2c0] sm:$0xff]
  %v327 = vld [vmem:[%s4 + $0x2c8] sm:$0xff]
  %v328 = vld [vmem:[%s4 + $0x2d0] sm:$0xff]
  %v329 = vld [vmem:[%s4 + $0x2d8] sm:$0xff]
  %v330 = vld [vmem:[%s4 + $0x2e0] sm:$0xff]
  %v331 = vld [vmem:[%s4 + $0x2e8] sm:$0xff]
  %v332 = vld [vmem:[%s4 + $0x2f0] sm:$0xff]
  %v333 = vld [vmem:[%s4 + $0x2f8] sm:$0xff]
  %v334 = vld [vmem:[%s4 + $0x300] sm:$0xff]
  %v335 = vld [vmem:[%s4 + $0x308] sm:$0xff]
  %v336 = vld [vmem:[%s4 + $0x310] sm:$0xff]
  %v337 = vld [vmem:[%s4 + $0x318] sm:$0xff]
  %v338 = vld [vmem:[%s4 + $0x320] sm:$0xff]
  %v339 = vld [vmem:[%s4 + $0x328] sm:$0xff]
  %v340 = vld [vmem:[%s4 + $0x330] sm:$0xff]
  %v341 = vld [vmem:[%s4 + $0x338] sm:$0xff]
  %v342 = vld [vmem:[%s4 + $0x340] sm:$0xff]
  %v343 = vld [vmem:[%s4 + $0x348] sm:$0xff]
  %v344 = vld [vmem:[%s4 + $0x350] sm:$0xff]
  %v345 = vld [vmem:[%s4 + $0x358] sm:$0xff]
  %v346 = vld [vmem:[%s4 + $0x360] sm:$0xff]
  %v347 = vld [vmem:[%s4 + $0x368] sm:$0xff]
  %v348 = vld [vmem:[%s4 + $0x370] sm:$0xff]
  %v349 = vld [vmem:[%s4 + $0x378] sm:$0xff]
  %v350 = vld [vmem:[%s4 + $0x380] sm:$0xff]
  %v351 = vld [vmem:[%s4 + $0x388] sm:$0xff]
  %v352 = vld [vmem:[%s4 + $0x390] sm:$0xff]
  %v353 = vld [vmem:[%s4 + $0x398] sm:$0xff]
  %v354 = vld [vmem:[%s4 + $0x3a0] sm:$0xff]
  %v355 = vld [vmem:[%s4 + $0x3a8] sm:$0xff]
  %v356 = vld [vmem:[%s4 + $0x3b0] sm:$0xff]
  %v357 = vld [vmem:[%s4 + $0x3b8] sm:$0xff]
  %v358 = vld [vmem:[%s4 + $0x3c0] sm:$0xff]
  %v359 = vld [vmem:[%s4 + $0x3c8] sm:$0xff]
  %v360 = vld [vmem:[%s4 + $0x3d0] sm:$0xff]
  %v361 = vld [vmem:[%s4 + $0x3d8] sm:$0xff]
  %v362 = vld [vmem:[%s4 + $0x3e0] sm:$0xff]
  %v363 = vld [vmem:[%s4 + $0x3e8] sm:$0xff]
  %v364 = vld [vmem:[%s4 + $0x3f0] sm:$0xff]
  %v365 = vld [vmem:[%s4 + $0x3f8] sm:$0xff]
  %v366 = vld [vmem:[%s4 + $0x400] sm:$0xff]
  %v367 = vld [vmem:[%s4 + $0x408] sm:$0xff]
  %v368 = vld [vmem:[%s4 + $0x410] sm:$0xff]
  %v369 = vld [vmem:[%s4 + $0x418] sm:$0xff]
  %v370 = vld [vmem:[%s4 + $0x420] sm:$0xff]
  %v371 = vld [vmem:[%s4 + $0x428] sm:$0xff]
  %v372 = vld [vmem:[%s4 + $0x430] sm:$0xff]
  %v373 = vld [vmem:[%s4 + $0x438] sm:$0xff]
  %v374 = vld [vmem:[%s4 + $0x440] sm:$0xff]
  %v375 = vld [vmem:[%s4 + $0x448] sm:$0xff]
  %v376 = vld [vmem:[%s4 + $0x450] sm:$0xff]
  %v377 = vld [vmem:[%s4 + $0x458] sm:$0xff]
  %v378 = vld [vmem:[%s4 + $0x460] sm:$0xff]
  %v379 = vld [vmem:[%s4 + $0x468] sm:$0xff]
  %v380 = vld [vmem:[%s4 + $0x470] sm:$0xff]
  %v381 = vld [vmem:[%s4 + $0x478] sm:$0xff]
  %v382 = vld [vmem:[%s4 + $0x480] sm:$0xff]
  %v383 = vld [vmem:[%s4 + $0x488] sm:$0xff]
  %v384 = vld [vmem:[%s4 + $0x490] sm:$0xff]
  %v385 = vld [vmem:[%s4 + $0x498] sm:$0xff]
  %v386 = vld [vmem:[%s4 + $0x4a0] sm:$0xff]
  %v387 = vld [vmem:[%s4 + $0x4a8] sm:$0xff]
  %v388 = vld [vmem:[%s4 + $0x4b0] sm:$0xff]
  %v389 = vld [vmem:[%s4 + $0x4b8] sm:$0xff]
  %v390 = vld [vmem:[%s4 + $0x4c0] sm:$0xff]
  %v391 = vld [vmem:[%s4 + $0x4c8] sm:$0xff]
  %v392 = vld [vmem:[%s4 + $0x4d0] sm:$0xff]
  %v393 = vld [vmem:[%s4 + $0x4d8] sm:$0xff]
  %v394 = vld [vmem:[%s4 + $0x4e0] sm:$0xff]
  %v395 = vld [vmem:[%s4 + $0x4e8] sm:$0xff]
  %v396 = vld [vmem:[%s4 + $0x4f0] sm:$0xff]
  %v397 = vld [vmem:[%s4 + $0x4f8] sm:$0xff]
  %v398 = vld [vmem:[%s4 + $0x500] sm:$0xff]
  %v399 = vld [vmem:[%s4 + $0x508] sm:$0xff]
  %v400 = vld [vmem:[%s4 + $0x510] sm:$0xff]
  %v401 = vld [vmem:[%s4 + $0x518] sm:$0xff]
  %v402 = vld [vmem:[%s4 + $0x520] sm:$0xff]
  %v403 = vld [vmem:[%s4 + $0x528] sm:$0xff]
  %v404 = vld [vmem:[%s4 + $0x530] sm:$0xff]
  %v405 = vld [vmem:[%s4 + $0x538] sm:$0xff]
  %v406 = vld [vmem:[%s4 + $0x540] sm:$0xff]
  %v407 = vld [vmem:[%s4 + $0x548] sm:$0xff]
  %v408 = vld [vmem:[%s4 + $0x550] sm:$0xff]
  %v409 = vld [vmem:[%s4 + $0x558] sm:$0xff]
  %v410 = vld [vmem:[%s4 + $0x560] sm:$0xff]
  %v411 = vld [vmem:[%s4 + $0x568] sm:$0xff]
  %v412 = vld [vmem:[%s4 + $0x570] sm:$0xff]
  %v413 = vld [vmem:[%s4 + $0x578] sm:$0xff]
  %v414 = vld [vmem:[%s4 + $0x580] sm:$0xff]
  %v415 = vld [vmem:[%s4 + $0x588] sm:$0xff]
  %v416 = vld [vmem:[%s4 + $0x590] sm:$0xff]
  %v417 = vld [vmem:[%s4 + $0x598] sm:$0xff]
  %v418 = vld [vmem:[%s4 + $0x5a0] sm:$0xff]
  %v419 = vld [vmem:[%s4 + $0x5a8] sm:$0xff]
  %v420 = vld [vmem:[%s4 + $0x5b0] sm:$0xff]
  %v421 = vld [vmem:[%s4 + $0x5b8] sm:$0xff]
  %v422 = vld [vmem:[%s4 + $0x5c0] sm:$0xff]
  %v423 = vld [vmem:[%s4 + $0x5c8] sm:$0xff]
  %v424 = vld [vmem:[%s4 + $0x5d0] sm:$0xff]
  %v425 = vld [vmem:[%s4 + $0x5d8] sm:$0xff]
  %v426 = vld [vmem:[%s4 + $0x5e0] sm:$0xff]
  %v427 = vld [vmem:[%s4 + $0x5e8] sm:$0xff]
  %v428 = vld [vmem:[%s4 + $0x5f0] sm:$0xff]
  %v429 = vld [vmem:[%s4 + $0x5f8] sm:$0xff]
  %v430 = vld [vmem:[%s4 + $0x600] sm:$0xff]
  %v431 = vld [vmem:[%s4 + $0x608] sm:$0xff]
  %v432 = vld [vmem:[%s4 + $0x610] sm:$0xff]
  %v433 = vld [vmem:[%s4 + $0x618] sm:$0xff]
  %v434 = vld [vmem:[%s4 + $0x620] sm:$0xff]
  %v435 = vld [vmem:[%s4 + $0x628] sm:$0xff]
  %v436 = vld [vmem:[%s4 + $0x630] sm:$0xff]
  %v437 = vld [vmem:[%s4 + $0x638] sm:$0xff]
  %v438 = vld [vmem:[%s4 + $0x640] sm:$0xff]
  %v439 = vld [vmem:[%s4 + $0x648] sm:$0xff]
  %v440 = vld [vmem:[%s4 + $0x650] sm:$0xff]
  %v441 = vld [vmem:[%s4 + $0x658] sm:$0xff]
  %v442 = vld [vmem:[%s4 + $0x660] sm:$0xff]
  %v443 = vld [vmem:[%s4 + $0x668] sm:$0xff]
  %v444 = vld [vmem:[%s4 + $0x670] sm:$0xff]
  %v445 = vld [vmem:[%s4 + $0x678] sm:$0xff]
  %v446 = vld [vmem:[%s4 + $0x680] sm:$0xff]
  %v447 = vld [vmem:[%s4 + $0x688] sm:$0xff]
  %v448 = vld [vmem:[%s4 + $0x690] sm:$0xff]
  %v449 = vld [vmem:[%s4 + $0x698] sm:$0xff]
  %v450 = vld [vmem:[%s4 + $0x6a0] sm:$0xff]
  %v451 = vld [vmem:[%s4 + $0x6a8] sm:$0xff]
  %v452 = vld [vmem:[%s4 + $0x6b0] sm:$0xff]
  %v453 = vld [vmem:[%s4 + $0x6b8] sm:$0xff]
  %v454 = vld [vmem:[%s4 + $0x6c0] sm:$0xff]
  %v455 = vld [vmem:[%s4 + $0x6c8] sm:$0xff]
  %v456 = vld [vmem:[%s4 + $0x6d0] sm:$0xff]
  %v457 = vld [vmem:[%s4 + $0x6d8] sm:$0xff]
  %v458 = vld [vmem:[%s4 + $0x6e0] sm:$0xff]
  %v459 = vld [vmem:[%s4 + $0x6e8] sm:$0xff]
  %v460 = vld [vmem:[%s4 + $0x6f0] sm:$0xff]
  %v461 = vld [vmem:[%s4 + $0x6f8] sm:$0xff]
  %v462 = vld [vmem:[%s4 + $0x700] sm:$0xff]
  %v463 = vld [vmem:[%s4 + $0x708] sm:$0xff]
  %v464 = vld [vmem:[%s4 + $0x710] sm:$0xff]
  %v465 = vld [vmem:[%s4 + $0x718] sm:$0xff]
  %v466 = vld [vmem:[%s4 + $0x720] sm:$0xff]
  %v467 = vld [vmem:[%s4 + $0x728] sm:$0xff]
  %v468 = vld [vmem:[%s4 + $0x730] sm:$0xff]
  %v469 = vld [vmem:[%s4 + $0x738] sm:$0xff]
  %v470 = vld [vmem:[%s4 + $0x740] sm:$0xff]
  %v471 = vld [vmem:[%s4 + $0x748] sm:$0xff]
  %v472 = vld [vmem:[%s4 + $0x750] sm:$0xff]
  %v473 = vld [vmem:[%s4 + $0x758] sm:$0xff]
  %v474 = vld [vmem:[%s4 + $0x760] sm:$0xff]
  %v475 = vld [vmem:[%s4 + $0x768] sm:$0xff]
  %v476 = vld [vmem:[%s4 + $0x770] sm:$0xff]
  %v477 = vld [vmem:[%s4 + $0x778] sm:$0xff]
  %v478 = vld [vmem:[%s4 + $0x780] sm:$0xff]
  %v479 = vld [vmem:[%s4 + $0x788] sm:$0xff]
  %v480 = vld [vmem:[%s4 + $0x790] sm:$0xff]
  %v481 = vld [vmem:[%s4 + $0x798] sm:$0xff]
  %v482 = vld [vmem:[%s4 + $0x7a0] sm:$0xff]
  %v483 = vld [vmem:[%s4 + $0x7a8] sm:$0xff]
  %v484 = vld [vmem:[%s4 + $0x7b0] sm:$0xff]
  %v485 = vld [vmem:[%s4 + $0x7b8] sm:$0xff]
  %v486 = vld [vmem:[%s4 + $0x7c0] sm:$0xff]
  %v487 = vld [vmem:[%s4 + $0x7c8] sm:$0xff]
  %v488 = vld [vmem:[%s4 + $0x7d0] sm:$0xff]
  %v489 = vld [vmem:[%s4 + $0x7d8] sm:$0xff]
  %v490 = vld [vmem:[%s4 + $0x7e0] sm:$0xff]
  %v491 = vld [vmem:[%s4 + $0x7e8] sm:$0xff]
  %v492 = vld [vmem:[%s4 + $0x7f0] sm:$0xff]
  %v493 = vld [vmem:[%s4 + $0x7f8] sm:$0xff]
  %v494 = vld [vmem:[%s4 + $0x800] sm:$0xff]
  %v495 = vld [vmem:[%s4 + $0x808] sm:$0xff]
  %v496 = vld [vmem:[%s4 + $0x810] sm:$0xff]
  %v497 = vld [vmem:[%s4 + $0x818] sm:$0xff]
  %v498 = vld [vmem:[%s4 + $0x820] sm:$0xff]
  %v499 = vld [vmem:[%s4 + $0x828] sm:$0xff]
  %v500 = vld [vmem:[%s4 + $0x830] sm:$0xff]
  %v501 = vld [vmem:[%s4 + $0x838] sm:$0xff]
  %v502 = vld [vmem:[%s4 + $0x840] sm:$0xff]
  %v503 = vld [vmem:[%s4 + $0x848] sm:$0xff]
  %v504 = vld [vmem:[%s4 + $0x850] sm:$0xff]
  %v505 = vld [vmem:[%s4 + $0x858] sm:$0xff]
  %v506 = vld [vmem:[%s4 + $0x860] sm:$0xff]
  %v507 = vld [vmem:[%s4 + $0x868] sm:$0xff]
  %v508 = vld [vmem:[%s4 + $0x870] sm:$0xff]
  %v509 = vld [vmem:[%s4 + $0x878] sm:$0xff]
  %v510 = vld [vmem:[%s4 + $0x880] sm:$0xff]
  %v511 = vld [vmem:[%s4 + $0x888] sm:$0xff]
  %v512 = vld [vmem:[%s4 + $0x890] sm:$0xff]
  %v513 = vld [vmem:[%s4 + $0x898] sm:$0xff]
  %v514 = vld [vmem:[%s4 + $0x8a0] sm:$0xff]
  %v515 = vld [vmem:[%s4 + $0x8a8] sm:$0xff]
  %v516 = vld [vmem:[%s4 + $0x8b0] sm:$0xff]
  %v517 = vld [vmem:[%s4 + $0x8b8] sm:$0xff]
  %v518 = vld [vmem:[%s4 + $0x8c0] sm:$0xff]
  %v519 = vld [vmem:[%s4 + $0x8c8] sm:$0xff]
  %v520 = vld [vmem:[%s4 + $0x8d0] sm:$0xff]
  %v521 = vld [vmem:[%s4 + $0x8d8] sm:$0xff]
  %v522 = vld [vmem:[%s4 + $0x8e0] sm:$0xff]
  %v523 = vld [vmem:[%s4 + $0x8e8] sm:$0xff]
  %v524 = vld [vmem:[%s4 + $0x8f0] sm:$0xff]
  %v525 = vld [vmem:[%s4 + $0x8f8] sm:$0xff]
  %v526 = vld [vmem:[%s4 + $0x900] sm:$0xff]
  %v527 = vld [vmem:[%s4 + $0x908] sm:$0xff]
  %v528 = vld [vmem:[%s4 + $0x910] sm:$0xff]
  %v529 = vld [vmem:[%s4 + $0x918] sm:$0xff]
  %v530 = vld [vmem:[%s4 + $0x920] sm:$0xff]
  %v531 = vld [vmem:[%s4 + $0x928] sm:$0xff]
  %v532 = vld [vmem:[%s4 + $0x930] sm:$0xff]
  %v533 = vld [vmem:[%s4 + $0x938] sm:$0xff]
  %v534 = vld [vmem:[%s4 + $0x940] sm:$0xff]
  %v535 = vld [vmem:[%s4 + $0x948] sm:$0xff]
  %v536 = vld [vmem:[%s4 + $0x950] sm:$0xff]
  %v537 = vld [vmem:[%s4 + $0x958] sm:$0xff]
  %v538 = vld [vmem:[%s4 + $0x960] sm:$0xff]
  %v539 = vld [vmem:[%s4 + $0x968] sm:$0xff]
  %v540 = vld [vmem:[%s4 + $0x970] sm:$0xff]
  %v541 = vld [vmem:[%s4 + $0x978] sm:$0xff]
  %v542 = vld [vmem:[%s4 + $0x980] sm:$0xff]
  %v543 = vld [vmem:[%s4 + $0x988] sm:$0xff]
  %v544 = vld [vmem:[%s4 + $0x990] sm:$0xff]
  %v545 = vld [vmem:[%s4 + $0x998] sm:$0xff]
  %v546 = vld [vmem:[%s4 + $0x9a0] sm:$0xff]
  %v547 = vld [vmem:[%s4 + $0x9a8] sm:$0xff]
  %v548 = vld [vmem:[%s4 + $0x9b0] sm:$0xff]
  %v549 = vld [vmem:[%s4 + $0x9b8] sm:$0xff]
  %v550 = vld [vmem:[%s4 + $0x9c0] sm:$0xff]
  %v551 = vld [vmem:[%s4 + $0x9c8] sm:$0xff]
  %v552 = vld [vmem:[%s4 + $0x9d0] sm:$0xff]
  %v553 = vld [vmem:[%s4 + $0x9d8] sm:$0xff]
  %v554 = vld [vmem:[%s4 + $0x9e0] sm:$0xff]
  %v555 = vld [vmem:[%s4 + $0x9e8] sm:$0xff]
  %v556 = vld [vmem:[%s4 + $0x9f0] sm:$0xff]
  %v557 = vld [vmem:[%s4 + $0x9f8] sm:$0xff]
  %v558 = vld [vmem:[%s4 + $0xa00] sm:$0xff]
  %v559 = vld [vmem:[%s4 + $0xa08] sm:$0xff]
  %v560 = vld [vmem:[%s4 + $0xa10] sm:$0xff]
  %v561 = vld [vmem:[%s4 + $0xa18] sm:$0xff]
  %v562 = vld [vmem:[%s4 + $0xa20] sm:$0xff]
  %v563 = vld [vmem:[%s4 + $0xa28] sm:$0xff]
  %v564 = vld [vmem:[%s4 + $0xa30] sm:$0xff]
  %v565 = vld [vmem:[%s4 + $0xa38] sm:$0xff]
  %v566 = vld [vmem:[%s4 + $0xa40] sm:$0xff]
  %v567 = vld [vmem:[%s4 + $0xa48] sm:$0xff]
  %v568 = vld [vmem:[%s4 + $0xa50] sm:$0xff]
  %v569 = vld [vmem:[%s4 + $0xa58] sm:$0xff]
  %v570 = vld [vmem:[%s4 + $0xa60] sm:$0xff]
  %v571 = vld [vmem:[%s4 + $0xa68] sm:$0xff]
  %v572 = vld [vmem:[%s4 + $0xa70] sm:$0xff]
  %v573 = vld [vmem:[%s4 + $0xa78] sm:$0xff]
  %v574 = vld [vmem:[%s4 + $0xa80] sm:$0xff]
  %v575 = vld [vmem:[%s4 + $0xa88] sm:$0xff]
  %v576 = vld [vmem:[%s4 + $0xa90] sm:$0xff]
  %v577 = vld [vmem:[%s4 + $0xa98] sm:$0xff]
  %v578 = vld [vmem:[%s4 + $0xaa0] sm:$0xff]
  %v579 = vld [vmem:[%s4 + $0xaa8] sm:$0xff]
  %v580 = vld [vmem:[%s4 + $0xab0] sm:$0xff]
  %v581 = vld [vmem:[%s4 + $0xab8] sm:$0xff]
  %v582 = vld [vmem:[%s4 + $0xac0] sm:$0xff]
  %v583 = vld [vmem:[%s4 + $0xac8] sm:$0xff]
  %v584 = vld [vmem:[%s4 + $0xad0] sm:$0xff]
  %v585 = vld [vmem:[%s4 + $0xad8] sm:$0xff]
  %v586 = vld [vmem:[%s4 + $0xae0] sm:$0xff]
  %v587 = vld [vmem:[%s4 + $0xae8] sm:$0xff]
  %v588 = vld [vmem:[%s4 + $0xaf0] sm:$0xff]
  %v589 = vld [vmem:[%s4 + $0xaf8] sm:$0xff]
  %v590 = vld [vmem:[%s4 + $0xb00] sm:$0xff]
  %v591 = vld [vmem:[%s4 + $0xb08] sm:$0xff]
  %v592 = vld [vmem:[%s4 + $0xb10] sm:$0xff]
  %v593 = vld [vmem:[%s4 + $0xb18] sm:$0xff]
  %v594 = vld [vmem:[%s4 + $0xb20] sm:$0xff]
  %v595 = vld [vmem:[%s4 + $0xb28] sm:$0xff]
  %v596 = vld [vmem:[%s4 + $0xb30] sm:$0xff]
  %v597 = vld [vmem:[%s4 + $0xb38] sm:$0xff]
  %v598 = vld [vmem:[%s4 + $0xb40] sm:$0xff]
  %v599 = vld [vmem:[%s4 + $0xb48] sm:$0xff]
  %v600 = vld [vmem:[%s4 + $0xb50] sm:$0xff]
  %v601 = vld [vmem:[%s4 + $0xb58] sm:$0xff]
  %v602 = vld [vmem:[%s4 + $0xb60] sm:$0xff]
  %v603 = vld [vmem:[%s4 + $0xb68] sm:$0xff]
  %v604 = vld [vmem:[%s4 + $0xb70] sm:$0xff]
  %v605 = vld [vmem:[%s4 + $0xb78] sm:$0xff]
  %v606 = vld [vmem:[%s4 + $0xb80] sm:$0xff]
  %v607 = vld [vmem:[%s4 + $0xb88] sm:$0xff]
  %v608 = vld [vmem:[%s4 + $0xb90] sm:$0xff]
  %v609 = vld [vmem:[%s4 + $0xb98] sm:$0xff]
  %v610 = vld [vmem:[%s4 + $0xba0] sm:$0xff]
  %v611 = vld [vmem:[%s4 + $0xba8] sm:$0xff]
  %v612 = vld [vmem:[%s4 + $0xbb0] sm:$0xff]
  %v613 = vld [vmem:[%s4 + $0xbb8] sm:$0xff]
  %v614 = vld [vmem:[%s4 + $0xbc0] sm:$0xff]
  %v615 = vld [vmem:[%s4 + $0xbc8] sm:$0xff]
  %v616 = vld [vmem:[%s4 + $0xbd0] sm:$0xff]
  %v617 = vld [vmem:[%s4 + $0xbd8] sm:$0xff]
  %v618 = vld [vmem:[%s4 + $0xbe0] sm:$0xff]
  %v619 = vld [vmem:[%s4 + $0xbe8] sm:$0xff]
  %v620 = vld [vmem:[%s4 + $0xbf0] sm:$0xff]
  %v621 = vld [vmem:[%s4 + $0xbf8] sm:$0xff]
  %v622 = vld [vmem:[%s5] sm:$0xff]
  %v624 = vlaneseq
  %v625 = vshrl.u32 %v624, 7
  %v626 = vsub.s32 0, %v625
  %v627 = vrot.slane %v622, %v626
  %v628 = vlaneseq
  %v629 = vshrl.u32 %v628, 7
  %v630 = vsub.s32 1, %v629
  %v631 = vrot.slane %v622, %v630
  %v632 = vlaneseq
  %v633 = vshrl.u32 %v632, 7
  %v634 = vsub.s32 2, %v633
  %v635 = vrot.slane %v622, %v634
  %v636 = vlaneseq
  %v637 = vshrl.u32 %v636, 7
  %v638 = vsub.s32 3, %v637
  %v639 = vrot.slane %v622, %v638
  %v640 = vlaneseq
  %v641 = vshrl.u32 %v640, 7
  %v642 = vsub.s32 4, %v641
  %v643 = vrot.slane %v622, %v642
  %v644 = vlaneseq
  %v645 = vshrl.u32 %v644, 7
  %v646 = vsub.s32 5, %v645
  %v647 = vrot.slane %v622, %v646
  %v648 = vlaneseq
  %v649 = vshrl.u32 %v648, 7
  %v650 = vsub.s32 6, %v649
  %v651 = vrot.slane %v622, %v650
  %v652 = vlaneseq
  %v653 = vshrl.u32 %v652, 7
  %v654 = vsub.s32 7, %v653
  %v655 = vrot.slane %v622, %v654
  %v1048 = vunpack.c.l.b16 %v238
  %v1049 = vunpack.c.h.b16 %v238
  %v1050 = vunpack.c.l.b16 %v239
  %v1051 = vunpack.c.h.b16 %v239
  %v1052 = vunpack.c.l.b16 %v240
  %v1053 = vunpack.c.h.b16 %v240
  %v1054 = vunpack.c.l.b16 %v241
  %v1055 = vunpack.c.h.b16 %v241
  %v1056 = vunpack.c.l.b16 %v242
  %v1057 = vunpack.c.h.b16 %v242
  %v1058 = vunpack.c.l.b16 %v243
  %v1059 = vunpack.c.h.b16 %v243
  %v1060 = vunpack.c.l.b16 %v244
  %v1061 = vunpack.c.h.b16 %v244
  %v1062 = vunpack.c.l.b16 %v245
  %v1063 = vunpack.c.h.b16 %v245
  %v1064 = vunpack.c.l.b16 %v246
  %v1065 = vunpack.c.h.b16 %v246
  %v1066 = vunpack.c.l.b16 %v247
  %v1067 = vunpack.c.h.b16 %v247
  %v1068 = vunpack.c.l.b16 %v248
  %v1069 = vunpack.c.h.b16 %v248
  %v1070 = vunpack.c.l.b16 %v249
  %v1071 = vunpack.c.h.b16 %v249
  %v1072 = vunpack.c.l.b16 %v250
  %v1073 = vunpack.c.h.b16 %v250
  %v1074 = vunpack.c.l.b16 %v251
  %v1075 = vunpack.c.h.b16 %v251
  %v1076 = vunpack.c.l.b16 %v252
  %v1077 = vunpack.c.h.b16 %v252
  %v1078 = vunpack.c.l.b16 %v253
  %v1079 = vunpack.c.h.b16 %v253
  %v1080 = vunpack.c.l.b16 %v254
  %v1081 = vunpack.c.h.b16 %v254
  %v1082 = vunpack.c.l.b16 %v255
  %v1083 = vunpack.c.h.b16 %v255
  %v1084 = vunpack.c.l.b16 %v256
  %v1085 = vunpack.c.h.b16 %v256
  %v1086 = vunpack.c.l.b16 %v257
  %v1087 = vunpack.c.h.b16 %v257
  %v1088 = vunpack.c.l.b16 %v258
  %v1089 = vunpack.c.h.b16 %v258
  %v1090 = vunpack.c.l.b16 %v259
  %v1091 = vunpack.c.h.b16 %v259
  %v1092 = vunpack.c.l.b16 %v260
  %v1093 = vunpack.c.h.b16 %v260
  %v1094 = vunpack.c.l.b16 %v261
  %v1095 = vunpack.c.h.b16 %v261
  %v1096 = vunpack.c.l.b16 %v262
  %v1097 = vunpack.c.h.b16 %v262
  %v1098 = vunpack.c.l.b16 %v263
  %v1099 = vunpack.c.h.b16 %v263
  %v1100 = vunpack.c.l.b16 %v264
  %v1101 = vunpack.c.h.b16 %v264
  %v1102 = vunpack.c.l.b16 %v265
  %v1103 = vunpack.c.h.b16 %v265
  %v1104 = vunpack.c.l.b16 %v266
  %v1105 = vunpack.c.h.b16 %v266
  %v1106 = vunpack.c.l.b16 %v267
  %v1107 = vunpack.c.h.b16 %v267
  %v1108 = vunpack.c.l.b16 %v268
  %v1109 = vunpack.c.h.b16 %v268
  %v1110 = vunpack.c.l.b16 %v269
  %v1111 = vunpack.c.h.b16 %v269
  %v1112 = vunpack.c.l.b16 %v270
  %v1113 = vunpack.c.h.b16 %v270
  %v1114 = vunpack.c.l.b16 %v271
  %v1115 = vunpack.c.h.b16 %v271
  %v1116 = vunpack.c.l.b16 %v272
  %v1117 = vunpack.c.h.b16 %v272
  %v1118 = vunpack.c.l.b16 %v273
  %v1119 = vunpack.c.h.b16 %v273
  %v1120 = vunpack.c.l.b16 %v274
  %v1121 = vunpack.c.h.b16 %v274
  %v1122 = vunpack.c.l.b16 %v275
  %v1123 = vunpack.c.h.b16 %v275
  %v1124 = vunpack.c.l.b16 %v276
  %v1125 = vunpack.c.h.b16 %v276
  %v1126 = vunpack.c.l.b16 %v277
  %v1127 = vunpack.c.h.b16 %v277
  %v1128 = vunpack.c.l.b16 %v278
  %v1129 = vunpack.c.h.b16 %v278
  %v1130 = vunpack.c.l.b16 %v279
  %v1131 = vunpack.c.h.b16 %v279
  %v1132 = vunpack.c.l.b16 %v280
  %v1133 = vunpack.c.h.b16 %v280
  %v1134 = vunpack.c.l.b16 %v281
  %v1135 = vunpack.c.h.b16 %v281
  %v1136 = vunpack.c.l.b16 %v282
  %v1137 = vunpack.c.h.b16 %v282
  %v1138 = vunpack.c.l.b16 %v283
  %v1139 = vunpack.c.h.b16 %v283
  %v1140 = vunpack.c.l.b16 %v284
  %v1141 = vunpack.c.h.b16 %v284
  %v1142 = vunpack.c.l.b16 %v285
  %v1143 = vunpack.c.h.b16 %v285
  %v1144 = vunpack.c.l.b16 %v286
  %v1145 = vunpack.c.h.b16 %v286
  %v1146 = vunpack.c.l.b16 %v287
  %v1147 = vunpack.c.h.b16 %v287
  %v1148 = vunpack.c.l.b16 %v288
  %v1149 = vunpack.c.h.b16 %v288
  %v1150 = vunpack.c.l.b16 %v289
  %v1151 = vunpack.c.h.b16 %v289
  %v1152 = vunpack.c.l.b16 %v290
  %v1153 = vunpack.c.h.b16 %v290
  %v1154 = vunpack.c.l.b16 %v291
  %v1155 = vunpack.c.h.b16 %v291
  %v1156 = vunpack.c.l.b16 %v292
  %v1157 = vunpack.c.h.b16 %v292
  %v1158 = vunpack.c.l.b16 %v293
  %v1159 = vunpack.c.h.b16 %v293
  %v1160 = vunpack.c.l.b16 %v294
  %v1161 = vunpack.c.h.b16 %v294
  %v1162 = vunpack.c.l.b16 %v295
  %v1163 = vunpack.c.h.b16 %v295
  %v1164 = vunpack.c.l.b16 %v296
  %v1165 = vunpack.c.h.b16 %v296
  %v1166 = vunpack.c.l.b16 %v297
  %v1167 = vunpack.c.h.b16 %v297
  %v1168 = vunpack.c.l.b16 %v298
  %v1169 = vunpack.c.h.b16 %v298
  %v1170 = vunpack.c.l.b16 %v299
  %v1171 = vunpack.c.h.b16 %v299
  %v1172 = vunpack.c.l.b16 %v300
  %v1173 = vunpack.c.h.b16 %v300
  %v1174 = vunpack.c.l.b16 %v301
  %v1175 = vunpack.c.h.b16 %v301
  %v1176 = vunpack.c.l.b16 %v302
  %v1177 = vunpack.c.h.b16 %v302
  %v1178 = vunpack.c.l.b16 %v303
  %v1179 = vunpack.c.h.b16 %v303
  %v1180 = vunpack.c.l.b16 %v304
  %v1181 = vunpack.c.h.b16 %v304
  %v1182 = vunpack.c.l.b16 %v305
  %v1183 = vunpack.c.h.b16 %v305
  %v1184 = vunpack.c.l.b16 %v306
  %v1185 = vunpack.c.h.b16 %v306
  %v1186 = vunpack.c.l.b16 %v307
  %v1187 = vunpack.c.h.b16 %v307
  %v1188 = vunpack.c.l.b16 %v308
  %v1189 = vunpack.c.h.b16 %v308
  %v1190 = vunpack.c.l.b16 %v309
  %v1191 = vunpack.c.h.b16 %v309
  %v1192 = vunpack.c.l.b16 %v310
  %v1193 = vunpack.c.h.b16 %v310
  %v1194 = vunpack.c.l.b16 %v311
  %v1195 = vunpack.c.h.b16 %v311
  %v1196 = vunpack.c.l.b16 %v312
  %v1197 = vunpack.c.h.b16 %v312
  %v1198 = vunpack.c.l.b16 %v313
  %v1199 = vunpack.c.h.b16 %v313
  %v1200 = vunpack.c.l.b16 %v314
  %v1201 = vunpack.c.h.b16 %v314
  %v1202 = vunpack.c.l.b16 %v315
  %v1203 = vunpack.c.h.b16 %v315
  %v1204 = vunpack.c.l.b16 %v316
  %v1205 = vunpack.c.h.b16 %v316
  %v1206 = vunpack.c.l.b16 %v317
  %v1207 = vunpack.c.h.b16 %v317
  %v1208 = vunpack.c.l.b16 %v318
  %v1209 = vunpack.c.h.b16 %v318
  %v1210 = vunpack.c.l.b16 %v319
  %v1211 = vunpack.c.h.b16 %v319
  %v1212 = vunpack.c.l.b16 %v320
  %v1213 = vunpack.c.h.b16 %v320
  %v1214 = vunpack.c.l.b16 %v321
  %v1215 = vunpack.c.h.b16 %v321
  %v1216 = vunpack.c.l.b16 %v322
  %v1217 = vunpack.c.h.b16 %v322
  %v1218 = vunpack.c.l.b16 %v323
  %v1219 = vunpack.c.h.b16 %v323
  %v1220 = vunpack.c.l.b16 %v324
  %v1221 = vunpack.c.h.b16 %v324
  %v1222 = vunpack.c.l.b16 %v325
  %v1223 = vunpack.c.h.b16 %v325
  %v1224 = vunpack.c.l.b16 %v326
  %v1225 = vunpack.c.h.b16 %v326
  %v1226 = vunpack.c.l.b16 %v327
  %v1227 = vunpack.c.h.b16 %v327
  %v1228 = vunpack.c.l.b16 %v328
  %v1229 = vunpack.c.h.b16 %v328
  %v1230 = vunpack.c.l.b16 %v329
  %v1231 = vunpack.c.h.b16 %v329
  %v1232 = vunpack.c.l.b16 %v330
  %v1233 = vunpack.c.h.b16 %v330
  %v1234 = vunpack.c.l.b16 %v331
  %v1235 = vunpack.c.h.b16 %v331
  %v1236 = vunpack.c.l.b16 %v332
  %v1237 = vunpack.c.h.b16 %v332
  %v1238 = vunpack.c.l.b16 %v333
  %v1239 = vunpack.c.h.b16 %v333
  %v1240 = vunpack.c.l.b16 %v334
  %v1241 = vunpack.c.h.b16 %v334
  %v1242 = vunpack.c.l.b16 %v335
  %v1243 = vunpack.c.h.b16 %v335
  %v1244 = vunpack.c.l.b16 %v336
  %v1245 = vunpack.c.h.b16 %v336
  %v1246 = vunpack.c.l.b16 %v337
  %v1247 = vunpack.c.h.b16 %v337
  %v1248 = vunpack.c.l.b16 %v338
  %v1249 = vunpack.c.h.b16 %v338
  %v1250 = vunpack.c.l.b16 %v339
  %v1251 = vunpack.c.h.b16 %v339
  %v1252 = vunpack.c.l.b16 %v340
  %v1253 = vunpack.c.h.b16 %v340
  %v1254 = vunpack.c.l.b16 %v341
  %v1255 = vunpack.c.h.b16 %v341
  %v1256 = vunpack.c.l.b16 %v342
  %v1257 = vunpack.c.h.b16 %v342
  %v1258 = vunpack.c.l.b16 %v343
  %v1259 = vunpack.c.h.b16 %v343
  %v1260 = vunpack.c.l.b16 %v344
  %v1261 = vunpack.c.h.b16 %v344
  %v1262 = vunpack.c.l.b16 %v345
  %v1263 = vunpack.c.h.b16 %v345
  %v1264 = vunpack.c.l.b16 %v346
  %v1265 = vunpack.c.h.b16 %v346
  %v1266 = vunpack.c.l.b16 %v347
  %v1267 = vunpack.c.h.b16 %v347
  %v1268 = vunpack.c.l.b16 %v348
  %v1269 = vunpack.c.h.b16 %v348
  %v1270 = vunpack.c.l.b16 %v349
  %v1271 = vunpack.c.h.b16 %v349
  %v1272 = vunpack.c.l.b16 %v350
  %v1273 = vunpack.c.h.b16 %v350
  %v1274 = vunpack.c.l.b16 %v351
  %v1275 = vunpack.c.h.b16 %v351
  %v1276 = vunpack.c.l.b16 %v352
  %v1277 = vunpack.c.h.b16 %v352
  %v1278 = vunpack.c.l.b16 %v353
  %v1279 = vunpack.c.h.b16 %v353
  %v1280 = vunpack.c.l.b16 %v354
  %v1281 = vunpack.c.h.b16 %v354
  %v1282 = vunpack.c.l.b16 %v355
  %v1283 = vunpack.c.h.b16 %v355
  %v1284 = vunpack.c.l.b16 %v356
  %v1285 = vunpack.c.h.b16 %v356
  %v1286 = vunpack.c.l.b16 %v357
  %v1287 = vunpack.c.h.b16 %v357
  %v1288 = vunpack.c.l.b16 %v358
  %v1289 = vunpack.c.h.b16 %v358
  %v1290 = vunpack.c.l.b16 %v359
  %v1291 = vunpack.c.h.b16 %v359
  %v1292 = vunpack.c.l.b16 %v360
  %v1293 = vunpack.c.h.b16 %v360
  %v1294 = vunpack.c.l.b16 %v361
  %v1295 = vunpack.c.h.b16 %v361
  %v1296 = vunpack.c.l.b16 %v362
  %v1297 = vunpack.c.h.b16 %v362
  %v1298 = vunpack.c.l.b16 %v363
  %v1299 = vunpack.c.h.b16 %v363
  %v1300 = vunpack.c.l.b16 %v364
  %v1301 = vunpack.c.h.b16 %v364
  %v1302 = vunpack.c.l.b16 %v365
  %v1303 = vunpack.c.h.b16 %v365
  %v1304 = vunpack.c.l.b16 %v366
  %v1305 = vunpack.c.h.b16 %v366
  %v1306 = vunpack.c.l.b16 %v367
  %v1307 = vunpack.c.h.b16 %v367
  %v1308 = vunpack.c.l.b16 %v368
  %v1309 = vunpack.c.h.b16 %v368
  %v1310 = vunpack.c.l.b16 %v369
  %v1311 = vunpack.c.h.b16 %v369
  %v1312 = vunpack.c.l.b16 %v370
  %v1313 = vunpack.c.h.b16 %v370
  %v1314 = vunpack.c.l.b16 %v371
  %v1315 = vunpack.c.h.b16 %v371
  %v1316 = vunpack.c.l.b16 %v372
  %v1317 = vunpack.c.h.b16 %v372
  %v1318 = vunpack.c.l.b16 %v373
  %v1319 = vunpack.c.h.b16 %v373
  %v1320 = vunpack.c.l.b16 %v374
  %v1321 = vunpack.c.h.b16 %v374
  %v1322 = vunpack.c.l.b16 %v375
  %v1323 = vunpack.c.h.b16 %v375
  %v1324 = vunpack.c.l.b16 %v376
  %v1325 = vunpack.c.h.b16 %v376
  %v1326 = vunpack.c.l.b16 %v377
  %v1327 = vunpack.c.h.b16 %v377
  %v1328 = vunpack.c.l.b16 %v378
  %v1329 = vunpack.c.h.b16 %v378
  %v1330 = vunpack.c.l.b16 %v379
  %v1331 = vunpack.c.h.b16 %v379
  %v1332 = vunpack.c.l.b16 %v380
  %v1333 = vunpack.c.h.b16 %v380
  %v1334 = vunpack.c.l.b16 %v381
  %v1335 = vunpack.c.h.b16 %v381
  %v1336 = vunpack.c.l.b16 %v382
  %v1337 = vunpack.c.h.b16 %v382
  %v1338 = vunpack.c.l.b16 %v383
  %v1339 = vunpack.c.h.b16 %v383
  %v1340 = vunpack.c.l.b16 %v384
  %v1341 = vunpack.c.h.b16 %v384
  %v1342 = vunpack.c.l.b16 %v385
  %v1343 = vunpack.c.h.b16 %v385
  %v1344 = vunpack.c.l.b16 %v386
  %v1345 = vunpack.c.h.b16 %v386
  %v1346 = vunpack.c.l.b16 %v387
  %v1347 = vunpack.c.h.b16 %v387
  %v1348 = vunpack.c.l.b16 %v388
  %v1349 = vunpack.c.h.b16 %v388
  %v1350 = vunpack.c.l.b16 %v389
  %v1351 = vunpack.c.h.b16 %v389
  %v1352 = vunpack.c.l.b16 %v390
  %v1353 = vunpack.c.h.b16 %v390
  %v1354 = vunpack.c.l.b16 %v391
  %v1355 = vunpack.c.h.b16 %v391
  %v1356 = vunpack.c.l.b16 %v392
  %v1357 = vunpack.c.h.b16 %v392
  %v1358 = vunpack.c.l.b16 %v393
  %v1359 = vunpack.c.h.b16 %v393
  %v1360 = vunpack.c.l.b16 %v394
  %v1361 = vunpack.c.h.b16 %v394
  %v1362 = vunpack.c.l.b16 %v395
  %v1363 = vunpack.c.h.b16 %v395
  %v1364 = vunpack.c.l.b16 %v396
  %v1365 = vunpack.c.h.b16 %v396
  %v1366 = vunpack.c.l.b16 %v397
  %v1367 = vunpack.c.h.b16 %v397
  %v1368 = vunpack.c.l.b16 %v398
  %v1369 = vunpack.c.h.b16 %v398
  %v1370 = vunpack.c.l.b16 %v399
  %v1371 = vunpack.c.h.b16 %v399
  %v1372 = vunpack.c.l.b16 %v400
  %v1373 = vunpack.c.h.b16 %v400
  %v1374 = vunpack.c.l.b16 %v401
  %v1375 = vunpack.c.h.b16 %v401
  %v1376 = vunpack.c.l.b16 %v402
  %v1377 = vunpack.c.h.b16 %v402
  %v1378 = vunpack.c.l.b16 %v403
  %v1379 = vunpack.c.h.b16 %v403
  %v1380 = vunpack.c.l.b16 %v404
  %v1381 = vunpack.c.h.b16 %v404
  %v1382 = vunpack.c.l.b16 %v405
  %v1383 = vunpack.c.h.b16 %v405
  %v1384 = vunpack.c.l.b16 %v406
  %v1385 = vunpack.c.h.b16 %v406
  %v1386 = vunpack.c.l.b16 %v407
  %v1387 = vunpack.c.h.b16 %v407
  %v1388 = vunpack.c.l.b16 %v408
  %v1389 = vunpack.c.h.b16 %v408
  %v1390 = vunpack.c.l.b16 %v409
  %v1391 = vunpack.c.h.b16 %v409
  %v1392 = vunpack.c.l.b16 %v410
  %v1393 = vunpack.c.h.b16 %v410
  %v1394 = vunpack.c.l.b16 %v411
  %v1395 = vunpack.c.h.b16 %v411
  %v1396 = vunpack.c.l.b16 %v412
  %v1397 = vunpack.c.h.b16 %v412
  %v1398 = vunpack.c.l.b16 %v413
  %v1399 = vunpack.c.h.b16 %v413
  %v1400 = vunpack.c.l.b16 %v414
  %v1401 = vunpack.c.h.b16 %v414
  %v1402 = vunpack.c.l.b16 %v415
  %v1403 = vunpack.c.h.b16 %v415
  %v1404 = vunpack.c.l.b16 %v416
  %v1405 = vunpack.c.h.b16 %v416
  %v1406 = vunpack.c.l.b16 %v417
  %v1407 = vunpack.c.h.b16 %v417
  %v1408 = vunpack.c.l.b16 %v418
  %v1409 = vunpack.c.h.b16 %v418
  %v1410 = vunpack.c.l.b16 %v419
  %v1411 = vunpack.c.h.b16 %v419
  %v1412 = vunpack.c.l.b16 %v420
  %v1413 = vunpack.c.h.b16 %v420
  %v1414 = vunpack.c.l.b16 %v421
  %v1415 = vunpack.c.h.b16 %v421
  %v1416 = vunpack.c.l.b16 %v422
  %v1417 = vunpack.c.h.b16 %v422
  %v1418 = vunpack.c.l.b16 %v423
  %v1419 = vunpack.c.h.b16 %v423
  %v1420 = vunpack.c.l.b16 %v424
  %v1421 = vunpack.c.h.b16 %v424
  %v1422 = vunpack.c.l.b16 %v425
  %v1423 = vunpack.c.h.b16 %v425
  %v1424 = vunpack.c.l.b16 %v426
  %v1425 = vunpack.c.h.b16 %v426
  %v1426 = vunpack.c.l.b16 %v427
  %v1427 = vunpack.c.h.b16 %v427
  %v1428 = vunpack.c.l.b16 %v428
  %v1429 = vunpack.c.h.b16 %v428
  %v1430 = vunpack.c.l.b16 %v429
  %v1431 = vunpack.c.h.b16 %v429
  %v1432 = vunpack.c.l.b16 %v430
  %v1433 = vunpack.c.h.b16 %v430
  %v1434 = vunpack.c.l.b16 %v431
  %v1435 = vunpack.c.h.b16 %v431
  %v1436 = vunpack.c.l.b16 %v432
  %v1437 = vunpack.c.h.b16 %v432
  %v1438 = vunpack.c.l.b16 %v433
  %v1439 = vunpack.c.h.b16 %v433
  %v1440 = vunpack.c.l.b16 %v434
  %v1441 = vunpack.c.h.b16 %v434
  %v1442 = vunpack.c.l.b16 %v435
  %v1443 = vunpack.c.h.b16 %v435
  %v1444 = vunpack.c.l.b16 %v436
  %v1445 = vunpack.c.h.b16 %v436
  %v1446 = vunpack.c.l.b16 %v437
  %v1447 = vunpack.c.h.b16 %v437
  %v1448 = vunpack.c.l.b16 %v438
  %v1449 = vunpack.c.h.b16 %v438
  %v1450 = vunpack.c.l.b16 %v439
  %v1451 = vunpack.c.h.b16 %v439
  %v1452 = vunpack.c.l.b16 %v440
  %v1453 = vunpack.c.h.b16 %v440
  %v1454 = vunpack.c.l.b16 %v441
  %v1455 = vunpack.c.h.b16 %v441
  %v1456 = vunpack.c.l.b16 %v442
  %v1457 = vunpack.c.h.b16 %v442
  %v1458 = vunpack.c.l.b16 %v443
  %v1459 = vunpack.c.h.b16 %v443
  %v1460 = vunpack.c.l.b16 %v444
  %v1461 = vunpack.c.h.b16 %v444
  %v1462 = vunpack.c.l.b16 %v445
  %v1463 = vunpack.c.h.b16 %v445
  %v1464 = vunpack.c.l.b16 %v446
  %v1465 = vunpack.c.h.b16 %v446
  %v1466 = vunpack.c.l.b16 %v447
  %v1467 = vunpack.c.h.b16 %v447
  %v1468 = vunpack.c.l.b16 %v448
  %v1469 = vunpack.c.h.b16 %v448
  %v1470 = vunpack.c.l.b16 %v449
  %v1471 = vunpack.c.h.b16 %v449
  %v1472 = vunpack.c.l.b16 %v450
  %v1473 = vunpack.c.h.b16 %v450
  %v1474 = vunpack.c.l.b16 %v451
  %v1475 = vunpack.c.h.b16 %v451
  %v1476 = vunpack.c.l.b16 %v452
  %v1477 = vunpack.c.h.b16 %v452
  %v1478 = vunpack.c.l.b16 %v453
  %v1479 = vunpack.c.h.b16 %v453
  %v1480 = vunpack.c.l.b16 %v454
  %v1481 = vunpack.c.h.b16 %v454
  %v1482 = vunpack.c.l.b16 %v455
  %v1483 = vunpack.c.h.b16 %v455
  %v1484 = vunpack.c.l.b16 %v456
  %v1485 = vunpack.c.h.b16 %v456
  %v1486 = vunpack.c.l.b16 %v457
  %v1487 = vunpack.c.h.b16 %v457
  %v1488 = vunpack.c.l.b16 %v458
  %v1489 = vunpack.c.h.b16 %v458
  %v1490 = vunpack.c.l.b16 %v459
  %v1491 = vunpack.c.h.b16 %v459
  %v1492 = vunpack.c.l.b16 %v460
  %v1493 = vunpack.c.h.b16 %v460
  %v1494 = vunpack.c.l.b16 %v461
  %v1495 = vunpack.c.h.b16 %v461
  %v1496 = vunpack.c.l.b16 %v462
  %v1497 = vunpack.c.h.b16 %v462
  %v1498 = vunpack.c.l.b16 %v463
  %v1499 = vunpack.c.h.b16 %v463
  %v1500 = vunpack.c.l.b16 %v464
  %v1501 = vunpack.c.h.b16 %v464
  %v1502 = vunpack.c.l.b16 %v465
  %v1503 = vunpack.c.h.b16 %v465
  %v1504 = vunpack.c.l.b16 %v466
  %v1505 = vunpack.c.h.b16 %v466
  %v1506 = vunpack.c.l.b16 %v467
  %v1507 = vunpack.c.h.b16 %v467
  %v1508 = vunpack.c.l.b16 %v468
  %v1509 = vunpack.c.h.b16 %v468
  %v1510 = vunpack.c.l.b16 %v469
  %v1511 = vunpack.c.h.b16 %v469
  %v1512 = vunpack.c.l.b16 %v470
  %v1513 = vunpack.c.h.b16 %v470
  %v1514 = vunpack.c.l.b16 %v471
  %v1515 = vunpack.c.h.b16 %v471
  %v1516 = vunpack.c.l.b16 %v472
  %v1517 = vunpack.c.h.b16 %v472
  %v1518 = vunpack.c.l.b16 %v473
  %v1519 = vunpack.c.h.b16 %v473
  %v1520 = vunpack.c.l.b16 %v474
  %v1521 = vunpack.c.h.b16 %v474
  %v1522 = vunpack.c.l.b16 %v475
  %v1523 = vunpack.c.h.b16 %v475
  %v1524 = vunpack.c.l.b16 %v476
  %v1525 = vunpack.c.h.b16 %v476
  %v1526 = vunpack.c.l.b16 %v477
  %v1527 = vunpack.c.h.b16 %v477
  %v1528 = vunpack.c.l.b16 %v478
  %v1529 = vunpack.c.h.b16 %v478
  %v1530 = vunpack.c.l.b16 %v479
  %v1531 = vunpack.c.h.b16 %v479
  %v1532 = vunpack.c.l.b16 %v480
  %v1533 = vunpack.c.h.b16 %v480
  %v1534 = vunpack.c.l.b16 %v481
  %v1535 = vunpack.c.h.b16 %v481
  %v1536 = vunpack.c.l.b16 %v482
  %v1537 = vunpack.c.h.b16 %v482
  %v1538 = vunpack.c.l.b16 %v483
  %v1539 = vunpack.c.h.b16 %v483
  %v1540 = vunpack.c.l.b16 %v484
  %v1541 = vunpack.c.h.b16 %v484
  %v1542 = vunpack.c.l.b16 %v485
  %v1543 = vunpack.c.h.b16 %v485
  %v1544 = vunpack.c.l.b16 %v486
  %v1545 = vunpack.c.h.b16 %v486
  %v1546 = vunpack.c.l.b16 %v487
  %v1547 = vunpack.c.h.b16 %v487
  %v1548 = vunpack.c.l.b16 %v488
  %v1549 = vunpack.c.h.b16 %v488
  %v1550 = vunpack.c.l.b16 %v489
  %v1551 = vunpack.c.h.b16 %v489
  %v1552 = vunpack.c.l.b16 %v490
  %v1553 = vunpack.c.h.b16 %v490
  %v1554 = vunpack.c.l.b16 %v491
  %v1555 = vunpack.c.h.b16 %v491
  %v1556 = vunpack.c.l.b16 %v492
  %v1557 = vunpack.c.h.b16 %v492
  %v1558 = vunpack.c.l.b16 %v493
  %v1559 = vunpack.c.h.b16 %v493
  %v1560 = vunpack.c.l.b16 %v494
  %v1561 = vunpack.c.h.b16 %v494
  %v1562 = vunpack.c.l.b16 %v495
  %v1563 = vunpack.c.h.b16 %v495
  %v1564 = vunpack.c.l.b16 %v496
  %v1565 = vunpack.c.h.b16 %v496
  %v1566 = vunpack.c.l.b16 %v497
  %v1567 = vunpack.c.h.b16 %v497
  %v1568 = vunpack.c.l.b16 %v498
  %v1569 = vunpack.c.h.b16 %v498
  %v1570 = vunpack.c.l.b16 %v499
  %v1571 = vunpack.c.h.b16 %v499
  %v1572 = vunpack.c.l.b16 %v500
  %v1573 = vunpack.c.h.b16 %v500
  %v1574 = vunpack.c.l.b16 %v501
  %v1575 = vunpack.c.h.b16 %v501
  %v1576 = vunpack.c.l.b16 %v502
  %v1577 = vunpack.c.h.b16 %v502
  %v1578 = vunpack.c.l.b16 %v503
  %v1579 = vunpack.c.h.b16 %v503
  %v1580 = vunpack.c.l.b16 %v504
  %v1581 = vunpack.c.h.b16 %v504
  %v1582 = vunpack.c.l.b16 %v505
  %v1583 = vunpack.c.h.b16 %v505
  %v1584 = vunpack.c.l.b16 %v506
  %v1585 = vunpack.c.h.b16 %v506
  %v1586 = vunpack.c.l.b16 %v507
  %v1587 = vunpack.c.h.b16 %v507
  %v1588 = vunpack.c.l.b16 %v508
  %v1589 = vunpack.c.h.b16 %v508
  %v1590 = vunpack.c.l.b16 %v509
  %v1591 = vunpack.c.h.b16 %v509
  %v1592 = vunpack.c.l.b16 %v510
  %v1593 = vunpack.c.h.b16 %v510
  %v1594 = vunpack.c.l.b16 %v511
  %v1595 = vunpack.c.h.b16 %v511
  %v1596 = vunpack.c.l.b16 %v512
  %v1597 = vunpack.c.h.b16 %v512
  %v1598 = vunpack.c.l.b16 %v513
  %v1599 = vunpack.c.h.b16 %v513
  %v1600 = vunpack.c.l.b16 %v514
  %v1601 = vunpack.c.h.b16 %v514
  %v1602 = vunpack.c.l.b16 %v515
  %v1603 = vunpack.c.h.b16 %v515
  %v1604 = vunpack.c.l.b16 %v516
  %v1605 = vunpack.c.h.b16 %v516
  %v1606 = vunpack.c.l.b16 %v517
  %v1607 = vunpack.c.h.b16 %v517
  %v1608 = vunpack.c.l.b16 %v518
  %v1609 = vunpack.c.h.b16 %v518
  %v1610 = vunpack.c.l.b16 %v519
  %v1611 = vunpack.c.h.b16 %v519
  %v1612 = vunpack.c.l.b16 %v520
  %v1613 = vunpack.c.h.b16 %v520
  %v1614 = vunpack.c.l.b16 %v521
  %v1615 = vunpack.c.h.b16 %v521
  %v1616 = vunpack.c.l.b16 %v522
  %v1617 = vunpack.c.h.b16 %v522
  %v1618 = vunpack.c.l.b16 %v523
  %v1619 = vunpack.c.h.b16 %v523
  %v1620 = vunpack.c.l.b16 %v524
  %v1621 = vunpack.c.h.b16 %v524
  %v1622 = vunpack.c.l.b16 %v525
  %v1623 = vunpack.c.h.b16 %v525
  %v1624 = vunpack.c.l.b16 %v526
  %v1625 = vunpack.c.h.b16 %v526
  %v1626 = vunpack.c.l.b16 %v527
  %v1627 = vunpack.c.h.b16 %v527
  %v1628 = vunpack.c.l.b16 %v528
  %v1629 = vunpack.c.h.b16 %v528
  %v1630 = vunpack.c.l.b16 %v529
  %v1631 = vunpack.c.h.b16 %v529
  %v1632 = vunpack.c.l.b16 %v530
  %v1633 = vunpack.c.h.b16 %v530
  %v1634 = vunpack.c.l.b16 %v531
  %v1635 = vunpack.c.h.b16 %v531
  %v1636 = vunpack.c.l.b16 %v532
  %v1637 = vunpack.c.h.b16 %v532
  %v1638 = vunpack.c.l.b16 %v533
  %v1639 = vunpack.c.h.b16 %v533
  %v1640 = vunpack.c.l.b16 %v534
  %v1641 = vunpack.c.h.b16 %v534
  %v1642 = vunpack.c.l.b16 %v535
  %v1643 = vunpack.c.h.b16 %v535
  %v1644 = vunpack.c.l.b16 %v536
  %v1645 = vunpack.c.h.b16 %v536
  %v1646 = vunpack.c.l.b16 %v537
  %v1647 = vunpack.c.h.b16 %v537
  %v1648 = vunpack.c.l.b16 %v538
  %v1649 = vunpack.c.h.b16 %v538
  %v1650 = vunpack.c.l.b16 %v539
  %v1651 = vunpack.c.h.b16 %v539
  %v1652 = vunpack.c.l.b16 %v540
  %v1653 = vunpack.c.h.b16 %v540
  %v1654 = vunpack.c.l.b16 %v541
  %v1655 = vunpack.c.h.b16 %v541
  %v1656 = vunpack.c.l.b16 %v542
  %v1657 = vunpack.c.h.b16 %v542
  %v1658 = vunpack.c.l.b16 %v543
  %v1659 = vunpack.c.h.b16 %v543
  %v1660 = vunpack.c.l.b16 %v544
  %v1661 = vunpack.c.h.b16 %v544
  %v1662 = vunpack.c.l.b16 %v545
  %v1663 = vunpack.c.h.b16 %v545
  %v1664 = vunpack.c.l.b16 %v546
  %v1665 = vunpack.c.h.b16 %v546
  %v1666 = vunpack.c.l.b16 %v547
  %v1667 = vunpack.c.h.b16 %v547
  %v1668 = vunpack.c.l.b16 %v548
  %v1669 = vunpack.c.h.b16 %v548
  %v1670 = vunpack.c.l.b16 %v549
  %v1671 = vunpack.c.h.b16 %v549
  %v1672 = vunpack.c.l.b16 %v550
  %v1673 = vunpack.c.h.b16 %v550
  %v1674 = vunpack.c.l.b16 %v551
  %v1675 = vunpack.c.h.b16 %v551
  %v1676 = vunpack.c.l.b16 %v552
  %v1677 = vunpack.c.h.b16 %v552
  %v1678 = vunpack.c.l.b16 %v553
  %v1679 = vunpack.c.h.b16 %v553
  %v1680 = vunpack.c.l.b16 %v554
  %v1681 = vunpack.c.h.b16 %v554
  %v1682 = vunpack.c.l.b16 %v555
  %v1683 = vunpack.c.h.b16 %v555
  %v1684 = vunpack.c.l.b16 %v556
  %v1685 = vunpack.c.h.b16 %v556
  %v1686 = vunpack.c.l.b16 %v557
  %v1687 = vunpack.c.h.b16 %v557
  %v1688 = vunpack.c.l.b16 %v558
  %v1689 = vunpack.c.h.b16 %v558
  %v1690 = vunpack.c.l.b16 %v559
  %v1691 = vunpack.c.h.b16 %v559
  %v1692 = vunpack.c.l.b16 %v560
  %v1693 = vunpack.c.h.b16 %v560
  %v1694 = vunpack.c.l.b16 %v561
  %v1695 = vunpack.c.h.b16 %v561
  %v1696 = vunpack.c.l.b16 %v562
  %v1697 = vunpack.c.h.b16 %v562
  %v1698 = vunpack.c.l.b16 %v563
  %v1699 = vunpack.c.h.b16 %v563
  %v1700 = vunpack.c.l.b16 %v564
  %v1701 = vunpack.c.h.b16 %v564
  %v1702 = vunpack.c.l.b16 %v565
  %v1703 = vunpack.c.h.b16 %v565
  %v1704 = vunpack.c.l.b16 %v566
  %v1705 = vunpack.c.h.b16 %v566
  %v1706 = vunpack.c.l.b16 %v567
  %v1707 = vunpack.c.h.b16 %v567
  %v1708 = vunpack.c.l.b16 %v568
  %v1709 = vunpack.c.h.b16 %v568
  %v1710 = vunpack.c.l.b16 %v569
  %v1711 = vunpack.c.h.b16 %v569
  %v1712 = vunpack.c.l.b16 %v570
  %v1713 = vunpack.c.h.b16 %v570
  %v1714 = vunpack.c.l.b16 %v571
  %v1715 = vunpack.c.h.b16 %v571
  %v1716 = vunpack.c.l.b16 %v572
  %v1717 = vunpack.c.h.b16 %v572
  %v1718 = vunpack.c.l.b16 %v573
  %v1719 = vunpack.c.h.b16 %v573
  %v1720 = vunpack.c.l.b16 %v574
  %v1721 = vunpack.c.h.b16 %v574
  %v1722 = vunpack.c.l.b16 %v575
  %v1723 = vunpack.c.h.b16 %v575
  %v1724 = vunpack.c.l.b16 %v576
  %v1725 = vunpack.c.h.b16 %v576
  %v1726 = vunpack.c.l.b16 %v577
  %v1727 = vunpack.c.h.b16 %v577
  %v1728 = vunpack.c.l.b16 %v578
  %v1729 = vunpack.c.h.b16 %v578
  %v1730 = vunpack.c.l.b16 %v579
  %v1731 = vunpack.c.h.b16 %v579
  %v1732 = vunpack.c.l.b16 %v580
  %v1733 = vunpack.c.h.b16 %v580
  %v1734 = vunpack.c.l.b16 %v581
  %v1735 = vunpack.c.h.b16 %v581
  %v1736 = vunpack.c.l.b16 %v582
  %v1737 = vunpack.c.h.b16 %v582
  %v1738 = vunpack.c.l.b16 %v583
  %v1739 = vunpack.c.h.b16 %v583
  %v1740 = vunpack.c.l.b16 %v584
  %v1741 = vunpack.c.h.b16 %v584
  %v1742 = vunpack.c.l.b16 %v585
  %v1743 = vunpack.c.h.b16 %v585
  %v1744 = vunpack.c.l.b16 %v586
  %v1745 = vunpack.c.h.b16 %v586
  %v1746 = vunpack.c.l.b16 %v587
  %v1747 = vunpack.c.h.b16 %v587
  %v1748 = vunpack.c.l.b16 %v588
  %v1749 = vunpack.c.h.b16 %v588
  %v1750 = vunpack.c.l.b16 %v589
  %v1751 = vunpack.c.h.b16 %v589
  %v1752 = vunpack.c.l.b16 %v590
  %v1753 = vunpack.c.h.b16 %v590
  %v1754 = vunpack.c.l.b16 %v591
  %v1755 = vunpack.c.h.b16 %v591
  %v1756 = vunpack.c.l.b16 %v592
  %v1757 = vunpack.c.h.b16 %v592
  %v1758 = vunpack.c.l.b16 %v593
  %v1759 = vunpack.c.h.b16 %v593
  %v1760 = vunpack.c.l.b16 %v594
  %v1761 = vunpack.c.h.b16 %v594
  %v1762 = vunpack.c.l.b16 %v595
  %v1763 = vunpack.c.h.b16 %v595
  %v1764 = vunpack.c.l.b16 %v596
  %v1765 = vunpack.c.h.b16 %v596
  %v1766 = vunpack.c.l.b16 %v597
  %v1767 = vunpack.c.h.b16 %v597
  %v1768 = vunpack.c.l.b16 %v598
  %v1769 = vunpack.c.h.b16 %v598
  %v1770 = vunpack.c.l.b16 %v599
  %v1771 = vunpack.c.h.b16 %v599
  %v1772 = vunpack.c.l.b16 %v600
  %v1773 = vunpack.c.h.b16 %v600
  %v1774 = vunpack.c.l.b16 %v601
  %v1775 = vunpack.c.h.b16 %v601
  %v1776 = vunpack.c.l.b16 %v602
  %v1777 = vunpack.c.h.b16 %v602
  %v1778 = vunpack.c.l.b16 %v603
  %v1779 = vunpack.c.h.b16 %v603
  %v1780 = vunpack.c.l.b16 %v604
  %v1781 = vunpack.c.h.b16 %v604
  %v1782 = vunpack.c.l.b16 %v605
  %v1783 = vunpack.c.h.b16 %v605
  %v1784 = vunpack.c.l.b16 %v606
  %v1785 = vunpack.c.h.b16 %v606
  %v1786 = vunpack.c.l.b16 %v607
  %v1787 = vunpack.c.h.b16 %v607
  %v1788 = vunpack.c.l.b16 %v608
  %v1789 = vunpack.c.h.b16 %v608
  %v1790 = vunpack.c.l.b16 %v609
  %v1791 = vunpack.c.h.b16 %v609
  %v1792 = vunpack.c.l.b16 %v610
  %v1793 = vunpack.c.h.b16 %v610
  %v1794 = vunpack.c.l.b16 %v611
  %v1795 = vunpack.c.h.b16 %v611
  %v1796 = vunpack.c.l.b16 %v612
  %v1797 = vunpack.c.h.b16 %v612
  %v1798 = vunpack.c.l.b16 %v613
  %v1799 = vunpack.c.h.b16 %v613
  %v1800 = vunpack.c.l.b16 %v614
  %v1801 = vunpack.c.h.b16 %v614
  %v1802 = vunpack.c.l.b16 %v615
  %v1803 = vunpack.c.h.b16 %v615
  %v1804 = vunpack.c.l.b16 %v616
  %v1805 = vunpack.c.h.b16 %v616
  %v1806 = vunpack.c.l.b16 %v617
  %v1807 = vunpack.c.h.b16 %v617
  %v1808 = vunpack.c.l.b16 %v618
  %v1809 = vunpack.c.h.b16 %v618
  %v1810 = vunpack.c.l.b16 %v619
  %v1811 = vunpack.c.h.b16 %v619
  %v1812 = vunpack.c.l.b16 %v620
  %v1813 = vunpack.c.h.b16 %v620
  %v1814 = vunpack.c.l.b16 %v621
  %v1815 = vunpack.c.h.b16 %v621
  %v1816 = vpack.c.b16 %v1056, %v1048
  %v1817 = vpack.c.b16 %v1057, %v1049
  %v1818 = vpack.c.b16 %v1058, %v1050
  %v1819 = vpack.c.b16 %v1059, %v1051
  %v1820 = vpack.c.b16 %v1060, %v1052
  %v1821 = vpack.c.b16 %v1061, %v1053
  %v1822 = vpack.c.b16 %v1062, %v1054
  %v1823 = vpack.c.b16 %v1063, %v1055
  %v1824 = vpack.c.b16 %v1072, %v1064
  %v1825 = vpack.c.b16 %v1073, %v1065
  %v1826 = vpack.c.b16 %v1074, %v1066
  %v1827 = vpack.c.b16 %v1075, %v1067
  %v1828 = vpack.c.b16 %v1076, %v1068
  %v1829 = vpack.c.b16 %v1077, %v1069
  %v1830 = vpack.c.b16 %v1078, %v1070
  %v1831 = vpack.c.b16 %v1079, %v1071
  %v1832 = vpack.c.b16 %v1088, %v1080
  %v1833 = vpack.c.b16 %v1089, %v1081
  %v1834 = vpack.c.b16 %v1090, %v1082
  %v1835 = vpack.c.b16 %v1091, %v1083
  %v1836 = vpack.c.b16 %v1092, %v1084
  %v1837 = vpack.c.b16 %v1093, %v1085
  %v1838 = vpack.c.b16 %v1094, %v1086
  %v1839 = vpack.c.b16 %v1095, %v1087
  %v1840 = vpack.c.b16 %v1104, %v1096
  %v1841 = vpack.c.b16 %v1105, %v1097
  %v1842 = vpack.c.b16 %v1106, %v1098
  %v1843 = vpack.c.b16 %v1107, %v1099
  %v1844 = vpack.c.b16 %v1108, %v1100
  %v1845 = vpack.c.b16 %v1109, %v1101
  %v1846 = vpack.c.b16 %v1110, %v1102
  %v1847 = vpack.c.b16 %v1111, %v1103
  %v1848 = vpack.c.b16 %v1120, %v1112
  %v1849 = vpack.c.b16 %v1121, %v1113
  %v1850 = vpack.c.b16 %v1122, %v1114
  %v1851 = vpack.c.b16 %v1123, %v1115
  %v1852 = vpack.c.b16 %v1124, %v1116
  %v1853 = vpack.c.b16 %v1125, %v1117
  %v1854 = vpack.c.b16 %v1126, %v1118
  %v1855 = vpack.c.b16 %v1127, %v1119
  %v1856 = vpack.c.b16 %v1136, %v1128
  %v1857 = vpack.c.b16 %v1137, %v1129
  %v1858 = vpack.c.b16 %v1138, %v1130
  %v1859 = vpack.c.b16 %v1139, %v1131
  %v1860 = vpack.c.b16 %v1140, %v1132
  %v1861 = vpack.c.b16 %v1141, %v1133
  %v1862 = vpack.c.b16 %v1142, %v1134
  %v1863 = vpack.c.b16 %v1143, %v1135
  %v1864 = vpack.c.b16 %v1152, %v1144
  %v1865 = vpack.c.b16 %v1153, %v1145
  %v1866 = vpack.c.b16 %v1154, %v1146
  %v1867 = vpack.c.b16 %v1155, %v1147
  %v1868 = vpack.c.b16 %v1156, %v1148
  %v1869 = vpack.c.b16 %v1157, %v1149
  %v1870 = vpack.c.b16 %v1158, %v1150
  %v1871 = vpack.c.b16 %v1159, %v1151
  %v1872 = vpack.c.b16 %v1168, %v1160
  %v1873 = vpack.c.b16 %v1169, %v1161
  %v1874 = vpack.c.b16 %v1170, %v1162
  %v1875 = vpack.c.b16 %v1171, %v1163
  %v1876 = vpack.c.b16 %v1172, %v1164
  %v1877 = vpack.c.b16 %v1173, %v1165
  %v1878 = vpack.c.b16 %v1174, %v1166
  %v1879 = vpack.c.b16 %v1175, %v1167
  %v1880 = vpack.c.b16 %v1184, %v1176
  %v1881 = vpack.c.b16 %v1185, %v1177
  %v1882 = vpack.c.b16 %v1186, %v1178
  %v1883 = vpack.c.b16 %v1187, %v1179
  %v1884 = vpack.c.b16 %v1188, %v1180
  %v1885 = vpack.c.b16 %v1189, %v1181
  %v1886 = vpack.c.b16 %v1190, %v1182
  %v1887 = vpack.c.b16 %v1191, %v1183
  %v1888 = vpack.c.b16 %v1200, %v1192
  %v1889 = vpack.c.b16 %v1201, %v1193
  %v1890 = vpack.c.b16 %v1202, %v1194
  %v1891 = vpack.c.b16 %v1203, %v1195
  %v1892 = vpack.c.b16 %v1204, %v1196
  %v1893 = vpack.c.b16 %v1205, %v1197
  %v1894 = vpack.c.b16 %v1206, %v1198
  %v1895 = vpack.c.b16 %v1207, %v1199
  %v1896 = vpack.c.b16 %v1216, %v1208
  %v1897 = vpack.c.b16 %v1217, %v1209
  %v1898 = vpack.c.b16 %v1218, %v1210
  %v1899 = vpack.c.b16 %v1219, %v1211
  %v1900 = vpack.c.b16 %v1220, %v1212
  %v1901 = vpack.c.b16 %v1221, %v1213
  %v1902 = vpack.c.b16 %v1222, %v1214
  %v1903 = vpack.c.b16 %v1223, %v1215
  %v1904 = vpack.c.b16 %v1232, %v1224
  %v1905 = vpack.c.b16 %v1233, %v1225
  %v1906 = vpack.c.b16 %v1234, %v1226
  %v1907 = vpack.c.b16 %v1235, %v1227
  %v1908 = vpack.c.b16 %v1236, %v1228
  %v1909 = vpack.c.b16 %v1237, %v1229
  %v1910 = vpack.c.b16 %v1238, %v1230
  %v1911 = vpack.c.b16 %v1239, %v1231
  %v1912 = vpack.c.b16 %v1248, %v1240
  %v1913 = vpack.c.b16 %v1249, %v1241
  %v1914 = vpack.c.b16 %v1250, %v1242
  %v1915 = vpack.c.b16 %v1251, %v1243
  %v1916 = vpack.c.b16 %v1252, %v1244
  %v1917 = vpack.c.b16 %v1253, %v1245
  %v1918 = vpack.c.b16 %v1254, %v1246
  %v1919 = vpack.c.b16 %v1255, %v1247
  %v1920 = vpack.c.b16 %v1264, %v1256
  %v1921 = vpack.c.b16 %v1265, %v1257
  %v1922 = vpack.c.b16 %v1266, %v1258
  %v1923 = vpack.c.b16 %v1267, %v1259
  %v1924 = vpack.c.b16 %v1268, %v1260
  %v1925 = vpack.c.b16 %v1269, %v1261
  %v1926 = vpack.c.b16 %v1270, %v1262
  %v1927 = vpack.c.b16 %v1271, %v1263
  %v1928 = vpack.c.b16 %v1280, %v1272
  %v1929 = vpack.c.b16 %v1281, %v1273
  %v1930 = vpack.c.b16 %v1282, %v1274
  %v1931 = vpack.c.b16 %v1283, %v1275
  %v1932 = vpack.c.b16 %v1284, %v1276
  %v1933 = vpack.c.b16 %v1285, %v1277
  %v1934 = vpack.c.b16 %v1286, %v1278
  %v1935 = vpack.c.b16 %v1287, %v1279
  %v1936 = vpack.c.b16 %v1296, %v1288
  %v1937 = vpack.c.b16 %v1297, %v1289
  %v1938 = vpack.c.b16 %v1298, %v1290
  %v1939 = vpack.c.b16 %v1299, %v1291
  %v1940 = vpack.c.b16 %v1300, %v1292
  %v1941 = vpack.c.b16 %v1301, %v1293
  %v1942 = vpack.c.b16 %v1302, %v1294
  %v1943 = vpack.c.b16 %v1303, %v1295
  %v1944 = vpack.c.b16 %v1312, %v1304
  %v1945 = vpack.c.b16 %v1313, %v1305
  %v1946 = vpack.c.b16 %v1314, %v1306
  %v1947 = vpack.c.b16 %v1315, %v1307
  %v1948 = vpack.c.b16 %v1316, %v1308
  %v1949 = vpack.c.b16 %v1317, %v1309
  %v1950 = vpack.c.b16 %v1318, %v1310
  %v1951 = vpack.c.b16 %v1319, %v1311
  %v1952 = vpack.c.b16 %v1328, %v1320
  %v1953 = vpack.c.b16 %v1329, %v1321
  %v1954 = vpack.c.b16 %v1330, %v1322
  %v1955 = vpack.c.b16 %v1331, %v1323
  %v1956 = vpack.c.b16 %v1332, %v1324
  %v1957 = vpack.c.b16 %v1333, %v1325
  %v1958 = vpack.c.b16 %v1334, %v1326
  %v1959 = vpack.c.b16 %v1335, %v1327
  %v1960 = vpack.c.b16 %v1344, %v1336
  %v1961 = vpack.c.b16 %v1345, %v1337
  %v1962 = vpack.c.b16 %v1346, %v1338
  %v1963 = vpack.c.b16 %v1347, %v1339
  %v1964 = vpack.c.b16 %v1348, %v1340
  %v1965 = vpack.c.b16 %v1349, %v1341
  %v1966 = vpack.c.b16 %v1350, %v1342
  %v1967 = vpack.c.b16 %v1351, %v1343
  %v1968 = vpack.c.b16 %v1360, %v1352
  %v1969 = vpack.c.b16 %v1361, %v1353
  %v1970 = vpack.c.b16 %v1362, %v1354
  %v1971 = vpack.c.b16 %v1363, %v1355
  %v1972 = vpack.c.b16 %v1364, %v1356
  %v1973 = vpack.c.b16 %v1365, %v1357
  %v1974 = vpack.c.b16 %v1366, %v1358
  %v1975 = vpack.c.b16 %v1367, %v1359
  %v1976 = vpack.c.b16 %v1376, %v1368
  %v1977 = vpack.c.b16 %v1377, %v1369
  %v1978 = vpack.c.b16 %v1378, %v1370
  %v1979 = vpack.c.b16 %v1379, %v1371
  %v1980 = vpack.c.b16 %v1380, %v1372
  %v1981 = vpack.c.b16 %v1381, %v1373
  %v1982 = vpack.c.b16 %v1382, %v1374
  %v1983 = vpack.c.b16 %v1383, %v1375
  %v1984 = vpack.c.b16 %v1392, %v1384
  %v1985 = vpack.c.b16 %v1393, %v1385
  %v1986 = vpack.c.b16 %v1394, %v1386
  %v1987 = vpack.c.b16 %v1395, %v1387
  %v1988 = vpack.c.b16 %v1396, %v1388
  %v1989 = vpack.c.b16 %v1397, %v1389
  %v1990 = vpack.c.b16 %v1398, %v1390
  %v1991 = vpack.c.b16 %v1399, %v1391
  %v1992 = vpack.c.b16 %v1408, %v1400
  %v1993 = vpack.c.b16 %v1409, %v1401
  %v1994 = vpack.c.b16 %v1410, %v1402
  %v1995 = vpack.c.b16 %v1411, %v1403
  %v1996 = vpack.c.b16 %v1412, %v1404
  %v1997 = vpack.c.b16 %v1413, %v1405
  %v1998 = vpack.c.b16 %v1414, %v1406
  %v1999 = vpack.c.b16 %v1415, %v1407
  %v2000 = vpack.c.b16 %v1424, %v1416
  %v2001 = vpack.c.b16 %v1425, %v1417
  %v2002 = vpack.c.b16 %v1426, %v1418
  %v2003 = vpack.c.b16 %v1427, %v1419
  %v2004 = vpack.c.b16 %v1428, %v1420
  %v2005 = vpack.c.b16 %v1429, %v1421
  %v2006 = vpack.c.b16 %v1430, %v1422
  %v2007 = vpack.c.b16 %v1431, %v1423
  %v2008 = vpack.c.b16 %v1440, %v1432
  %v2009 = vpack.c.b16 %v1441, %v1433
  %v2010 = vpack.c.b16 %v1442, %v1434
  %v2011 = vpack.c.b16 %v1443, %v1435
  %v2012 = vpack.c.b16 %v1444, %v1436
  %v2013 = vpack.c.b16 %v1445, %v1437
  %v2014 = vpack.c.b16 %v1446, %v1438
  %v2015 = vpack.c.b16 %v1447, %v1439
  %v2016 = vpack.c.b16 %v1456, %v1448
  %v2017 = vpack.c.b16 %v1457, %v1449
  %v2018 = vpack.c.b16 %v1458, %v1450
  %v2019 = vpack.c.b16 %v1459, %v1451
  %v2020 = vpack.c.b16 %v1460, %v1452
  %v2021 = vpack.c.b16 %v1461, %v1453
  %v2022 = vpack.c.b16 %v1462, %v1454
  %v2023 = vpack.c.b16 %v1463, %v1455
  %v2024 = vpack.c.b16 %v1472, %v1464
  %v2025 = vpack.c.b16 %v1473, %v1465
  %v2026 = vpack.c.b16 %v1474, %v1466
  %v2027 = vpack.c.b16 %v1475, %v1467
  %v2028 = vpack.c.b16 %v1476, %v1468
  %v2029 = vpack.c.b16 %v1477, %v1469
  %v2030 = vpack.c.b16 %v1478, %v1470
  %v2031 = vpack.c.b16 %v1479, %v1471
  %v2032 = vpack.c.b16 %v1488, %v1480
  %v2033 = vpack.c.b16 %v1489, %v1481
  %v2034 = vpack.c.b16 %v1490, %v1482
  %v2035 = vpack.c.b16 %v1491, %v1483
  %v2036 = vpack.c.b16 %v1492, %v1484
  %v2037 = vpack.c.b16 %v1493, %v1485
  %v2038 = vpack.c.b16 %v1494, %v1486
  %v2039 = vpack.c.b16 %v1495, %v1487
  %v2040 = vpack.c.b16 %v1504, %v1496
  %v2041 = vpack.c.b16 %v1505, %v1497
  %v2042 = vpack.c.b16 %v1506, %v1498
  %v2043 = vpack.c.b16 %v1507, %v1499
  %v2044 = vpack.c.b16 %v1508, %v1500
  %v2045 = vpack.c.b16 %v1509, %v1501
  %v2046 = vpack.c.b16 %v1510, %v1502
  %v2047 = vpack.c.b16 %v1511, %v1503
  %v2048 = vpack.c.b16 %v1520, %v1512
  %v2049 = vpack.c.b16 %v1521, %v1513
  %v2050 = vpack.c.b16 %v1522, %v1514
  %v2051 = vpack.c.b16 %v1523, %v1515
  %v2052 = vpack.c.b16 %v1524, %v1516
  %v2053 = vpack.c.b16 %v1525, %v1517
  %v2054 = vpack.c.b16 %v1526, %v1518
  %v2055 = vpack.c.b16 %v1527, %v1519
  %v2056 = vpack.c.b16 %v1536, %v1528
  %v2057 = vpack.c.b16 %v1537, %v1529
  %v2058 = vpack.c.b16 %v1538, %v1530
  %v2059 = vpack.c.b16 %v1539, %v1531
  %v2060 = vpack.c.b16 %v1540, %v1532
  %v2061 = vpack.c.b16 %v1541, %v1533
  %v2062 = vpack.c.b16 %v1542, %v1534
  %v2063 = vpack.c.b16 %v1543, %v1535
  %v2064 = vpack.c.b16 %v1552, %v1544
  %v2065 = vpack.c.b16 %v1553, %v1545
  %v2066 = vpack.c.b16 %v1554, %v1546
  %v2067 = vpack.c.b16 %v1555, %v1547
  %v2068 = vpack.c.b16 %v1556, %v1548
  %v2069 = vpack.c.b16 %v1557, %v1549
  %v2070 = vpack.c.b16 %v1558, %v1550
  %v2071 = vpack.c.b16 %v1559, %v1551
  %v2072 = vpack.c.b16 %v1568, %v1560
  %v2073 = vpack.c.b16 %v1569, %v1561
  %v2074 = vpack.c.b16 %v1570, %v1562
  %v2075 = vpack.c.b16 %v1571, %v1563
  %v2076 = vpack.c.b16 %v1572, %v1564
  %v2077 = vpack.c.b16 %v1573, %v1565
  %v2078 = vpack.c.b16 %v1574, %v1566
  %v2079 = vpack.c.b16 %v1575, %v1567
  %v2080 = vpack.c.b16 %v1584, %v1576
  %v2081 = vpack.c.b16 %v1585, %v1577
  %v2082 = vpack.c.b16 %v1586, %v1578
  %v2083 = vpack.c.b16 %v1587, %v1579
  %v2084 = vpack.c.b16 %v1588, %v1580
  %v2085 = vpack.c.b16 %v1589, %v1581
  %v2086 = vpack.c.b16 %v1590, %v1582
  %v2087 = vpack.c.b16 %v1591, %v1583
  %v2088 = vpack.c.b16 %v1600, %v1592
  %v2089 = vpack.c.b16 %v1601, %v1593
  %v2090 = vpack.c.b16 %v1602, %v1594
  %v2091 = vpack.c.b16 %v1603, %v1595
  %v2092 = vpack.c.b16 %v1604, %v1596
  %v2093 = vpack.c.b16 %v1605, %v1597
  %v2094 = vpack.c.b16 %v1606, %v1598
  %v2095 = vpack.c.b16 %v1607, %v1599
  %v2096 = vpack.c.b16 %v1616, %v1608
  %v2097 = vpack.c.b16 %v1617, %v1609
  %v2098 = vpack.c.b16 %v1618, %v1610
  %v2099 = vpack.c.b16 %v1619, %v1611
  %v2100 = vpack.c.b16 %v1620, %v1612
  %v2101 = vpack.c.b16 %v1621, %v1613
  %v2102 = vpack.c.b16 %v1622, %v1614
  %v2103 = vpack.c.b16 %v1623, %v1615
  %v2104 = vpack.c.b16 %v1632, %v1624
  %v2105 = vpack.c.b16 %v1633, %v1625
  %v2106 = vpack.c.b16 %v1634, %v1626
  %v2107 = vpack.c.b16 %v1635, %v1627
  %v2108 = vpack.c.b16 %v1636, %v1628
  %v2109 = vpack.c.b16 %v1637, %v1629
  %v2110 = vpack.c.b16 %v1638, %v1630
  %v2111 = vpack.c.b16 %v1639, %v1631
  %v2112 = vpack.c.b16 %v1648, %v1640
  %v2113 = vpack.c.b16 %v1649, %v1641
  %v2114 = vpack.c.b16 %v1650, %v1642
  %v2115 = vpack.c.b16 %v1651, %v1643
  %v2116 = vpack.c.b16 %v1652, %v1644
  %v2117 = vpack.c.b16 %v1653, %v1645
  %v2118 = vpack.c.b16 %v1654, %v1646
  %v2119 = vpack.c.b16 %v1655, %v1647
  %v2120 = vpack.c.b16 %v1664, %v1656
  %v2121 = vpack.c.b16 %v1665, %v1657
  %v2122 = vpack.c.b16 %v1666, %v1658
  %v2123 = vpack.c.b16 %v1667, %v1659
  %v2124 = vpack.c.b16 %v1668, %v1660
  %v2125 = vpack.c.b16 %v1669, %v1661
  %v2126 = vpack.c.b16 %v1670, %v1662
  %v2127 = vpack.c.b16 %v1671, %v1663
  %v2128 = vpack.c.b16 %v1680, %v1672
  %v2129 = vpack.c.b16 %v1681, %v1673
  %v2130 = vpack.c.b16 %v1682, %v1674
  %v2131 = vpack.c.b16 %v1683, %v1675
  %v2132 = vpack.c.b16 %v1684, %v1676
  %v2133 = vpack.c.b16 %v1685, %v1677
  %v2134 = vpack.c.b16 %v1686, %v1678
  %v2135 = vpack.c.b16 %v1687, %v1679
  %v2136 = vpack.c.b16 %v1696, %v1688
  %v2137 = vpack.c.b16 %v1697, %v1689
  %v2138 = vpack.c.b16 %v1698, %v1690
  %v2139 = vpack.c.b16 %v1699, %v1691
  %v2140 = vpack.c.b16 %v1700, %v1692
  %v2141 = vpack.c.b16 %v1701, %v1693
  %v2142 = vpack.c.b16 %v1702, %v1694
  %v2143 = vpack.c.b16 %v1703, %v1695
  %v2144 = vpack.c.b16 %v1712, %v1704
  %v2145 = vpack.c.b16 %v1713, %v1705
  %v2146 = vpack.c.b16 %v1714, %v1706
  %v2147 = vpack.c.b16 %v1715, %v1707
  %v2148 = vpack.c.b16 %v1716, %v1708
  %v2149 = vpack.c.b16 %v1717, %v1709
  %v2150 = vpack.c.b16 %v1718, %v1710
  %v2151 = vpack.c.b16 %v1719, %v1711
  %v2152 = vpack.c.b16 %v1728, %v1720
  %v2153 = vpack.c.b16 %v1729, %v1721
  %v2154 = vpack.c.b16 %v1730, %v1722
  %v2155 = vpack.c.b16 %v1731, %v1723
  %v2156 = vpack.c.b16 %v1732, %v1724
  %v2157 = vpack.c.b16 %v1733, %v1725
  %v2158 = vpack.c.b16 %v1734, %v1726
  %v2159 = vpack.c.b16 %v1735, %v1727
  %v2160 = vpack.c.b16 %v1744, %v1736
  %v2161 = vpack.c.b16 %v1745, %v1737
  %v2162 = vpack.c.b16 %v1746, %v1738
  %v2163 = vpack.c.b16 %v1747, %v1739
  %v2164 = vpack.c.b16 %v1748, %v1740
  %v2165 = vpack.c.b16 %v1749, %v1741
  %v2166 = vpack.c.b16 %v1750, %v1742
  %v2167 = vpack.c.b16 %v1751, %v1743
  %v2168 = vpack.c.b16 %v1760, %v1752
  %v2169 = vpack.c.b16 %v1761, %v1753
  %v2170 = vpack.c.b16 %v1762, %v1754
  %v2171 = vpack.c.b16 %v1763, %v1755
  %v2172 = vpack.c.b16 %v1764, %v1756
  %v2173 = vpack.c.b16 %v1765, %v1757
  %v2174 = vpack.c.b16 %v1766, %v1758
  %v2175 = vpack.c.b16 %v1767, %v1759
  %v2176 = vpack.c.b16 %v1776, %v1768
  %v2177 = vpack.c.b16 %v1777, %v1769
  %v2178 = vpack.c.b16 %v1778, %v1770
  %v2179 = vpack.c.b16 %v1779, %v1771
  %v2180 = vpack.c.b16 %v1780, %v1772
  %v2181 = vpack.c.b16 %v1781, %v1773
  %v2182 = vpack.c.b16 %v1782, %v1774
  %v2183 = vpack.c.b16 %v1783, %v1775
  %v2184 = vpack.c.b16 %v1792, %v1784
  %v2185 = vpack.c.b16 %v1793, %v1785
  %v2186 = vpack.c.b16 %v1794, %v1786
  %v2187 = vpack.c.b16 %v1795, %v1787
  %v2188 = vpack.c.b16 %v1796, %v1788
  %v2189 = vpack.c.b16 %v1797, %v1789
  %v2190 = vpack.c.b16 %v1798, %v1790
  %v2191 = vpack.c.b16 %v1799, %v1791
  %v2192 = vpack.c.b16 %v1808, %v1800
  %v2193 = vpack.c.b16 %v1809, %v1801
  %v2194 = vpack.c.b16 %v1810, %v1802
  %v2195 = vpack.c.b16 %v1811, %v1803
  %v2196 = vpack.c.b16 %v1812, %v1804
  %v2197 = vpack.c.b16 %v1813, %v1805
  %v2198 = vpack.c.b16 %v1814, %v1806
  %v2199 = vpack.c.b16 %v1815, %v1807
  %2584 = vmatprep.subr.bf16.mxu0 %v1873
  %2585 = vmatpush1.bf16.msra.mxu0 %v1872
  %2586 = vmatprep.subr.bf16.mxu0 %v1865
  %2587 = vmatpush1.bf16.msra.mxu0 %v1864
  %2588 = vmatprep.subr.bf16.mxu0 %v1857
  %2589 = vmatpush1.bf16.msra.mxu0 %v1856
  %2590 = vmatprep.subr.bf16.mxu0 %v1849
  %2591 = vmatpush1.bf16.msra.mxu0 %v1848
  %2592 = vmatprep.subr.bf16.mxu0 %v1841
  %2593 = vmatpush1.bf16.msra.mxu0 %v1840
  %2594 = vmatprep.subr.bf16.mxu0 %v1833
  %2595 = vmatpush1.bf16.msra.mxu0 %v1832
  %2596 = vmatprep.subr.bf16.mxu0 %v1825
  %2597 = vmatpush1.bf16.msra.mxu0 %v1824
  %2598 = vmatprep.subr.bf16.mxu0 %v1817
  %2599 = vmatpush1.bf16.msra.mxu0 %v1816
  %2600 = vmatprep.subr.bf16.mxu0 %v1937
  %2601 = vmatpush2.bf16.msra.mxu0 %v1936
  %2602 = vmatprep.subr.bf16.mxu0 %v1929
  %2603 = vmatpush2.bf16.msra.mxu0 %v1928
  %2604 = vmatprep.subr.bf16.mxu0 %v1921
  %2605 = vmatpush2.bf16.msra.mxu0 %v1920
  %2606 = vmatprep.subr.bf16.mxu0 %v1913
  %2607 = vmatpush2.bf16.msra.mxu0 %v1912
  %2608 = vmatprep.subr.bf16.mxu0 %v1905
  %2609 = vmatpush2.bf16.msra.mxu0 %v1904
  %2610 = vmatprep.subr.bf16.mxu0 %v1897
  %2611 = vmatpush2.bf16.msra.mxu0 %v1896
  %2612 = vmatprep.subr.bf16.mxu0 %v1889
  %2613 = vmatpush2.bf16.msra.mxu0 %v1888
  %2614 = vmatprep.subr.bf16.mxu0 %v1881
  %2615 = vmatpush2.bf16.msra.mxu0 %v1880
  %2616 = vmatprep.mubr.bf16.mxu0 %v233
  %2617 = vmatmul.mubr.bf16.gmra.mxu0 %v232
  %v2618 = vpop.f32.mrf.mxu0
  %v2619 = vadd.f32 %v627, %v2618
  %v2620 = vpop.f32.mrf.mxu0
  %v2621 = vadd.f32 %v631, %v2620
  %v2622 = vpop.f32.mrf.mxu0
  %v2623 = vadd.f32 %v627, %v2622
  %v2624 = vpop.f32.mrf.mxu0
  %v2625 = vadd.f32 %v631, %v2624
  %2626 = vdwg.mxu0
  %2627 = vmatprep.subr.bf16.mxu0 %v2001
  %2628 = vmatpush1.bf16.msra.mxu0 %v2000
  %2629 = vmatprep.subr.bf16.mxu0 %v1993
  %2630 = vmatpush1.bf16.msra.mxu0 %v1992
  %2631 = vmatprep.subr.bf16.mxu0 %v1985
  %2632 = vmatpush1.bf16.msra.mxu0 %v1984
  %2633 = vmatprep.subr.bf16.mxu0 %v1977
  %2634 = vmatpush1.bf16.msra.mxu0 %v1976
  %2635 = vmatprep.subr.bf16.mxu0 %v1969
  %2636 = vmatpush1.bf16.msra.mxu0 %v1968
  %2637 = vmatprep.subr.bf16.mxu0 %v1961
  %2638 = vmatpush1.bf16.msra.mxu0 %v1960
  %2639 = vmatprep.subr.bf16.mxu0 %v1953
  %2640 = vmatpush1.bf16.msra.mxu0 %v1952
  %2641 = vmatprep.subr.bf16.mxu0 %v1945
  %2642 = vmatpush1.bf16.msra.mxu0 %v1944
  %2643 = vmatprep.subr.bf16.mxu0 %v2065
  %2644 = vmatpush2.bf16.msra.mxu0 %v2064
  %2645 = vmatprep.subr.bf16.mxu0 %v2057
  %2646 = vmatpush2.bf16.msra.mxu0 %v2056
  %2647 = vmatprep.subr.bf16.mxu0 %v2049
  %2648 = vmatpush2.bf16.msra.mxu0 %v2048
  %2649 = vmatprep.subr.bf16.mxu0 %v2041
  %2650 = vmatpush2.bf16.msra.mxu0 %v2040
  %2651 = vmatprep.subr.bf16.mxu0 %v2033
  %2652 = vmatpush2.bf16.msra.mxu0 %v2032
  %2653 = vmatprep.subr.bf16.mxu0 %v2025
  %2654 = vmatpush2.bf16.msra.mxu0 %v2024
  %2655 = vmatprep.subr.bf16.mxu0 %v2017
  %2656 = vmatpush2.bf16.msra.mxu0 %v2016
  %2657 = vmatprep.subr.bf16.mxu0 %v2009
  %2658 = vmatpush2.bf16.msra.mxu0 %v2008
  %2659 = vmatprep.mubr.bf16.mxu0 %v235
  %2660 = vmatmul.mubr.bf16.gmra.mxu0 %v234
  %v2661 = vpop.f32.mrf.mxu0
  %v2662 = vadd.f32 %v2619, %v2661
  %v2663 = vpop.f32.mrf.mxu0
  %v2664 = vadd.f32 %v2621, %v2663
  %v2665 = vpop.f32.mrf.mxu0
  %v2666 = vadd.f32 %v2623, %v2665
  %v2667 = vpop.f32.mrf.mxu0
  %v2668 = vadd.f32 %v2625, %v2667
  %2669 = vdwg.mxu0
  %2670 = vmatprep.subr.bf16.mxu0 %v2129
  %2671 = vmatpush1.bf16.msra.mxu0 %v2128
  %2672 = vmatprep.subr.bf16.mxu0 %v2121
  %2673 = vmatpush1.bf16.msra.mxu0 %v2120
  %2674 = vmatprep.subr.bf16.mxu0 %v2113
  %2675 = vmatpush1.bf16.msra.mxu0 %v2112
  %2676 = vmatprep.subr.bf16.mxu0 %v2105
  %2677 = vmatpush1.bf16.msra.mxu0 %v2104
  %2678 = vmatprep.subr.bf16.mxu0 %v2097
  %2679 = vmatpush1.bf16.msra.mxu0 %v2096
  %2680 = vmatprep.subr.bf16.mxu0 %v2089
  %2681 = vmatpush1.bf16.msra.mxu0 %v2088
  %2682 = vmatprep.subr.bf16.mxu0 %v2081
  %2683 = vmatpush1.bf16.msra.mxu0 %v2080
  %2684 = vmatprep.subr.bf16.mxu0 %v2073
  %2685 = vmatpush1.bf16.msra.mxu0 %v2072
  %2686 = vmatprep.subr.bf16.mxu0 %v2193
  %2687 = vmatpush2.bf16.msra.mxu0 %v2192
  %2688 = vmatprep.subr.bf16.mxu0 %v2185
  %2689 = vmatpush2.bf16.msra.mxu0 %v2184
  %2690 = vmatprep.subr.bf16.mxu0 %v2177
  %2691 = vmatpush2.bf16.msra.mxu0 %v2176
  %2692 = vmatprep.subr.bf16.mxu0 %v2169
  %2693 = vmatpush2.bf16.msra.mxu0 %v2168
  %2694 = vmatprep.subr.bf16.mxu0 %v2161
  %2695 = vmatpush2.bf16.msra.mxu0 %v2160
  %2696 = vmatprep.subr.bf16.mxu0 %v2153
  %2697 = vmatpush2.bf16.msra.mxu0 %v2152
  %2698 = vmatprep.subr.bf16.mxu0 %v2145
  %2699 = vmatpush2.bf16.msra.mxu0 %v2144
  %2700 = vmatprep.subr.bf16.mxu0 %v2137
  %2701 = vmatpush2.bf16.msra.mxu0 %v2136
  %2702 = vmatprep.mubr.bf16.mxu0 %v237
  %2703 = vmatmul.mubr.bf16.gmra.mxu0 %v236
  %v2704 = vpop.f32.mrf.mxu0
  %v2705 = vadd.f32 %v2662, %v2704
  %v2706 = vpop.f32.mrf.mxu0
  %v2707 = vadd.f32 %v2664, %v2706
  %v2708 = vpop.f32.mrf.mxu0
  %v2709 = vadd.f32 %v2666, %v2708
  %v2710 = vpop.f32.mrf.mxu0
  %v2711 = vadd.f32 %v2668, %v2710
  %2712 = vdwg.mxu0
  %2713 = vmatprep.subr.bf16.mxu0 %v1875
  %2714 = vmatpush1.bf16.msra.mxu0 %v1874
  %2715 = vmatprep.subr.bf16.mxu0 %v1867
  %2716 = vmatpush1.bf16.msra.mxu0 %v1866
  %2717 = vmatprep.subr.bf16.mxu0 %v1859
  %2718 = vmatpush1.bf16.msra.mxu0 %v1858
  %2719 = vmatprep.subr.bf16.mxu0 %v1851
  %2720 = vmatpush1.bf16.msra.mxu0 %v1850
  %2721 = vmatprep.subr.bf16.mxu0 %v1843
  %2722 = vmatpush1.bf16.msra.mxu0 %v1842
  %2723 = vmatprep.subr.bf16.mxu0 %v1835
  %2724 = vmatpush1.bf16.msra.mxu0 %v1834
  %2725 = vmatprep.subr.bf16.mxu0 %v1827
  %2726 = vmatpush1.bf16.msra.mxu0 %v1826
  %2727 = vmatprep.subr.bf16.mxu0 %v1819
  %2728 = vmatpush1.bf16.msra.mxu0 %v1818
  %2729 = vmatprep.subr.bf16.mxu0 %v1939
  %2730 = vmatpush2.bf16.msra.mxu0 %v1938
  %2731 = vmatprep.subr.bf16.mxu0 %v1931
  %2732 = vmatpush2.bf16.msra.mxu0 %v1930
  %2733 = vmatprep.subr.bf16.mxu0 %v1923
  %2734 = vmatpush2.bf16.msra.mxu0 %v1922
  %2735 = vmatprep.subr.bf16.mxu0 %v1915
  %2736 = vmatpush2.bf16.msra.mxu0 %v1914
  %2737 = vmatprep.subr.bf16.mxu0 %v1907
  %2738 = vmatpush2.bf16.msra.mxu0 %v1906
  %2739 = vmatprep.subr.bf16.mxu0 %v1899
  %2740 = vmatpush2.bf16.msra.mxu0 %v1898
  %2741 = vmatprep.subr.bf16.mxu0 %v1891
  %2742 = vmatpush2.bf16.msra.mxu0 %v1890
  %2743 = vmatprep.subr.bf16.mxu0 %v1883
  %2744 = vmatpush2.bf16.msra.mxu0 %v1882
  %2745 = vmatprep.mubr.bf16.mxu0 %v233
  %2746 = vmatmul.mubr.bf16.gmra.mxu0 %v232
  %v2747 = vpop.f32.mrf.mxu0
  %v2748 = vadd.f32 %v635, %v2747
  %v2749 = vpop.f32.mrf.mxu0
  %v2750 = vadd.f32 %v639, %v2749
  %v2751 = vpop.f32.mrf.mxu0
  %v2752 = vadd.f32 %v635, %v2751
  %v2753 = vpop.f32.mrf.mxu0
  %v2754 = vadd.f32 %v639, %v2753
  %2755 = vdwg.mxu0
  %2756 = vmatprep.subr.bf16.mxu0 %v2003
  %2757 = vmatpush1.bf16.msra.mxu0 %v2002
  %2758 = vmatprep.subr.bf16.mxu0 %v1995
  %2759 = vmatpush1.bf16.msra.mxu0 %v1994
  %2760 = vmatprep.subr.bf16.mxu0 %v1987
  %2761 = vmatpush1.bf16.msra.mxu0 %v1986
  %2762 = vmatprep.subr.bf16.mxu0 %v1979
  %2763 = vmatpush1.bf16.msra.mxu0 %v1978
  %2764 = vmatprep.subr.bf16.mxu0 %v1971
  %2765 = vmatpush1.bf16.msra.mxu0 %v1970
  %2766 = vmatprep.subr.bf16.mxu0 %v1963
  %2767 = vmatpush1.bf16.msra.mxu0 %v1962
  %2768 = vmatprep.subr.bf16.mxu0 %v1955
  %2769 = vmatpush1.bf16.msra.mxu0 %v1954
  %2770 = vmatprep.subr.bf16.mxu0 %v1947
  %2771 = vmatpush1.bf16.msra.mxu0 %v1946
  %2772 = vmatprep.subr.bf16.mxu0 %v2067
  %2773 = vmatpush2.bf16.msra.mxu0 %v2066
  %2774 = vmatprep.subr.bf16.mxu0 %v2059
  %2775 = vmatpush2.bf16.msra.mxu0 %v2058
  %2776 = vmatprep.subr.bf16.mxu0 %v2051
  %2777 = vmatpush2.bf16.msra.mxu0 %v2050
  %2778 = vmatprep.subr.bf16.mxu0 %v2043
  %2779 = vmatpush2.bf16.msra.mxu0 %v2042
  %2780 = vmatprep.subr.bf16.mxu0 %v2035
  %2781 = vmatpush2.bf16.msra.mxu0 %v2034
  %2782 = vmatprep.subr.bf16.mxu0 %v2027
  %2783 = vmatpush2.bf16.msra.mxu0 %v2026
  %2784 = vmatprep.subr.bf16.mxu0 %v2019
  %2785 = vmatpush2.bf16.msra.mxu0 %v2018
  %2786 = vmatprep.subr.bf16.mxu0 %v2011
  %2787 = vmatpush2.bf16.msra.mxu0 %v2010
  %2788 = vmatprep.mubr.bf16.mxu0 %v235
  %2789 = vmatmul.mubr.bf16.gmra.mxu0 %v234
  %v2790 = vpop.f32.mrf.mxu0
  %v2791 = vadd.f32 %v2748, %v2790
  %v2792 = vpop.f32.mrf.mxu0
  %v2793 = vadd.f32 %v2750, %v2792
  %v2794 = vpop.f32.mrf.mxu0
  %v2795 = vadd.f32 %v2752, %v2794
  %v2796 = vpop.f32.mrf.mxu0
  %v2797 = vadd.f32 %v2754, %v2796
  %2798 = vdwg.mxu0
  %2799 = vmatprep.subr.bf16.mxu0 %v2131
  %2800 = vmatpush1.bf16.msra.mxu0 %v2130
  %2801 = vmatprep.subr.bf16.mxu0 %v2123
  %2802 = vmatpush1.bf16.msra.mxu0 %v2122
  %2803 = vmatprep.subr.bf16.mxu0 %v2115
  %2804 = vmatpush1.bf16.msra.mxu0 %v2114
  %2805 = vmatprep.subr.bf16.mxu0 %v2107
  %2806 = vmatpush1.bf16.msra.mxu0 %v2106
  %2807 = vmatprep.subr.bf16.mxu0 %v2099
  %2808 = vmatpush1.bf16.msra.mxu0 %v2098
  %2809 = vmatprep.subr.bf16.mxu0 %v2091
  %2810 = vmatpush1.bf16.msra.mxu0 %v2090
  %2811 = vmatprep.subr.bf16.mxu0 %v2083
  %2812 = vmatpush1.bf16.msra.mxu0 %v2082
  %2813 = vmatprep.subr.bf16.mxu0 %v2075
  %2814 = vmatpush1.bf16.msra.mxu0 %v2074
  %2815 = vmatprep.subr.bf16.mxu0 %v2195
  %2816 = vmatpush2.bf16.msra.mxu0 %v2194
  %2817 = vmatprep.subr.bf16.mxu0 %v2187
  %2818 = vmatpush2.bf16.msra.mxu0 %v2186
  %2819 = vmatprep.subr.bf16.mxu0 %v2179
  %2820 = vmatpush2.bf16.msra.mxu0 %v2178
  %2821 = vmatprep.subr.bf16.mxu0 %v2171
  %2822 = vmatpush2.bf16.msra.mxu0 %v2170
  %2823 = vmatprep.subr.bf16.mxu0 %v2163
  %2824 = vmatpush2.bf16.msra.mxu0 %v2162
  %2825 = vmatprep.subr.bf16.mxu0 %v2155
  %2826 = vmatpush2.bf16.msra.mxu0 %v2154
  %2827 = vmatprep.subr.bf16.mxu0 %v2147
  %2828 = vmatpush2.bf16.msra.mxu0 %v2146
  %2829 = vmatprep.subr.bf16.mxu0 %v2139
  %2830 = vmatpush2.bf16.msra.mxu0 %v2138
  %2831 = vmatprep.mubr.bf16.mxu0 %v237
  %2832 = vmatmul.mubr.bf16.gmra.mxu0 %v236
  %v2833 = vpop.f32.mrf.mxu0
  %v2834 = vadd.f32 %v2791, %v2833
  %v2835 = vpop.f32.mrf.mxu0
  %v2836 = vadd.f32 %v2793, %v2835
  %v2837 = vpop.f32.mrf.mxu0
  %v2838 = vadd.f32 %v2795, %v2837
  %v2839 = vpop.f32.mrf.mxu0
  %v2840 = vadd.f32 %v2797, %v2839
  %2841 = vdwg.mxu0
  %2842 = vmatprep.subr.bf16.mxu0 %v1877
  %2843 = vmatpush1.bf16.msra.mxu0 %v1876
  %2844 = vmatprep.subr.bf16.mxu0 %v1869
  %2845 = vmatpush1.bf16.msra.mxu0 %v1868
  %2846 = vmatprep.subr.bf16.mxu0 %v1861
  %2847 = vmatpush1.bf16.msra.mxu0 %v1860
  %2848 = vmatprep.subr.bf16.mxu0 %v1853
  %2849 = vmatpush1.bf16.msra.mxu0 %v1852
  %2850 = vmatprep.subr.bf16.mxu0 %v1845
  %2851 = vmatpush1.bf16.msra.mxu0 %v1844
  %2852 = vmatprep.subr.bf16.mxu0 %v1837
  %2853 = vmatpush1.bf16.msra.mxu0 %v1836
  %2854 = vmatprep.subr.bf16.mxu0 %v1829
  %2855 = vmatpush1.bf16.msra.mxu0 %v1828
  %2856 = vmatprep.subr.bf16.mxu0 %v1821
  %2857 = vmatpush1.bf16.msra.mxu0 %v1820
  %2858 = vmatprep.subr.bf16.mxu0 %v1941
  %2859 = vmatpush2.bf16.msra.mxu0 %v1940
  %2860 = vmatprep.subr.bf16.mxu0 %v1933
  %2861 = vmatpush2.bf16.msra.mxu0 %v1932
  %2862 = vmatprep.subr.bf16.mxu0 %v1925
  %2863 = vmatpush2.bf16.msra.mxu0 %v1924
  %2864 = vmatprep.subr.bf16.mxu0 %v1917
  %2865 = vmatpush2.bf16.msra.mxu0 %v1916
  %2866 = vmatprep.subr.bf16.mxu0 %v1909
  %2867 = vmatpush2.bf16.msra.mxu0 %v1908
  %2868 = vmatprep.subr.bf16.mxu0 %v1901
  %2869 = vmatpush2.bf16.msra.mxu0 %v1900
  %2870 = vmatprep.subr.bf16.mxu0 %v1893
  %2871 = vmatpush2.bf16.msra.mxu0 %v1892
  %2872 = vmatprep.subr.bf16.mxu0 %v1885
  %2873 = vmatpush2.bf16.msra.mxu0 %v1884
  %2874 = vmatprep.mubr.bf16.mxu0 %v233
  %2875 = vmatmul.mubr.bf16.gmra.mxu0 %v232
  %v2876 = vpop.f32.mrf.mxu0
  %v2877 = vadd.f32 %v643, %v2876
  %v2878 = vpop.f32.mrf.mxu0
  %v2879 = vadd.f32 %v647, %v2878
  %v2880 = vpop.f32.mrf.mxu0
  %v2881 = vadd.f32 %v643, %v2880
  %v2882 = vpop.f32.mrf.mxu0
  %v2883 = vadd.f32 %v647, %v2882
  %2884 = vdwg.mxu0
  %2885 = vmatprep.subr.bf16.mxu0 %v2005
  %2886 = vmatpush1.bf16.msra.mxu0 %v2004
  %2887 = vmatprep.subr.bf16.mxu0 %v1997
  %2888 = vmatpush1.bf16.msra.mxu0 %v1996
  %2889 = vmatprep.subr.bf16.mxu0 %v1989
  %2890 = vmatpush1.bf16.msra.mxu0 %v1988
  %2891 = vmatprep.subr.bf16.mxu0 %v1981
  %2892 = vmatpush1.bf16.msra.mxu0 %v1980
  %2893 = vmatprep.subr.bf16.mxu0 %v1973
  %2894 = vmatpush1.bf16.msra.mxu0 %v1972
  %2895 = vmatprep.subr.bf16.mxu0 %v1965
  %2896 = vmatpush1.bf16.msra.mxu0 %v1964
  %2897 = vmatprep.subr.bf16.mxu0 %v1957
  %2898 = vmatpush1.bf16.msra.mxu0 %v1956
  %2899 = vmatprep.subr.bf16.mxu0 %v1949
  %2900 = vmatpush1.bf16.msra.mxu0 %v1948
  %2901 = vmatprep.subr.bf16.mxu0 %v2069
  %2902 = vmatpush2.bf16.msra.mxu0 %v2068
  %2903 = vmatprep.subr.bf16.mxu0 %v2061
  %2904 = vmatpush2.bf16.msra.mxu0 %v2060
  %2905 = vmatprep.subr.bf16.mxu0 %v2053
  %2906 = vmatpush2.bf16.msra.mxu0 %v2052
  %2907 = vmatprep.subr.bf16.mxu0 %v2045
  %2908 = vmatpush2.bf16.msra.mxu0 %v2044
  %2909 = vmatprep.subr.bf16.mxu0 %v2037
  %2910 = vmatpush2.bf16.msra.mxu0 %v2036
  %2911 = vmatprep.subr.bf16.mxu0 %v2029
  %2912 = vmatpush2.bf16.msra.mxu0 %v2028
  %2913 = vmatprep.subr.bf16.mxu0 %v2021
  %2914 = vmatpush2.bf16.msra.mxu0 %v2020
  %2915 = vmatprep.subr.bf16.mxu0 %v2013
  %2916 = vmatpush2.bf16.msra.mxu0 %v2012
  %2917 = vmatprep.mubr.bf16.mxu0 %v235
  %2918 = vmatmul.mubr.bf16.gmra.mxu0 %v234
  %v2919 = vpop.f32.mrf.mxu0
  %v2920 = vadd.f32 %v2877, %v2919
  %v2921 = vpop.f32.mrf.mxu0
  %v2922 = vadd.f32 %v2879, %v2921
  %v2923 = vpop.f32.mrf.mxu0
  %v2924 = vadd.f32 %v2881, %v2923
  %v2925 = vpop.f32.mrf.mxu0
  %v2926 = vadd.f32 %v2883, %v2925
  %2927 = vdwg.mxu0
  %2928 = vmatprep.subr.bf16.mxu0 %v2133
  %2929 = vmatpush1.bf16.msra.mxu0 %v2132
  %2930 = vmatprep.subr.bf16.mxu0 %v2125
  %2931 = vmatpush1.bf16.msra.mxu0 %v2124
  %2932 = vmatprep.subr.bf16.mxu0 %v2117
  %2933 = vmatpush1.bf16.msra.mxu0 %v2116
  %2934 = vmatprep.subr.bf16.mxu0 %v2109
  %2935 = vmatpush1.bf16.msra.mxu0 %v2108
  %2936 = vmatprep.subr.bf16.mxu0 %v2101
  %2937 = vmatpush1.bf16.msra.mxu0 %v2100
  %2938 = vmatprep.subr.bf16.mxu0 %v2093
  %2939 = vmatpush1.bf16.msra.mxu0 %v2092
  %2940 = vmatprep.subr.bf16.mxu0 %v2085
  %2941 = vmatpush1.bf16.msra.mxu0 %v2084
  %2942 = vmatprep.subr.bf16.mxu0 %v2077
  %2943 = vmatpush1.bf16.msra.mxu0 %v2076
  %2944 = vmatprep.subr.bf16.mxu0 %v2197
  %2945 = vmatpush2.bf16.msra.mxu0 %v2196
  %2946 = vmatprep.subr.bf16.mxu0 %v2189
  %2947 = vmatpush2.bf16.msra.mxu0 %v2188
  %2948 = vmatprep.subr.bf16.mxu0 %v2181
  %2949 = vmatpush2.bf16.msra.mxu0 %v2180
  %2950 = vmatprep.subr.bf16.mxu0 %v2173
  %2951 = vmatpush2.bf16.msra.mxu0 %v2172
  %2952 = vmatprep.subr.bf16.mxu0 %v2165
  %2953 = vmatpush2.bf16.msra.mxu0 %v2164
  %2954 = vmatprep.subr.bf16.mxu0 %v2157
  %2955 = vmatpush2.bf16.msra.mxu0 %v2156
  %2956 = vmatprep.subr.bf16.mxu0 %v2149
  %2957 = vmatpush2.bf16.msra.mxu0 %v2148
  %2958 = vmatprep.subr.bf16.mxu0 %v2141
  %2959 = vmatpush2.bf16.msra.mxu0 %v2140
  %2960 = vmatprep.mubr.bf16.mxu0 %v237
  %2961 = vmatmul.mubr.bf16.gmra.mxu0 %v236
  %v2962 = vpop.f32.mrf.mxu0
  %v2963 = vadd.f32 %v2920, %v2962
  %v2964 = vpop.f32.mrf.mxu0
  %v2965 = vadd.f32 %v2922, %v2964
  %v2966 = vpop.f32.mrf.mxu0
  %v2967 = vadd.f32 %v2924, %v2966
  %v2968 = vpop.f32.mrf.mxu0
  %v2969 = vadd.f32 %v2926, %v2968
  %2970 = vdwg.mxu0
  %2971 = vmatprep.subr.bf16.mxu0 %v1879
  %2972 = vmatpush1.bf16.msra.mxu0 %v1878
  %2973 = vmatprep.subr.bf16.mxu0 %v1871
  %2974 = vmatpush1.bf16.msra.mxu0 %v1870
  %2975 = vmatprep.subr.bf16.mxu0 %v1863
  %2976 = vmatpush1.bf16.msra.mxu0 %v1862
  %2977 = vmatprep.subr.bf16.mxu0 %v1855
  %2978 = vmatpush1.bf16.msra.mxu0 %v1854
  %2979 = vmatprep.subr.bf16.mxu0 %v1847
  %2980 = vmatpush1.bf16.msra.mxu0 %v1846
  %2981 = vmatprep.subr.bf16.mxu0 %v1839
  %2982 = vmatpush1.bf16.msra.mxu0 %v1838
  %2983 = vmatprep.subr.bf16.mxu0 %v1831
  %2984 = vmatpush1.bf16.msra.mxu0 %v1830
  %2985 = vmatprep.subr.bf16.mxu0 %v1823
  %2986 = vmatpush1.bf16.msra.mxu0 %v1822
  %2987 = vmatprep.subr.bf16.mxu0 %v1943
  %2988 = vmatpush2.bf16.msra.mxu0 %v1942
  %2989 = vmatprep.subr.bf16.mxu0 %v1935
  %2990 = vmatpush2.bf16.msra.mxu0 %v1934
  %2991 = vmatprep.subr.bf16.mxu0 %v1927
  %2992 = vmatpush2.bf16.msra.mxu0 %v1926
  %2993 = vmatprep.subr.bf16.mxu0 %v1919
  %2994 = vmatpush2.bf16.msra.mxu0 %v1918
  %2995 = vmatprep.subr.bf16.mxu0 %v1911
  %2996 = vmatpush2.bf16.msra.mxu0 %v1910
  %2997 = vmatprep.subr.bf16.mxu0 %v1903
  %2998 = vmatpush2.bf16.msra.mxu0 %v1902
  %2999 = vmatprep.subr.bf16.mxu0 %v1895
  %3000 = vmatpush2.bf16.msra.mxu0 %v1894
  %3001 = vmatprep.subr.bf16.mxu0 %v1887
  %3002 = vmatpush2.bf16.msra.mxu0 %v1886
  %3003 = vmatprep.mubr.bf16.mxu0 %v233
  %3004 = vmatmul.mubr.bf16.gmra.mxu0 %v232
  %v3005 = vpop.f32.mrf.mxu0
  %v3006 = vadd.f32 %v651, %v3005
  %v3007 = vpop.f32.mrf.mxu0
  %v3008 = vadd.f32 %v655, %v3007
  %v3009 = vpop.f32.mrf.mxu0
  %v3010 = vadd.f32 %v651, %v3009
  %v3011 = vpop.f32.mrf.mxu0
  %v3012 = vadd.f32 %v655, %v3011
  %3013 = vdwg.mxu0
  %3014 = vmatprep.subr.bf16.mxu0 %v2007
  %3015 = vmatpush1.bf16.msra.mxu0 %v2006
  %3016 = vmatprep.subr.bf16.mxu0 %v1999
  %3017 = vmatpush1.bf16.msra.mxu0 %v1998
  %3018 = vmatprep.subr.bf16.mxu0 %v1991
  %3019 = vmatpush1.bf16.msra.mxu0 %v1990
  %3020 = vmatprep.subr.bf16.mxu0 %v1983
  %3021 = vmatpush1.bf16.msra.mxu0 %v1982
  %3022 = vmatprep.subr.bf16.mxu0 %v1975
  %3023 = vmatpush1.bf16.msra.mxu0 %v1974
  %3024 = vmatprep.subr.bf16.mxu0 %v1967
  %3025 = vmatpush1.bf16.msra.mxu0 %v1966
  %3026 = vmatprep.subr.bf16.mxu0 %v1959
  %3027 = vmatpush1.bf16.msra.mxu0 %v1958
  %3028 = vmatprep.subr.bf16.mxu0 %v1951
  %3029 = vmatpush1.bf16.msra.mxu0 %v1950
  %3030 = vmatprep.subr.bf16.mxu0 %v2071
  %3031 = vmatpush2.bf16.msra.mxu0 %v2070
  %3032 = vmatprep.subr.bf16.mxu0 %v2063
  %3033 = vmatpush2.bf16.msra.mxu0 %v2062
  %3034 = vmatprep.subr.bf16.mxu0 %v2055
  %3035 = vmatpush2.bf16.msra.mxu0 %v2054
  %3036 = vmatprep.subr.bf16.mxu0 %v2047
  %3037 = vmatpush2.bf16.msra.mxu0 %v2046
  %3038 = vmatprep.subr.bf16.mxu0 %v2039
  %3039 = vmatpush2.bf16.msra.mxu0 %v2038
  %3040 = vmatprep.subr.bf16.mxu0 %v2031
  %3041 = vmatpush2.bf16.msra.mxu0 %v2030
  %3042 = vmatprep.subr.bf16.mxu0 %v2023
  %3043 = vmatpush2.bf16.msra.mxu0 %v2022
  %3044 = vmatprep.subr.bf16.mxu0 %v2015
  %3045 = vmatpush2.bf16.msra.mxu0 %v2014
  %3046 = vmatprep.mubr.bf16.mxu0 %v235
  %3047 = vmatmul.mubr.bf16.gmra.mxu0 %v234
  %v3048 = vpop.f32.mrf.mxu0
  %v3049 = vadd.f32 %v3006, %v3048
  %v3050 = vpop.f32.mrf.mxu0
  %v3051 = vadd.f32 %v3008, %v3050
  %v3052 = vpop.f32.mrf.mxu0
  %v3053 = vadd.f32 %v3010, %v3052
  %v3054 = vpop.f32.mrf.mxu0
  %v3055 = vadd.f32 %v3012, %v3054
  %3056 = vdwg.mxu0
  %3057 = vmatprep.subr.bf16.mxu0 %v2135
  %3058 = vmatpush1.bf16.msra.mxu0 %v2134
  %3059 = vmatprep.subr.bf16.mxu0 %v2127
  %3060 = vmatpush1.bf16.msra.mxu0 %v2126
  %3061 = vmatprep.subr.bf16.mxu0 %v2119
  %3062 = vmatpush1.bf16.msra.mxu0 %v2118
  %3063 = vmatprep.subr.bf16.mxu0 %v2111
  %3064 = vmatpush1.bf16.msra.mxu0 %v2110
  %3065 = vmatprep.subr.bf16.mxu0 %v2103
  %3066 = vmatpush1.bf16.msra.mxu0 %v2102
  %3067 = vmatprep.subr.bf16.mxu0 %v2095
  %3068 = vmatpush1.bf16.msra.mxu0 %v2094
  %3069 = vmatprep.subr.bf16.mxu0 %v2087
  %3070 = vmatpush1.bf16.msra.mxu0 %v2086
  %3071 = vmatprep.subr.bf16.mxu0 %v2079
  %3072 = vmatpush1.bf16.msra.mxu0 %v2078
  %3073 = vmatprep.subr.bf16.mxu0 %v2199
  %3074 = vmatpush2.bf16.msra.mxu0 %v2198
  %3075 = vmatprep.subr.bf16.mxu0 %v2191
  %3076 = vmatpush2.bf16.msra.mxu0 %v2190
  %3077 = vmatprep.subr.bf16.mxu0 %v2183
  %3078 = vmatpush2.bf16.msra.mxu0 %v2182
  %3079 = vmatprep.subr.bf16.mxu0 %v2175
  %3080 = vmatpush2.bf16.msra.mxu0 %v2174
  %3081 = vmatprep.subr.bf16.mxu0 %v2167
  %3082 = vmatpush2.bf16.msra.mxu0 %v2166
  %3083 = vmatprep.subr.bf16.mxu0 %v2159
  %3084 = vmatpush2.bf16.msra.mxu0 %v2158
  %3085 = vmatprep.subr.bf16.mxu0 %v2151
  %3086 = vmatpush2.bf16.msra.mxu0 %v2150
  %3087 = vmatprep.subr.bf16.mxu0 %v2143
  %3088 = vmatpush2.bf16.msra.mxu0 %v2142
  %3089 = vmatprep.mubr.bf16.mxu0 %v237
  %3090 = vmatmul.mubr.bf16.gmra.mxu0 %v236
  %v3091 = vpop.f32.mrf.mxu0
  %v3092 = vadd.f32 %v3049, %v3091
  %v3093 = vpop.f32.mrf.mxu0
  %v3094 = vadd.f32 %v3051, %v3093
  %v3095 = vpop.f32.mrf.mxu0
  %v3096 = vadd.f32 %v3053, %v3095
  %v3097 = vpop.f32.mrf.mxu0
  %v3098 = vadd.f32 %v3055, %v3097
  %3099 = vdwg.mxu0
  %v3100 = vmax.f32 %v2705, 0.0
  %v3101 = vmax.f32 %v2707, 0.0
  %v3102 = vmax.f32 %v2834, 0.0
  %v3103 = vmax.f32 %v2836, 0.0
  %v3104 = vmax.f32 %v2963, 0.0
  %v3105 = vmax.f32 %v2965, 0.0
  %v3106 = vmax.f32 %v3092, 0.0
  %v3107 = vmax.f32 %v3094, 0.0
  %v3108 = vmax.f32 %v2709, 0.0
  %v3109 = vmax.f32 %v2711, 0.0
  %v3110 = vmax.f32 %v2838, 0.0
  %v3111 = vmax.f32 %v2840, 0.0
  %v3112 = vmax.f32 %v2967, 0.0
  %v3113 = vmax.f32 %v2969, 0.0
  %v3114 = vmax.f32 %v3096, 0.0
  %v3115 = vmax.f32 %v3098, 0.0
  %v3116 = vpack.c.bf16 %v3108, %v3100
  %v3117 = vpack.c.bf16 %v3109, %v3101
  %v3118 = vpack.c.bf16 %v3110, %v3102
  %v3119 = vpack.c.bf16 %v3111, %v3103
  %v3120 = vpack.c.bf16 %v3112, %v3104
  %v3121 = vpack.c.bf16 %v3113, %v3105
  %v3122 = vpack.c.bf16 %v3114, %v3106
  %v3123 = vpack.c.bf16 %v3115, %v3107
  %v3124 = vld [vmem:[%s6] sm:$0xff]
  %v3125 = vld [vmem:[%s6 + $0x8] sm:$0xff]
  %v3126 = vld [vmem:[%s6 + $0x10] sm:$0xff]
  %v3127 = vld [vmem:[%s6 + $0x18] sm:$0xff]
  %v3128 = vld [vmem:[%s6 + $0x20] sm:$0xff]
  %v3129 = vld [vmem:[%s6 + $0x28] sm:$0xff]
  %v3130 = vld [vmem:[%s6 + $0x30] sm:$0xff]
  %v3131 = vld [vmem:[%s6 + $0x38] sm:$0xff]
  %v3132 = vld [vmem:[%s6 + $0x40] sm:$0xff]
  %v3133 = vld [vmem:[%s6 + $0x48] sm:$0xff]
  %v3134 = vld [vmem:[%s6 + $0x50] sm:$0xff]
  %v3135 = vld [vmem:[%s6 + $0x58] sm:$0xff]
  %v3136 = vld [vmem:[%s6 + $0x60] sm:$0xff]
  %v3137 = vld [vmem:[%s6 + $0x68] sm:$0xff]
  %v3138 = vld [vmem:[%s6 + $0x70] sm:$0xff]
  %v3139 = vld [vmem:[%s6 + $0x78] sm:$0xff]
  %v3140 = vld [vmem:[%s6 + $0x80] sm:$0xff]
  %v3141 = vld [vmem:[%s6 + $0x88] sm:$0xff]
  %v3142 = vld [vmem:[%s6 + $0x90] sm:$0xff]
  %v3143 = vld [vmem:[%s6 + $0x98] sm:$0xff]
  %v3144 = vld [vmem:[%s6 + $0xa0] sm:$0xff]
  %v3145 = vld [vmem:[%s6 + $0xa8] sm:$0xff]
  %v3146 = vld [vmem:[%s6 + $0xb0] sm:$0xff]
  %v3147 = vld [vmem:[%s6 + $0xb8] sm:$0xff]
  %v3148 = vld [vmem:[%s6 + $0xc0] sm:$0xff]
  %v3149 = vld [vmem:[%s6 + $0xc8] sm:$0xff]
  %v3150 = vld [vmem:[%s6 + $0xd0] sm:$0xff]
  %v3151 = vld [vmem:[%s6 + $0xd8] sm:$0xff]
  %v3152 = vld [vmem:[%s6 + $0xe0] sm:$0xff]
  %v3153 = vld [vmem:[%s6 + $0xe8] sm:$0xff]
  %v3154 = vld [vmem:[%s6 + $0xf0] sm:$0xff]
  %v3155 = vld [vmem:[%s6 + $0xf8] sm:$0xff]
  %v3156 = vld [vmem:[%s6 + $0x100] sm:$0xff]
  %v3157 = vld [vmem:[%s6 + $0x108] sm:$0xff]
  %v3158 = vld [vmem:[%s6 + $0x110] sm:$0xff]
  %v3159 = vld [vmem:[%s6 + $0x118] sm:$0xff]
  %v3160 = vld [vmem:[%s6 + $0x120] sm:$0xff]
  %v3161 = vld [vmem:[%s6 + $0x128] sm:$0xff]
  %v3162 = vld [vmem:[%s6 + $0x130] sm:$0xff]
  %v3163 = vld [vmem:[%s6 + $0x138] sm:$0xff]
  %v3164 = vld [vmem:[%s6 + $0x140] sm:$0xff]
  %v3165 = vld [vmem:[%s6 + $0x148] sm:$0xff]
  %v3166 = vld [vmem:[%s6 + $0x150] sm:$0xff]
  %v3167 = vld [vmem:[%s6 + $0x158] sm:$0xff]
  %v3168 = vld [vmem:[%s6 + $0x160] sm:$0xff]
  %v3169 = vld [vmem:[%s6 + $0x168] sm:$0xff]
  %v3170 = vld [vmem:[%s6 + $0x170] sm:$0xff]
  %v3171 = vld [vmem:[%s6 + $0x178] sm:$0xff]
  %v3172 = vld [vmem:[%s6 + $0x180] sm:$0xff]
  %v3173 = vld [vmem:[%s6 + $0x188] sm:$0xff]
  %v3174 = vld [vmem:[%s6 + $0x190] sm:$0xff]
  %v3175 = vld [vmem:[%s6 + $0x198] sm:$0xff]
  %v3176 = vld [vmem:[%s6 + $0x1a0] sm:$0xff]
  %v3177 = vld [vmem:[%s6 + $0x1a8] sm:$0xff]
  %v3178 = vld [vmem:[%s6 + $0x1b0] sm:$0xff]
  %v3179 = vld [vmem:[%s6 + $0x1b8] sm:$0xff]
  %v3180 = vld [vmem:[%s6 + $0x1c0] sm:$0xff]
  %v3181 = vld [vmem:[%s6 + $0x1c8] sm:$0xff]
  %v3182 = vld [vmem:[%s6 + $0x1d0] sm:$0xff]
  %v3183 = vld [vmem:[%s6 + $0x1d8] sm:$0xff]
  %v3184 = vld [vmem:[%s6 + $0x1e0] sm:$0xff]
  %v3185 = vld [vmem:[%s6 + $0x1e8] sm:$0xff]
  %v3186 = vld [vmem:[%s6 + $0x1f0] sm:$0xff]
  %v3187 = vld [vmem:[%s6 + $0x1f8] sm:$0xff]
  %v3188 = vld [vmem:[%s6 + $0x200] sm:$0xff]
  %v3189 = vld [vmem:[%s6 + $0x208] sm:$0xff]
  %v3190 = vld [vmem:[%s6 + $0x210] sm:$0xff]
  %v3191 = vld [vmem:[%s6 + $0x218] sm:$0xff]
  %v3192 = vld [vmem:[%s6 + $0x220] sm:$0xff]
  %v3193 = vld [vmem:[%s6 + $0x228] sm:$0xff]
  %v3194 = vld [vmem:[%s6 + $0x230] sm:$0xff]
  %v3195 = vld [vmem:[%s6 + $0x238] sm:$0xff]
  %v3196 = vld [vmem:[%s6 + $0x240] sm:$0xff]
  %v3197 = vld [vmem:[%s6 + $0x248] sm:$0xff]
  %v3198 = vld [vmem:[%s6 + $0x250] sm:$0xff]
  %v3199 = vld [vmem:[%s6 + $0x258] sm:$0xff]
  %v3200 = vld [vmem:[%s6 + $0x260] sm:$0xff]
  %v3201 = vld [vmem:[%s6 + $0x268] sm:$0xff]
  %v3202 = vld [vmem:[%s6 + $0x270] sm:$0xff]
  %v3203 = vld [vmem:[%s6 + $0x278] sm:$0xff]
  %v3204 = vld [vmem:[%s6 + $0x280] sm:$0xff]
  %v3205 = vld [vmem:[%s6 + $0x288] sm:$0xff]
  %v3206 = vld [vmem:[%s6 + $0x290] sm:$0xff]
  %v3207 = vld [vmem:[%s6 + $0x298] sm:$0xff]
  %v3208 = vld [vmem:[%s6 + $0x2a0] sm:$0xff]
  %v3209 = vld [vmem:[%s6 + $0x2a8] sm:$0xff]
  %v3210 = vld [vmem:[%s6 + $0x2b0] sm:$0xff]
  %v3211 = vld [vmem:[%s6 + $0x2b8] sm:$0xff]
  %v3212 = vld [vmem:[%s6 + $0x2c0] sm:$0xff]
  %v3213 = vld [vmem:[%s6 + $0x2c8] sm:$0xff]
  %v3214 = vld [vmem:[%s6 + $0x2d0] sm:$0xff]
  %v3215 = vld [vmem:[%s6 + $0x2d8] sm:$0xff]
  %v3216 = vld [vmem:[%s6 + $0x2e0] sm:$0xff]
  %v3217 = vld [vmem:[%s6 + $0x2e8] sm:$0xff]
  %v3218 = vld [vmem:[%s6 + $0x2f0] sm:$0xff]
  %v3219 = vld [vmem:[%s6 + $0x2f8] sm:$0xff]
  %v3220 = vld [vmem:[%s6 + $0x300] sm:$0xff]
  %v3221 = vld [vmem:[%s6 + $0x308] sm:$0xff]
  %v3222 = vld [vmem:[%s6 + $0x310] sm:$0xff]
  %v3223 = vld [vmem:[%s6 + $0x318] sm:$0xff]
  %v3224 = vld [vmem:[%s6 + $0x320] sm:$0xff]
  %v3225 = vld [vmem:[%s6 + $0x328] sm:$0xff]
  %v3226 = vld [vmem:[%s6 + $0x330] sm:$0xff]
  %v3227 = vld [vmem:[%s6 + $0x338] sm:$0xff]
  %v3228 = vld [vmem:[%s6 + $0x340] sm:$0xff]
  %v3229 = vld [vmem:[%s6 + $0x348] sm:$0xff]
  %v3230 = vld [vmem:[%s6 + $0x350] sm:$0xff]
  %v3231 = vld [vmem:[%s6 + $0x358] sm:$0xff]
  %v3232 = vld [vmem:[%s6 + $0x360] sm:$0xff]
  %v3233 = vld [vmem:[%s6 + $0x368] sm:$0xff]
  %v3234 = vld [vmem:[%s6 + $0x370] sm:$0xff]
  %v3235 = vld [vmem:[%s6 + $0x378] sm:$0xff]
  %v3236 = vld [vmem:[%s6 + $0x380] sm:$0xff]
  %v3237 = vld [vmem:[%s6 + $0x388] sm:$0xff]
  %v3238 = vld [vmem:[%s6 + $0x390] sm:$0xff]
  %v3239 = vld [vmem:[%s6 + $0x398] sm:$0xff]
  %v3240 = vld [vmem:[%s6 + $0x3a0] sm:$0xff]
  %v3241 = vld [vmem:[%s6 + $0x3a8] sm:$0xff]
  %v3242 = vld [vmem:[%s6 + $0x3b0] sm:$0xff]
  %v3243 = vld [vmem:[%s6 + $0x3b8] sm:$0xff]
  %v3244 = vld [vmem:[%s6 + $0x3c0] sm:$0xff]
  %v3245 = vld [vmem:[%s6 + $0x3c8] sm:$0xff]
  %v3246 = vld [vmem:[%s6 + $0x3d0] sm:$0xff]
  %v3247 = vld [vmem:[%s6 + $0x3d8] sm:$0xff]
  %v3248 = vld [vmem:[%s6 + $0x3e0] sm:$0xff]
  %v3249 = vld [vmem:[%s6 + $0x3e8] sm:$0xff]
  %v3250 = vld [vmem:[%s6 + $0x3f0] sm:$0xff]
  %v3251 = vld [vmem:[%s6 + $0x3f8] sm:$0xff]
  %v3252 = vld [vmem:[%s6 + $0x400] sm:$0xff]
  %v3253 = vld [vmem:[%s6 + $0x408] sm:$0xff]
  %v3254 = vld [vmem:[%s6 + $0x410] sm:$0xff]
  %v3255 = vld [vmem:[%s6 + $0x418] sm:$0xff]
  %v3256 = vld [vmem:[%s6 + $0x420] sm:$0xff]
  %v3257 = vld [vmem:[%s6 + $0x428] sm:$0xff]
  %v3258 = vld [vmem:[%s6 + $0x430] sm:$0xff]
  %v3259 = vld [vmem:[%s6 + $0x438] sm:$0xff]
  %v3260 = vld [vmem:[%s6 + $0x440] sm:$0xff]
  %v3261 = vld [vmem:[%s6 + $0x448] sm:$0xff]
  %v3262 = vld [vmem:[%s6 + $0x450] sm:$0xff]
  %v3263 = vld [vmem:[%s6 + $0x458] sm:$0xff]
  %v3264 = vld [vmem:[%s6 + $0x460] sm:$0xff]
  %v3265 = vld [vmem:[%s6 + $0x468] sm:$0xff]
  %v3266 = vld [vmem:[%s6 + $0x470] sm:$0xff]
  %v3267 = vld [vmem:[%s6 + $0x478] sm:$0xff]
  %v3268 = vld [vmem:[%s6 + $0x480] sm:$0xff]
  %v3269 = vld [vmem:[%s6 + $0x488] sm:$0xff]
  %v3270 = vld [vmem:[%s6 + $0x490] sm:$0xff]
  %v3271 = vld [vmem:[%s6 + $0x498] sm:$0xff]
  %v3272 = vld [vmem:[%s6 + $0x4a0] sm:$0xff]
  %v3273 = vld [vmem:[%s6 + $0x4a8] sm:$0xff]
  %v3274 = vld [vmem:[%s6 + $0x4b0] sm:$0xff]
  %v3275 = vld [vmem:[%s6 + $0x4b8] sm:$0xff]
  %v3276 = vld [vmem:[%s6 + $0x4c0] sm:$0xff]
  %v3277 = vld [vmem:[%s6 + $0x4c8] sm:$0xff]
  %v3278 = vld [vmem:[%s6 + $0x4d0] sm:$0xff]
  %v3279 = vld [vmem:[%s6 + $0x4d8] sm:$0xff]
  %v3280 = vld [vmem:[%s6 + $0x4e0] sm:$0xff]
  %v3281 = vld [vmem:[%s6 + $0x4e8] sm:$0xff]
  %v3282 = vld [vmem:[%s6 + $0x4f0] sm:$0xff]
  %v3283 = vld [vmem:[%s6 + $0x4f8] sm:$0xff]
  %v3284 = vld [vmem:[%s6 + $0x500] sm:$0xff]
  %v3285 = vld [vmem:[%s6 + $0x508] sm:$0xff]
  %v3286 = vld [vmem:[%s6 + $0x510] sm:$0xff]
  %v3287 = vld [vmem:[%s6 + $0x518] sm:$0xff]
  %v3288 = vld [vmem:[%s6 + $0x520] sm:$0xff]
  %v3289 = vld [vmem:[%s6 + $0x528] sm:$0xff]
  %v3290 = vld [vmem:[%s6 + $0x530] sm:$0xff]
  %v3291 = vld [vmem:[%s6 + $0x538] sm:$0xff]
  %v3292 = vld [vmem:[%s6 + $0x540] sm:$0xff]
  %v3293 = vld [vmem:[%s6 + $0x548] sm:$0xff]
  %v3294 = vld [vmem:[%s6 + $0x550] sm:$0xff]
  %v3295 = vld [vmem:[%s6 + $0x558] sm:$0xff]
  %v3296 = vld [vmem:[%s6 + $0x560] sm:$0xff]
  %v3297 = vld [vmem:[%s6 + $0x568] sm:$0xff]
  %v3298 = vld [vmem:[%s6 + $0x570] sm:$0xff]
  %v3299 = vld [vmem:[%s6 + $0x578] sm:$0xff]
  %v3300 = vld [vmem:[%s6 + $0x580] sm:$0xff]
  %v3301 = vld [vmem:[%s6 + $0x588] sm:$0xff]
  %v3302 = vld [vmem:[%s6 + $0x590] sm:$0xff]
  %v3303 = vld [vmem:[%s6 + $0x598] sm:$0xff]
  %v3304 = vld [vmem:[%s6 + $0x5a0] sm:$0xff]
  %v3305 = vld [vmem:[%s6 + $0x5a8] sm:$0xff]
  %v3306 = vld [vmem:[%s6 + $0x5b0] sm:$0xff]
  %v3307 = vld [vmem:[%s6 + $0x5b8] sm:$0xff]
  %v3308 = vld [vmem:[%s6 + $0x5c0] sm:$0xff]
  %v3309 = vld [vmem:[%s6 + $0x5c8] sm:$0xff]
  %v3310 = vld [vmem:[%s6 + $0x5d0] sm:$0xff]
  %v3311 = vld [vmem:[%s6 + $0x5d8] sm:$0xff]
  %v3312 = vld [vmem:[%s6 + $0x5e0] sm:$0xff]
  %v3313 = vld [vmem:[%s6 + $0x5e8] sm:$0xff]
  %v3314 = vld [vmem:[%s6 + $0x5f0] sm:$0xff]
  %v3315 = vld [vmem:[%s6 + $0x5f8] sm:$0xff]
  %v3316 = vld [vmem:[%s6 + $0x600] sm:$0xff]
  %v3317 = vld [vmem:[%s6 + $0x608] sm:$0xff]
  %v3318 = vld [vmem:[%s6 + $0x610] sm:$0xff]
  %v3319 = vld [vmem:[%s6 + $0x618] sm:$0xff]
  %v3320 = vld [vmem:[%s6 + $0x620] sm:$0xff]
  %v3321 = vld [vmem:[%s6 + $0x628] sm:$0xff]
  %v3322 = vld [vmem:[%s6 + $0x630] sm:$0xff]
  %v3323 = vld [vmem:[%s6 + $0x638] sm:$0xff]
  %v3324 = vld [vmem:[%s6 + $0x640] sm:$0xff]
  %v3325 = vld [vmem:[%s6 + $0x648] sm:$0xff]
  %v3326 = vld [vmem:[%s6 + $0x650] sm:$0xff]
  %v3327 = vld [vmem:[%s6 + $0x658] sm:$0xff]
  %v3328 = vld [vmem:[%s6 + $0x660] sm:$0xff]
  %v3329 = vld [vmem:[%s6 + $0x668] sm:$0xff]
  %v3330 = vld [vmem:[%s6 + $0x670] sm:$0xff]
  %v3331 = vld [vmem:[%s6 + $0x678] sm:$0xff]
  %v3332 = vld [vmem:[%s6 + $0x680] sm:$0xff]
  %v3333 = vld [vmem:[%s6 + $0x688] sm:$0xff]
  %v3334 = vld [vmem:[%s6 + $0x690] sm:$0xff]
  %v3335 = vld [vmem:[%s6 + $0x698] sm:$0xff]
  %v3336 = vld [vmem:[%s6 + $0x6a0] sm:$0xff]
  %v3337 = vld [vmem:[%s6 + $0x6a8] sm:$0xff]
  %v3338 = vld [vmem:[%s6 + $0x6b0] sm:$0xff]
  %v3339 = vld [vmem:[%s6 + $0x6b8] sm:$0xff]
  %v3340 = vld [vmem:[%s6 + $0x6c0] sm:$0xff]
  %v3341 = vld [vmem:[%s6 + $0x6c8] sm:$0xff]
  %v3342 = vld [vmem:[%s6 + $0x6d0] sm:$0xff]
  %v3343 = vld [vmem:[%s6 + $0x6d8] sm:$0xff]
  %v3344 = vld [vmem:[%s6 + $0x6e0] sm:$0xff]
  %v3345 = vld [vmem:[%s6 + $0x6e8] sm:$0xff]
  %v3346 = vld [vmem:[%s6 + $0x6f0] sm:$0xff]
  %v3347 = vld [vmem:[%s6 + $0x6f8] sm:$0xff]
  %v3348 = vld [vmem:[%s6 + $0x700] sm:$0xff]
  %v3349 = vld [vmem:[%s6 + $0x708] sm:$0xff]
  %v3350 = vld [vmem:[%s6 + $0x710] sm:$0xff]
  %v3351 = vld [vmem:[%s6 + $0x718] sm:$0xff]
  %v3352 = vld [vmem:[%s6 + $0x720] sm:$0xff]
  %v3353 = vld [vmem:[%s6 + $0x728] sm:$0xff]
  %v3354 = vld [vmem:[%s6 + $0x730] sm:$0xff]
  %v3355 = vld [vmem:[%s6 + $0x738] sm:$0xff]
  %v3356 = vld [vmem:[%s6 + $0x740] sm:$0xff]
  %v3357 = vld [vmem:[%s6 + $0x748] sm:$0xff]
  %v3358 = vld [vmem:[%s6 + $0x750] sm:$0xff]
  %v3359 = vld [vmem:[%s6 + $0x758] sm:$0xff]
  %v3360 = vld [vmem:[%s6 + $0x760] sm:$0xff]
  %v3361 = vld [vmem:[%s6 + $0x768] sm:$0xff]
  %v3362 = vld [vmem:[%s6 + $0x770] sm:$0xff]
  %v3363 = vld [vmem:[%s6 + $0x778] sm:$0xff]
  %v3364 = vld [vmem:[%s6 + $0x780] sm:$0xff]
  %v3365 = vld [vmem:[%s6 + $0x788] sm:$0xff]
  %v3366 = vld [vmem:[%s6 + $0x790] sm:$0xff]
  %v3367 = vld [vmem:[%s6 + $0x798] sm:$0xff]
  %v3368 = vld [vmem:[%s6 + $0x7a0] sm:$0xff]
  %v3369 = vld [vmem:[%s6 + $0x7a8] sm:$0xff]
  %v3370 = vld [vmem:[%s6 + $0x7b0] sm:$0xff]
  %v3371 = vld [vmem:[%s6 + $0x7b8] sm:$0xff]
  %v3372 = vld [vmem:[%s6 + $0x7c0] sm:$0xff]
  %v3373 = vld [vmem:[%s6 + $0x7c8] sm:$0xff]
  %v3374 = vld [vmem:[%s6 + $0x7d0] sm:$0xff]
  %v3375 = vld [vmem:[%s6 + $0x7d8] sm:$0xff]
  %v3376 = vld [vmem:[%s6 + $0x7e0] sm:$0xff]
  %v3377 = vld [vmem:[%s6 + $0x7e8] sm:$0xff]
  %v3378 = vld [vmem:[%s6 + $0x7f0] sm:$0xff]
  %v3379 = vld [vmem:[%s6 + $0x7f8] sm:$0xff]
  %v3380 = vld [vmem:[%s6 + $0x800] sm:$0xff]
  %v3381 = vld [vmem:[%s6 + $0x808] sm:$0xff]
  %v3382 = vld [vmem:[%s6 + $0x810] sm:$0xff]
  %v3383 = vld [vmem:[%s6 + $0x818] sm:$0xff]
  %v3384 = vld [vmem:[%s6 + $0x820] sm:$0xff]
  %v3385 = vld [vmem:[%s6 + $0x828] sm:$0xff]
  %v3386 = vld [vmem:[%s6 + $0x830] sm:$0xff]
  %v3387 = vld [vmem:[%s6 + $0x838] sm:$0xff]
  %v3388 = vld [vmem:[%s6 + $0x840] sm:$0xff]
  %v3389 = vld [vmem:[%s6 + $0x848] sm:$0xff]
  %v3390 = vld [vmem:[%s6 + $0x850] sm:$0xff]
  %v3391 = vld [vmem:[%s6 + $0x858] sm:$0xff]
  %v3392 = vld [vmem:[%s6 + $0x860] sm:$0xff]
  %v3393 = vld [vmem:[%s6 + $0x868] sm:$0xff]
  %v3394 = vld [vmem:[%s6 + $0x870] sm:$0xff]
  %v3395 = vld [vmem:[%s6 + $0x878] sm:$0xff]
  %v3396 = vld [vmem:[%s6 + $0x880] sm:$0xff]
  %v3397 = vld [vmem:[%s6 + $0x888] sm:$0xff]
  %v3398 = vld [vmem:[%s6 + $0x890] sm:$0xff]
  %v3399 = vld [vmem:[%s6 + $0x898] sm:$0xff]
  %v3400 = vld [vmem:[%s6 + $0x8a0] sm:$0xff]
  %v3401 = vld [vmem:[%s6 + $0x8a8] sm:$0xff]
  %v3402 = vld [vmem:[%s6 + $0x8b0] sm:$0xff]
  %v3403 = vld [vmem:[%s6 + $0x8b8] sm:$0xff]
  %v3404 = vld [vmem:[%s6 + $0x8c0] sm:$0xff]
  %v3405 = vld [vmem:[%s6 + $0x8c8] sm:$0xff]
  %v3406 = vld [vmem:[%s6 + $0x8d0] sm:$0xff]
  %v3407 = vld [vmem:[%s6 + $0x8d8] sm:$0xff]
  %v3408 = vld [vmem:[%s6 + $0x8e0] sm:$0xff]
  %v3409 = vld [vmem:[%s6 + $0x8e8] sm:$0xff]
  %v3410 = vld [vmem:[%s6 + $0x8f0] sm:$0xff]
  %v3411 = vld [vmem:[%s6 + $0x8f8] sm:$0xff]
  %v3412 = vld [vmem:[%s6 + $0x900] sm:$0xff]
  %v3413 = vld [vmem:[%s6 + $0x908] sm:$0xff]
  %v3414 = vld [vmem:[%s6 + $0x910] sm:$0xff]
  %v3415 = vld [vmem:[%s6 + $0x918] sm:$0xff]
  %v3416 = vld [vmem:[%s6 + $0x920] sm:$0xff]
  %v3417 = vld [vmem:[%s6 + $0x928] sm:$0xff]
  %v3418 = vld [vmem:[%s6 + $0x930] sm:$0xff]
  %v3419 = vld [vmem:[%s6 + $0x938] sm:$0xff]
  %v3420 = vld [vmem:[%s6 + $0x940] sm:$0xff]
  %v3421 = vld [vmem:[%s6 + $0x948] sm:$0xff]
  %v3422 = vld [vmem:[%s6 + $0x950] sm:$0xff]
  %v3423 = vld [vmem:[%s6 + $0x958] sm:$0xff]
  %v3424 = vld [vmem:[%s6 + $0x960] sm:$0xff]
  %v3425 = vld [vmem:[%s6 + $0x968] sm:$0xff]
  %v3426 = vld [vmem:[%s6 + $0x970] sm:$0xff]
  %v3427 = vld [vmem:[%s6 + $0x978] sm:$0xff]
  %v3428 = vld [vmem:[%s6 + $0x980] sm:$0xff]
  %v3429 = vld [vmem:[%s6 + $0x988] sm:$0xff]
  %v3430 = vld [vmem:[%s6 + $0x990] sm:$0xff]
  %v3431 = vld [vmem:[%s6 + $0x998] sm:$0xff]
  %v3432 = vld [vmem:[%s6 + $0x9a0] sm:$0xff]
  %v3433 = vld [vmem:[%s6 + $0x9a8] sm:$0xff]
  %v3434 = vld [vmem:[%s6 + $0x9b0] sm:$0xff]
  %v3435 = vld [vmem:[%s6 + $0x9b8] sm:$0xff]
  %v3436 = vld [vmem:[%s6 + $0x9c0] sm:$0xff]
  %v3437 = vld [vmem:[%s6 + $0x9c8] sm:$0xff]
  %v3438 = vld [vmem:[%s6 + $0x9d0] sm:$0xff]
  %v3439 = vld [vmem:[%s6 + $0x9d8] sm:$0xff]
  %v3440 = vld [vmem:[%s6 + $0x9e0] sm:$0xff]
  %v3441 = vld [vmem:[%s6 + $0x9e8] sm:$0xff]
  %v3442 = vld [vmem:[%s6 + $0x9f0] sm:$0xff]
  %v3443 = vld [vmem:[%s6 + $0x9f8] sm:$0xff]
  %v3444 = vld [vmem:[%s6 + $0xa00] sm:$0xff]
  %v3445 = vld [vmem:[%s6 + $0xa08] sm:$0xff]
  %v3446 = vld [vmem:[%s6 + $0xa10] sm:$0xff]
  %v3447 = vld [vmem:[%s6 + $0xa18] sm:$0xff]
  %v3448 = vld [vmem:[%s6 + $0xa20] sm:$0xff]
  %v3449 = vld [vmem:[%s6 + $0xa28] sm:$0xff]
  %v3450 = vld [vmem:[%s6 + $0xa30] sm:$0xff]
  %v3451 = vld [vmem:[%s6 + $0xa38] sm:$0xff]
  %v3452 = vld [vmem:[%s6 + $0xa40] sm:$0xff]
  %v3453 = vld [vmem:[%s6 + $0xa48] sm:$0xff]
  %v3454 = vld [vmem:[%s6 + $0xa50] sm:$0xff]
  %v3455 = vld [vmem:[%s6 + $0xa58] sm:$0xff]
  %v3456 = vld [vmem:[%s6 + $0xa60] sm:$0xff]
  %v3457 = vld [vmem:[%s6 + $0xa68] sm:$0xff]
  %v3458 = vld [vmem:[%s6 + $0xa70] sm:$0xff]
  %v3459 = vld [vmem:[%s6 + $0xa78] sm:$0xff]
  %v3460 = vld [vmem:[%s6 + $0xa80] sm:$0xff]
  %v3461 = vld [vmem:[%s6 + $0xa88] sm:$0xff]
  %v3462 = vld [vmem:[%s6 + $0xa90] sm:$0xff]
  %v3463 = vld [vmem:[%s6 + $0xa98] sm:$0xff]
  %v3464 = vld [vmem:[%s6 + $0xaa0] sm:$0xff]
  %v3465 = vld [vmem:[%s6 + $0xaa8] sm:$0xff]
  %v3466 = vld [vmem:[%s6 + $0xab0] sm:$0xff]
  %v3467 = vld [vmem:[%s6 + $0xab8] sm:$0xff]
  %v3468 = vld [vmem:[%s6 + $0xac0] sm:$0xff]
  %v3469 = vld [vmem:[%s6 + $0xac8] sm:$0xff]
  %v3470 = vld [vmem:[%s6 + $0xad0] sm:$0xff]
  %v3471 = vld [vmem:[%s6 + $0xad8] sm:$0xff]
  %v3472 = vld [vmem:[%s6 + $0xae0] sm:$0xff]
  %v3473 = vld [vmem:[%s6 + $0xae8] sm:$0xff]
  %v3474 = vld [vmem:[%s6 + $0xaf0] sm:$0xff]
  %v3475 = vld [vmem:[%s6 + $0xaf8] sm:$0xff]
  %v3476 = vld [vmem:[%s6 + $0xb00] sm:$0xff]
  %v3477 = vld [vmem:[%s6 + $0xb08] sm:$0xff]
  %v3478 = vld [vmem:[%s6 + $0xb10] sm:$0xff]
  %v3479 = vld [vmem:[%s6 + $0xb18] sm:$0xff]
  %v3480 = vld [vmem:[%s6 + $0xb20] sm:$0xff]
  %v3481 = vld [vmem:[%s6 + $0xb28] sm:$0xff]
  %v3482 = vld [vmem:[%s6 + $0xb30] sm:$0xff]
  %v3483 = vld [vmem:[%s6 + $0xb38] sm:$0xff]
  %v3484 = vld [vmem:[%s6 + $0xb40] sm:$0xff]
  %v3485 = vld [vmem:[%s6 + $0xb48] sm:$0xff]
  %v3486 = vld [vmem:[%s6 + $0xb50] sm:$0xff]
  %v3487 = vld [vmem:[%s6 + $0xb58] sm:$0xff]
  %v3488 = vld [vmem:[%s6 + $0xb60] sm:$0xff]
  %v3489 = vld [vmem:[%s6 + $0xb68] sm:$0xff]
  %v3490 = vld [vmem:[%s6 + $0xb70] sm:$0xff]
  %v3491 = vld [vmem:[%s6 + $0xb78] sm:$0xff]
  %v3492 = vld [vmem:[%s6 + $0xb80] sm:$0xff]
  %v3493 = vld [vmem:[%s6 + $0xb88] sm:$0xff]
  %v3494 = vld [vmem:[%s6 + $0xb90] sm:$0xff]
  %v3495 = vld [vmem:[%s6 + $0xb98] sm:$0xff]
  %v3496 = vld [vmem:[%s6 + $0xba0] sm:$0xff]
  %v3497 = vld [vmem:[%s6 + $0xba8] sm:$0xff]
  %v3498 = vld [vmem:[%s6 + $0xbb0] sm:$0xff]
  %v3499 = vld [vmem:[%s6 + $0xbb8] sm:$0xff]
  %v3500 = vld [vmem:[%s6 + $0xbc0] sm:$0xff]
  %v3501 = vld [vmem:[%s6 + $0xbc8] sm:$0xff]
  %v3502 = vld [vmem:[%s6 + $0xbd0] sm:$0xff]
  %v3503 = vld [vmem:[%s6 + $0xbd8] sm:$0xff]
  %v3504 = vld [vmem:[%s6 + $0xbe0] sm:$0xff]
  %v3505 = vld [vmem:[%s6 + $0xbe8] sm:$0xff]
  %v3506 = vld [vmem:[%s6 + $0xbf0] sm:$0xff]
  %v3507 = vld [vmem:[%s6 + $0xbf8] sm:$0xff]
  %v3508 = vld [vmem:[%s7] sm:$0x3f]
  %v3510 = vlaneseq
  %v3511 = vshrl.u32 %v3510, 7
  %v3512 = vsub.s32 0, %v3511
  %v3513 = vrot.slane %v3508, %v3512
  %v3514 = vlaneseq
  %v3515 = vshrl.u32 %v3514, 7
  %v3516 = vsub.s32 1, %v3515
  %v3517 = vrot.slane %v3508, %v3516
  %v3518 = vlaneseq
  %v3519 = vshrl.u32 %v3518, 7
  %v3520 = vsub.s32 2, %v3519
  %v3521 = vrot.slane %v3508, %v3520
  %v3522 = vlaneseq
  %v3523 = vshrl.u32 %v3522, 7
  %v3524 = vsub.s32 3, %v3523
  %v3525 = vrot.slane %v3508, %v3524
  %v3526 = vlaneseq
  %v3527 = vshrl.u32 %v3526, 7
  %v3528 = vsub.s32 4, %v3527
  %v3529 = vrot.slane %v3508, %v3528
  %v3530 = vlaneseq
  %v3531 = vshrl.u32 %v3530, 7
  %v3532 = vsub.s32 5, %v3531
  %v3533 = vrot.slane %v3508, %v3532
  %v3924 = vunpack.c.l.b16 %v3124
  %v3925 = vunpack.c.h.b16 %v3124
  %v3926 = vunpack.c.l.b16 %v3125
  %v3927 = vunpack.c.h.b16 %v3125
  %v3928 = vunpack.c.l.b16 %v3126
  %v3929 = vunpack.c.h.b16 %v3126
  %v3930 = vunpack.c.l.b16 %v3127
  %v3931 = vunpack.c.h.b16 %v3127
  %v3932 = vunpack.c.l.b16 %v3128
  %v3933 = vunpack.c.h.b16 %v3128
  %v3934 = vunpack.c.l.b16 %v3129
  %v3935 = vunpack.c.h.b16 %v3129
  %v3936 = vunpack.c.l.b16 %v3130
  %v3937 = vunpack.c.h.b16 %v3130
  %v3938 = vunpack.c.l.b16 %v3131
  %v3939 = vunpack.c.h.b16 %v3131
  %v3940 = vunpack.c.l.b16 %v3132
  %v3941 = vunpack.c.h.b16 %v3132
  %v3942 = vunpack.c.l.b16 %v3133
  %v3943 = vunpack.c.h.b16 %v3133
  %v3944 = vunpack.c.l.b16 %v3134
  %v3945 = vunpack.c.h.b16 %v3134
  %v3946 = vunpack.c.l.b16 %v3135
  %v3947 = vunpack.c.h.b16 %v3135
  %v3948 = vunpack.c.l.b16 %v3136
  %v3949 = vunpack.c.h.b16 %v3136
  %v3950 = vunpack.c.l.b16 %v3137
  %v3951 = vunpack.c.h.b16 %v3137
  %v3952 = vunpack.c.l.b16 %v3138
  %v3953 = vunpack.c.h.b16 %v3138
  %v3954 = vunpack.c.l.b16 %v3139
  %v3955 = vunpack.c.h.b16 %v3139
  %v3956 = vunpack.c.l.b16 %v3140
  %v3957 = vunpack.c.h.b16 %v3140
  %v3958 = vunpack.c.l.b16 %v3141
  %v3959 = vunpack.c.h.b16 %v3141
  %v3960 = vunpack.c.l.b16 %v3142
  %v3961 = vunpack.c.h.b16 %v3142
  %v3962 = vunpack.c.l.b16 %v3143
  %v3963 = vunpack.c.h.b16 %v3143
  %v3964 = vunpack.c.l.b16 %v3144
  %v3965 = vunpack.c.h.b16 %v3144
  %v3966 = vunpack.c.l.b16 %v3145
  %v3967 = vunpack.c.h.b16 %v3145
  %v3968 = vunpack.c.l.b16 %v3146
  %v3969 = vunpack.c.h.b16 %v3146
  %v3970 = vunpack.c.l.b16 %v3147
  %v3971 = vunpack.c.h.b16 %v3147
  %v3972 = vunpack.c.l.b16 %v3148
  %v3973 = vunpack.c.h.b16 %v3148
  %v3974 = vunpack.c.l.b16 %v3149
  %v3975 = vunpack.c.h.b16 %v3149
  %v3976 = vunpack.c.l.b16 %v3150
  %v3977 = vunpack.c.h.b16 %v3150
  %v3978 = vunpack.c.l.b16 %v3151
  %v3979 = vunpack.c.h.b16 %v3151
  %v3980 = vunpack.c.l.b16 %v3152
  %v3981 = vunpack.c.h.b16 %v3152
  %v3982 = vunpack.c.l.b16 %v3153
  %v3983 = vunpack.c.h.b16 %v3153
  %v3984 = vunpack.c.l.b16 %v3154
  %v3985 = vunpack.c.h.b16 %v3154
  %v3986 = vunpack.c.l.b16 %v3155
  %v3987 = vunpack.c.h.b16 %v3155
  %v3988 = vunpack.c.l.b16 %v3156
  %v3989 = vunpack.c.h.b16 %v3156
  %v3990 = vunpack.c.l.b16 %v3157
  %v3991 = vunpack.c.h.b16 %v3157
  %v3992 = vunpack.c.l.b16 %v3158
  %v3993 = vunpack.c.h.b16 %v3158
  %v3994 = vunpack.c.l.b16 %v3159
  %v3995 = vunpack.c.h.b16 %v3159
  %v3996 = vunpack.c.l.b16 %v3160
  %v3997 = vunpack.c.h.b16 %v3160
  %v3998 = vunpack.c.l.b16 %v3161
  %v3999 = vunpack.c.h.b16 %v3161
  %v4000 = vunpack.c.l.b16 %v3162
  %v4001 = vunpack.c.h.b16 %v3162
  %v4002 = vunpack.c.l.b16 %v3163
  %v4003 = vunpack.c.h.b16 %v3163
  %v4004 = vunpack.c.l.b16 %v3164
  %v4005 = vunpack.c.h.b16 %v3164
  %v4006 = vunpack.c.l.b16 %v3165
  %v4007 = vunpack.c.h.b16 %v3165
  %v4008 = vunpack.c.l.b16 %v3166
  %v4009 = vunpack.c.h.b16 %v3166
  %v4010 = vunpack.c.l.b16 %v3167
  %v4011 = vunpack.c.h.b16 %v3167
  %v4012 = vunpack.c.l.b16 %v3168
  %v4013 = vunpack.c.h.b16 %v3168
  %v4014 = vunpack.c.l.b16 %v3169
  %v4015 = vunpack.c.h.b16 %v3169
  %v4016 = vunpack.c.l.b16 %v3170
  %v4017 = vunpack.c.h.b16 %v3170
  %v4018 = vunpack.c.l.b16 %v3171
  %v4019 = vunpack.c.h.b16 %v3171
  %v4020 = vunpack.c.l.b16 %v3172
  %v4021 = vunpack.c.h.b16 %v3172
  %v4022 = vunpack.c.l.b16 %v3173
  %v4023 = vunpack.c.h.b16 %v3173
  %v4024 = vunpack.c.l.b16 %v3174
  %v4025 = vunpack.c.h.b16 %v3174
  %v4026 = vunpack.c.l.b16 %v3175
  %v4027 = vunpack.c.h.b16 %v3175
  %v4028 = vunpack.c.l.b16 %v3176
  %v4029 = vunpack.c.h.b16 %v3176
  %v4030 = vunpack.c.l.b16 %v3177
  %v4031 = vunpack.c.h.b16 %v3177
  %v4032 = vunpack.c.l.b16 %v3178
  %v4033 = vunpack.c.h.b16 %v3178
  %v4034 = vunpack.c.l.b16 %v3179
  %v4035 = vunpack.c.h.b16 %v3179
  %v4036 = vunpack.c.l.b16 %v3180
  %v4037 = vunpack.c.h.b16 %v3180
  %v4038 = vunpack.c.l.b16 %v3181
  %v4039 = vunpack.c.h.b16 %v3181
  %v4040 = vunpack.c.l.b16 %v3182
  %v4041 = vunpack.c.h.b16 %v3182
  %v4042 = vunpack.c.l.b16 %v3183
  %v4043 = vunpack.c.h.b16 %v3183
  %v4044 = vunpack.c.l.b16 %v3184
  %v4045 = vunpack.c.h.b16 %v3184
  %v4046 = vunpack.c.l.b16 %v3185
  %v4047 = vunpack.c.h.b16 %v3185
  %v4048 = vunpack.c.l.b16 %v3186
  %v4049 = vunpack.c.h.b16 %v3186
  %v4050 = vunpack.c.l.b16 %v3187
  %v4051 = vunpack.c.h.b16 %v3187
  %v4052 = vunpack.c.l.b16 %v3188
  %v4053 = vunpack.c.h.b16 %v3188
  %v4054 = vunpack.c.l.b16 %v3189
  %v4055 = vunpack.c.h.b16 %v3189
  %v4056 = vunpack.c.l.b16 %v3190
  %v4057 = vunpack.c.h.b16 %v3190
  %v4058 = vunpack.c.l.b16 %v3191
  %v4059 = vunpack.c.h.b16 %v3191
  %v4060 = vunpack.c.l.b16 %v3192
  %v4061 = vunpack.c.h.b16 %v3192
  %v4062 = vunpack.c.l.b16 %v3193
  %v4063 = vunpack.c.h.b16 %v3193
  %v4064 = vunpack.c.l.b16 %v3194
  %v4065 = vunpack.c.h.b16 %v3194
  %v4066 = vunpack.c.l.b16 %v3195
  %v4067 = vunpack.c.h.b16 %v3195
  %v4068 = vunpack.c.l.b16 %v3196
  %v4069 = vunpack.c.h.b16 %v3196
  %v4070 = vunpack.c.l.b16 %v3197
  %v4071 = vunpack.c.h.b16 %v3197
  %v4072 = vunpack.c.l.b16 %v3198
  %v4073 = vunpack.c.h.b16 %v3198
  %v4074 = vunpack.c.l.b16 %v3199
  %v4075 = vunpack.c.h.b16 %v3199
  %v4076 = vunpack.c.l.b16 %v3200
  %v4077 = vunpack.c.h.b16 %v3200
  %v4078 = vunpack.c.l.b16 %v3201
  %v4079 = vunpack.c.h.b16 %v3201
  %v4080 = vunpack.c.l.b16 %v3202
  %v4081 = vunpack.c.h.b16 %v3202
  %v4082 = vunpack.c.l.b16 %v3203
  %v4083 = vunpack.c.h.b16 %v3203
  %v4084 = vunpack.c.l.b16 %v3204
  %v4085 = vunpack.c.h.b16 %v3204
  %v4086 = vunpack.c.l.b16 %v3205
  %v4087 = vunpack.c.h.b16 %v3205
  %v4088 = vunpack.c.l.b16 %v3206
  %v4089 = vunpack.c.h.b16 %v3206
  %v4090 = vunpack.c.l.b16 %v3207
  %v4091 = vunpack.c.h.b16 %v3207
  %v4092 = vunpack.c.l.b16 %v3208
  %v4093 = vunpack.c.h.b16 %v3208
  %v4094 = vunpack.c.l.b16 %v3209
  %v4095 = vunpack.c.h.b16 %v3209
  %v4096 = vunpack.c.l.b16 %v3210
  %v4097 = vunpack.c.h.b16 %v3210
  %v4098 = vunpack.c.l.b16 %v3211
  %v4099 = vunpack.c.h.b16 %v3211
  %v4100 = vunpack.c.l.b16 %v3212
  %v4101 = vunpack.c.h.b16 %v3212
  %v4102 = vunpack.c.l.b16 %v3213
  %v4103 = vunpack.c.h.b16 %v3213
  %v4104 = vunpack.c.l.b16 %v3214
  %v4105 = vunpack.c.h.b16 %v3214
  %v4106 = vunpack.c.l.b16 %v3215
  %v4107 = vunpack.c.h.b16 %v3215
  %v4108 = vunpack.c.l.b16 %v3216
  %v4109 = vunpack.c.h.b16 %v3216
  %v4110 = vunpack.c.l.b16 %v3217
  %v4111 = vunpack.c.h.b16 %v3217
  %v4112 = vunpack.c.l.b16 %v3218
  %v4113 = vunpack.c.h.b16 %v3218
  %v4114 = vunpack.c.l.b16 %v3219
  %v4115 = vunpack.c.h.b16 %v3219
  %v4116 = vunpack.c.l.b16 %v3220
  %v4117 = vunpack.c.h.b16 %v3220
  %v4118 = vunpack.c.l.b16 %v3221
  %v4119 = vunpack.c.h.b16 %v3221
  %v4120 = vunpack.c.l.b16 %v3222
  %v4121 = vunpack.c.h.b16 %v3222
  %v4122 = vunpack.c.l.b16 %v3223
  %v4123 = vunpack.c.h.b16 %v3223
  %v4124 = vunpack.c.l.b16 %v3224
  %v4125 = vunpack.c.h.b16 %v3224
  %v4126 = vunpack.c.l.b16 %v3225
  %v4127 = vunpack.c.h.b16 %v3225
  %v4128 = vunpack.c.l.b16 %v3226
  %v4129 = vunpack.c.h.b16 %v3226
  %v4130 = vunpack.c.l.b16 %v3227
  %v4131 = vunpack.c.h.b16 %v3227
  %v4132 = vunpack.c.l.b16 %v3228
  %v4133 = vunpack.c.h.b16 %v3228
  %v4134 = vunpack.c.l.b16 %v3229
  %v4135 = vunpack.c.h.b16 %v3229
  %v4136 = vunpack.c.l.b16 %v3230
  %v4137 = vunpack.c.h.b16 %v3230
  %v4138 = vunpack.c.l.b16 %v3231
  %v4139 = vunpack.c.h.b16 %v3231
  %v4140 = vunpack.c.l.b16 %v3232
  %v4141 = vunpack.c.h.b16 %v3232
  %v4142 = vunpack.c.l.b16 %v3233
  %v4143 = vunpack.c.h.b16 %v3233
  %v4144 = vunpack.c.l.b16 %v3234
  %v4145 = vunpack.c.h.b16 %v3234
  %v4146 = vunpack.c.l.b16 %v3235
  %v4147 = vunpack.c.h.b16 %v3235
  %v4148 = vunpack.c.l.b16 %v3236
  %v4149 = vunpack.c.h.b16 %v3236
  %v4150 = vunpack.c.l.b16 %v3237
  %v4151 = vunpack.c.h.b16 %v3237
  %v4152 = vunpack.c.l.b16 %v3238
  %v4153 = vunpack.c.h.b16 %v3238
  %v4154 = vunpack.c.l.b16 %v3239
  %v4155 = vunpack.c.h.b16 %v3239
  %v4156 = vunpack.c.l.b16 %v3240
  %v4157 = vunpack.c.h.b16 %v3240
  %v4158 = vunpack.c.l.b16 %v3241
  %v4159 = vunpack.c.h.b16 %v3241
  %v4160 = vunpack.c.l.b16 %v3242
  %v4161 = vunpack.c.h.b16 %v3242
  %v4162 = vunpack.c.l.b16 %v3243
  %v4163 = vunpack.c.h.b16 %v3243
  %v4164 = vunpack.c.l.b16 %v3244
  %v4165 = vunpack.c.h.b16 %v3244
  %v4166 = vunpack.c.l.b16 %v3245
  %v4167 = vunpack.c.h.b16 %v3245
  %v4168 = vunpack.c.l.b16 %v3246
  %v4169 = vunpack.c.h.b16 %v3246
  %v4170 = vunpack.c.l.b16 %v3247
  %v4171 = vunpack.c.h.b16 %v3247
  %v4172 = vunpack.c.l.b16 %v3248
  %v4173 = vunpack.c.h.b16 %v3248
  %v4174 = vunpack.c.l.b16 %v3249
  %v4175 = vunpack.c.h.b16 %v3249
  %v4176 = vunpack.c.l.b16 %v3250
  %v4177 = vunpack.c.h.b16 %v3250
  %v4178 = vunpack.c.l.b16 %v3251
  %v4179 = vunpack.c.h.b16 %v3251
  %v4180 = vunpack.c.l.b16 %v3252
  %v4181 = vunpack.c.h.b16 %v3252
  %v4182 = vunpack.c.l.b16 %v3253
  %v4183 = vunpack.c.h.b16 %v3253
  %v4184 = vunpack.c.l.b16 %v3254
  %v4185 = vunpack.c.h.b16 %v3254
  %v4186 = vunpack.c.l.b16 %v3255
  %v4187 = vunpack.c.h.b16 %v3255
  %v4188 = vunpack.c.l.b16 %v3256
  %v4189 = vunpack.c.h.b16 %v3256
  %v4190 = vunpack.c.l.b16 %v3257
  %v4191 = vunpack.c.h.b16 %v3257
  %v4192 = vunpack.c.l.b16 %v3258
  %v4193 = vunpack.c.h.b16 %v3258
  %v4194 = vunpack.c.l.b16 %v3259
  %v4195 = vunpack.c.h.b16 %v3259
  %v4196 = vunpack.c.l.b16 %v3260
  %v4197 = vunpack.c.h.b16 %v3260
  %v4198 = vunpack.c.l.b16 %v3261
  %v4199 = vunpack.c.h.b16 %v3261
  %v4200 = vunpack.c.l.b16 %v3262
  %v4201 = vunpack.c.h.b16 %v3262
  %v4202 = vunpack.c.l.b16 %v3263
  %v4203 = vunpack.c.h.b16 %v3263
  %v4204 = vunpack.c.l.b16 %v3264
  %v4205 = vunpack.c.h.b16 %v3264
  %v4206 = vunpack.c.l.b16 %v3265
  %v4207 = vunpack.c.h.b16 %v3265
  %v4208 = vunpack.c.l.b16 %v3266
  %v4209 = vunpack.c.h.b16 %v3266
  %v4210 = vunpack.c.l.b16 %v3267
  %v4211 = vunpack.c.h.b16 %v3267
  %v4212 = vunpack.c.l.b16 %v3268
  %v4213 = vunpack.c.h.b16 %v3268
  %v4214 = vunpack.c.l.b16 %v3269
  %v4215 = vunpack.c.h.b16 %v3269
  %v4216 = vunpack.c.l.b16 %v3270
  %v4217 = vunpack.c.h.b16 %v3270
  %v4218 = vunpack.c.l.b16 %v3271
  %v4219 = vunpack.c.h.b16 %v3271
  %v4220 = vunpack.c.l.b16 %v3272
  %v4221 = vunpack.c.h.b16 %v3272
  %v4222 = vunpack.c.l.b16 %v3273
  %v4223 = vunpack.c.h.b16 %v3273
  %v4224 = vunpack.c.l.b16 %v3274
  %v4225 = vunpack.c.h.b16 %v3274
  %v4226 = vunpack.c.l.b16 %v3275
  %v4227 = vunpack.c.h.b16 %v3275
  %v4228 = vunpack.c.l.b16 %v3276
  %v4229 = vunpack.c.h.b16 %v3276
  %v4230 = vunpack.c.l.b16 %v3277
  %v4231 = vunpack.c.h.b16 %v3277
  %v4232 = vunpack.c.l.b16 %v3278
  %v4233 = vunpack.c.h.b16 %v3278
  %v4234 = vunpack.c.l.b16 %v3279
  %v4235 = vunpack.c.h.b16 %v3279
  %v4236 = vunpack.c.l.b16 %v3280
  %v4237 = vunpack.c.h.b16 %v3280
  %v4238 = vunpack.c.l.b16 %v3281
  %v4239 = vunpack.c.h.b16 %v3281
  %v4240 = vunpack.c.l.b16 %v3282
  %v4241 = vunpack.c.h.b16 %v3282
  %v4242 = vunpack.c.l.b16 %v3283
  %v4243 = vunpack.c.h.b16 %v3283
  %v4244 = vunpack.c.l.b16 %v3284
  %v4245 = vunpack.c.h.b16 %v3284
  %v4246 = vunpack.c.l.b16 %v3285
  %v4247 = vunpack.c.h.b16 %v3285
  %v4248 = vunpack.c.l.b16 %v3286
  %v4249 = vunpack.c.h.b16 %v3286
  %v4250 = vunpack.c.l.b16 %v3287
  %v4251 = vunpack.c.h.b16 %v3287
  %v4252 = vunpack.c.l.b16 %v3288
  %v4253 = vunpack.c.h.b16 %v3288
  %v4254 = vunpack.c.l.b16 %v3289
  %v4255 = vunpack.c.h.b16 %v3289
  %v4256 = vunpack.c.l.b16 %v3290
  %v4257 = vunpack.c.h.b16 %v3290
  %v4258 = vunpack.c.l.b16 %v3291
  %v4259 = vunpack.c.h.b16 %v3291
  %v4260 = vunpack.c.l.b16 %v3292
  %v4261 = vunpack.c.h.b16 %v3292
  %v4262 = vunpack.c.l.b16 %v3293
  %v4263 = vunpack.c.h.b16 %v3293
  %v4264 = vunpack.c.l.b16 %v3294
  %v4265 = vunpack.c.h.b16 %v3294
  %v4266 = vunpack.c.l.b16 %v3295
  %v4267 = vunpack.c.h.b16 %v3295
  %v4268 = vunpack.c.l.b16 %v3296
  %v4269 = vunpack.c.h.b16 %v3296
  %v4270 = vunpack.c.l.b16 %v3297
  %v4271 = vunpack.c.h.b16 %v3297
  %v4272 = vunpack.c.l.b16 %v3298
  %v4273 = vunpack.c.h.b16 %v3298
  %v4274 = vunpack.c.l.b16 %v3299
  %v4275 = vunpack.c.h.b16 %v3299
  %v4276 = vunpack.c.l.b16 %v3300
  %v4277 = vunpack.c.h.b16 %v3300
  %v4278 = vunpack.c.l.b16 %v3301
  %v4279 = vunpack.c.h.b16 %v3301
  %v4280 = vunpack.c.l.b16 %v3302
  %v4281 = vunpack.c.h.b16 %v3302
  %v4282 = vunpack.c.l.b16 %v3303
  %v4283 = vunpack.c.h.b16 %v3303
  %v4284 = vunpack.c.l.b16 %v3304
  %v4285 = vunpack.c.h.b16 %v3304
  %v4286 = vunpack.c.l.b16 %v3305
  %v4287 = vunpack.c.h.b16 %v3305
  %v4288 = vunpack.c.l.b16 %v3306
  %v4289 = vunpack.c.h.b16 %v3306
  %v4290 = vunpack.c.l.b16 %v3307
  %v4291 = vunpack.c.h.b16 %v3307
  %v4292 = vunpack.c.l.b16 %v3308
  %v4293 = vunpack.c.h.b16 %v3308
  %v4294 = vunpack.c.l.b16 %v3309
  %v4295 = vunpack.c.h.b16 %v3309
  %v4296 = vunpack.c.l.b16 %v3310
  %v4297 = vunpack.c.h.b16 %v3310
  %v4298 = vunpack.c.l.b16 %v3311
  %v4299 = vunpack.c.h.b16 %v3311
  %v4300 = vunpack.c.l.b16 %v3312
  %v4301 = vunpack.c.h.b16 %v3312
  %v4302 = vunpack.c.l.b16 %v3313
  %v4303 = vunpack.c.h.b16 %v3313
  %v4304 = vunpack.c.l.b16 %v3314
  %v4305 = vunpack.c.h.b16 %v3314
  %v4306 = vunpack.c.l.b16 %v3315
  %v4307 = vunpack.c.h.b16 %v3315
  %v4308 = vunpack.c.l.b16 %v3316
  %v4309 = vunpack.c.h.b16 %v3316
  %v4310 = vunpack.c.l.b16 %v3317
  %v4311 = vunpack.c.h.b16 %v3317
  %v4312 = vunpack.c.l.b16 %v3318
  %v4313 = vunpack.c.h.b16 %v3318
  %v4314 = vunpack.c.l.b16 %v3319
  %v4315 = vunpack.c.h.b16 %v3319
  %v4316 = vunpack.c.l.b16 %v3320
  %v4317 = vunpack.c.h.b16 %v3320
  %v4318 = vunpack.c.l.b16 %v3321
  %v4319 = vunpack.c.h.b16 %v3321
  %v4320 = vunpack.c.l.b16 %v3322
  %v4321 = vunpack.c.h.b16 %v3322
  %v4322 = vunpack.c.l.b16 %v3323
  %v4323 = vunpack.c.h.b16 %v3323
  %v4324 = vunpack.c.l.b16 %v3324
  %v4325 = vunpack.c.h.b16 %v3324
  %v4326 = vunpack.c.l.b16 %v3325
  %v4327 = vunpack.c.h.b16 %v3325
  %v4328 = vunpack.c.l.b16 %v3326
  %v4329 = vunpack.c.h.b16 %v3326
  %v4330 = vunpack.c.l.b16 %v3327
  %v4331 = vunpack.c.h.b16 %v3327
  %v4332 = vunpack.c.l.b16 %v3328
  %v4333 = vunpack.c.h.b16 %v3328
  %v4334 = vunpack.c.l.b16 %v3329
  %v4335 = vunpack.c.h.b16 %v3329
  %v4336 = vunpack.c.l.b16 %v3330
  %v4337 = vunpack.c.h.b16 %v3330
  %v4338 = vunpack.c.l.b16 %v3331
  %v4339 = vunpack.c.h.b16 %v3331
  %v4340 = vunpack.c.l.b16 %v3332
  %v4341 = vunpack.c.h.b16 %v3332
  %v4342 = vunpack.c.l.b16 %v3333
  %v4343 = vunpack.c.h.b16 %v3333
  %v4344 = vunpack.c.l.b16 %v3334
  %v4345 = vunpack.c.h.b16 %v3334
  %v4346 = vunpack.c.l.b16 %v3335
  %v4347 = vunpack.c.h.b16 %v3335
  %v4348 = vunpack.c.l.b16 %v3336
  %v4349 = vunpack.c.h.b16 %v3336
  %v4350 = vunpack.c.l.b16 %v3337
  %v4351 = vunpack.c.h.b16 %v3337
  %v4352 = vunpack.c.l.b16 %v3338
  %v4353 = vunpack.c.h.b16 %v3338
  %v4354 = vunpack.c.l.b16 %v3339
  %v4355 = vunpack.c.h.b16 %v3339
  %v4356 = vunpack.c.l.b16 %v3340
  %v4357 = vunpack.c.h.b16 %v3340
  %v4358 = vunpack.c.l.b16 %v3341
  %v4359 = vunpack.c.h.b16 %v3341
  %v4360 = vunpack.c.l.b16 %v3342
  %v4361 = vunpack.c.h.b16 %v3342
  %v4362 = vunpack.c.l.b16 %v3343
  %v4363 = vunpack.c.h.b16 %v3343
  %v4364 = vunpack.c.l.b16 %v3344
  %v4365 = vunpack.c.h.b16 %v3344
  %v4366 = vunpack.c.l.b16 %v3345
  %v4367 = vunpack.c.h.b16 %v3345
  %v4368 = vunpack.c.l.b16 %v3346
  %v4369 = vunpack.c.h.b16 %v3346
  %v4370 = vunpack.c.l.b16 %v3347
  %v4371 = vunpack.c.h.b16 %v3347
  %v4372 = vunpack.c.l.b16 %v3348
  %v4373 = vunpack.c.h.b16 %v3348
  %v4374 = vunpack.c.l.b16 %v3349
  %v4375 = vunpack.c.h.b16 %v3349
  %v4376 = vunpack.c.l.b16 %v3350
  %v4377 = vunpack.c.h.b16 %v3350
  %v4378 = vunpack.c.l.b16 %v3351
  %v4379 = vunpack.c.h.b16 %v3351
  %v4380 = vunpack.c.l.b16 %v3352
  %v4381 = vunpack.c.h.b16 %v3352
  %v4382 = vunpack.c.l.b16 %v3353
  %v4383 = vunpack.c.h.b16 %v3353
  %v4384 = vunpack.c.l.b16 %v3354
  %v4385 = vunpack.c.h.b16 %v3354
  %v4386 = vunpack.c.l.b16 %v3355
  %v4387 = vunpack.c.h.b16 %v3355
  %v4388 = vunpack.c.l.b16 %v3356
  %v4389 = vunpack.c.h.b16 %v3356
  %v4390 = vunpack.c.l.b16 %v3357
  %v4391 = vunpack.c.h.b16 %v3357
  %v4392 = vunpack.c.l.b16 %v3358
  %v4393 = vunpack.c.h.b16 %v3358
  %v4394 = vunpack.c.l.b16 %v3359
  %v4395 = vunpack.c.h.b16 %v3359
  %v4396 = vunpack.c.l.b16 %v3360
  %v4397 = vunpack.c.h.b16 %v3360
  %v4398 = vunpack.c.l.b16 %v3361
  %v4399 = vunpack.c.h.b16 %v3361
  %v4400 = vunpack.c.l.b16 %v3362
  %v4401 = vunpack.c.h.b16 %v3362
  %v4402 = vunpack.c.l.b16 %v3363
  %v4403 = vunpack.c.h.b16 %v3363
  %v4404 = vunpack.c.l.b16 %v3364
  %v4405 = vunpack.c.h.b16 %v3364
  %v4406 = vunpack.c.l.b16 %v3365
  %v4407 = vunpack.c.h.b16 %v3365
  %v4408 = vunpack.c.l.b16 %v3366
  %v4409 = vunpack.c.h.b16 %v3366
  %v4410 = vunpack.c.l.b16 %v3367
  %v4411 = vunpack.c.h.b16 %v3367
  %v4412 = vunpack.c.l.b16 %v3368
  %v4413 = vunpack.c.h.b16 %v3368
  %v4414 = vunpack.c.l.b16 %v3369
  %v4415 = vunpack.c.h.b16 %v3369
  %v4416 = vunpack.c.l.b16 %v3370
  %v4417 = vunpack.c.h.b16 %v3370
  %v4418 = vunpack.c.l.b16 %v3371
  %v4419 = vunpack.c.h.b16 %v3371
  %v4420 = vunpack.c.l.b16 %v3372
  %v4421 = vunpack.c.h.b16 %v3372
  %v4422 = vunpack.c.l.b16 %v3373
  %v4423 = vunpack.c.h.b16 %v3373
  %v4424 = vunpack.c.l.b16 %v3374
  %v4425 = vunpack.c.h.b16 %v3374
  %v4426 = vunpack.c.l.b16 %v3375
  %v4427 = vunpack.c.h.b16 %v3375
  %v4428 = vunpack.c.l.b16 %v3376
  %v4429 = vunpack.c.h.b16 %v3376
  %v4430 = vunpack.c.l.b16 %v3377
  %v4431 = vunpack.c.h.b16 %v3377
  %v4432 = vunpack.c.l.b16 %v3378
  %v4433 = vunpack.c.h.b16 %v3378
  %v4434 = vunpack.c.l.b16 %v3379
  %v4435 = vunpack.c.h.b16 %v3379
  %v4436 = vunpack.c.l.b16 %v3380
  %v4437 = vunpack.c.h.b16 %v3380
  %v4438 = vunpack.c.l.b16 %v3381
  %v4439 = vunpack.c.h.b16 %v3381
  %v4440 = vunpack.c.l.b16 %v3382
  %v4441 = vunpack.c.h.b16 %v3382
  %v4442 = vunpack.c.l.b16 %v3383
  %v4443 = vunpack.c.h.b16 %v3383
  %v4444 = vunpack.c.l.b16 %v3384
  %v4445 = vunpack.c.h.b16 %v3384
  %v4446 = vunpack.c.l.b16 %v3385
  %v4447 = vunpack.c.h.b16 %v3385
  %v4448 = vunpack.c.l.b16 %v3386
  %v4449 = vunpack.c.h.b16 %v3386
  %v4450 = vunpack.c.l.b16 %v3387
  %v4451 = vunpack.c.h.b16 %v3387
  %v4452 = vunpack.c.l.b16 %v3388
  %v4453 = vunpack.c.h.b16 %v3388
  %v4454 = vunpack.c.l.b16 %v3389
  %v4455 = vunpack.c.h.b16 %v3389
  %v4456 = vunpack.c.l.b16 %v3390
  %v4457 = vunpack.c.h.b16 %v3390
  %v4458 = vunpack.c.l.b16 %v3391
  %v4459 = vunpack.c.h.b16 %v3391
  %v4460 = vunpack.c.l.b16 %v3392
  %v4461 = vunpack.c.h.b16 %v3392
  %v4462 = vunpack.c.l.b16 %v3393
  %v4463 = vunpack.c.h.b16 %v3393
  %v4464 = vunpack.c.l.b16 %v3394
  %v4465 = vunpack.c.h.b16 %v3394
  %v4466 = vunpack.c.l.b16 %v3395
  %v4467 = vunpack.c.h.b16 %v3395
  %v4468 = vunpack.c.l.b16 %v3396
  %v4469 = vunpack.c.h.b16 %v3396
  %v4470 = vunpack.c.l.b16 %v3397
  %v4471 = vunpack.c.h.b16 %v3397
  %v4472 = vunpack.c.l.b16 %v3398
  %v4473 = vunpack.c.h.b16 %v3398
  %v4474 = vunpack.c.l.b16 %v3399
  %v4475 = vunpack.c.h.b16 %v3399
  %v4476 = vunpack.c.l.b16 %v3400
  %v4477 = vunpack.c.h.b16 %v3400
  %v4478 = vunpack.c.l.b16 %v3401
  %v4479 = vunpack.c.h.b16 %v3401
  %v4480 = vunpack.c.l.b16 %v3402
  %v4481 = vunpack.c.h.b16 %v3402
  %v4482 = vunpack.c.l.b16 %v3403
  %v4483 = vunpack.c.h.b16 %v3403
  %v4484 = vunpack.c.l.b16 %v3404
  %v4485 = vunpack.c.h.b16 %v3404
  %v4486 = vunpack.c.l.b16 %v3405
  %v4487 = vunpack.c.h.b16 %v3405
  %v4488 = vunpack.c.l.b16 %v3406
  %v4489 = vunpack.c.h.b16 %v3406
  %v4490 = vunpack.c.l.b16 %v3407
  %v4491 = vunpack.c.h.b16 %v3407
  %v4492 = vunpack.c.l.b16 %v3408
  %v4493 = vunpack.c.h.b16 %v3408
  %v4494 = vunpack.c.l.b16 %v3409
  %v4495 = vunpack.c.h.b16 %v3409
  %v4496 = vunpack.c.l.b16 %v3410
  %v4497 = vunpack.c.h.b16 %v3410
  %v4498 = vunpack.c.l.b16 %v3411
  %v4499 = vunpack.c.h.b16 %v3411
  %v4500 = vunpack.c.l.b16 %v3412
  %v4501 = vunpack.c.h.b16 %v3412
  %v4502 = vunpack.c.l.b16 %v3413
  %v4503 = vunpack.c.h.b16 %v3413
  %v4504 = vunpack.c.l.b16 %v3414
  %v4505 = vunpack.c.h.b16 %v3414
  %v4506 = vunpack.c.l.b16 %v3415
  %v4507 = vunpack.c.h.b16 %v3415
  %v4508 = vunpack.c.l.b16 %v3416
  %v4509 = vunpack.c.h.b16 %v3416
  %v4510 = vunpack.c.l.b16 %v3417
  %v4511 = vunpack.c.h.b16 %v3417
  %v4512 = vunpack.c.l.b16 %v3418
  %v4513 = vunpack.c.h.b16 %v3418
  %v4514 = vunpack.c.l.b16 %v3419
  %v4515 = vunpack.c.h.b16 %v3419
  %v4516 = vunpack.c.l.b16 %v3420
  %v4517 = vunpack.c.h.b16 %v3420
  %v4518 = vunpack.c.l.b16 %v3421
  %v4519 = vunpack.c.h.b16 %v3421
  %v4520 = vunpack.c.l.b16 %v3422
  %v4521 = vunpack.c.h.b16 %v3422
  %v4522 = vunpack.c.l.b16 %v3423
  %v4523 = vunpack.c.h.b16 %v3423
  %v4524 = vunpack.c.l.b16 %v3424
  %v4525 = vunpack.c.h.b16 %v3424
  %v4526 = vunpack.c.l.b16 %v3425
  %v4527 = vunpack.c.h.b16 %v3425
  %v4528 = vunpack.c.l.b16 %v3426
  %v4529 = vunpack.c.h.b16 %v3426
  %v4530 = vunpack.c.l.b16 %v3427
  %v4531 = vunpack.c.h.b16 %v3427
  %v4532 = vunpack.c.l.b16 %v3428
  %v4533 = vunpack.c.h.b16 %v3428
  %v4534 = vunpack.c.l.b16 %v3429
  %v4535 = vunpack.c.h.b16 %v3429
  %v4536 = vunpack.c.l.b16 %v3430
  %v4537 = vunpack.c.h.b16 %v3430
  %v4538 = vunpack.c.l.b16 %v3431
  %v4539 = vunpack.c.h.b16 %v3431
  %v4540 = vunpack.c.l.b16 %v3432
  %v4541 = vunpack.c.h.b16 %v3432
  %v4542 = vunpack.c.l.b16 %v3433
  %v4543 = vunpack.c.h.b16 %v3433
  %v4544 = vunpack.c.l.b16 %v3434
  %v4545 = vunpack.c.h.b16 %v3434
  %v4546 = vunpack.c.l.b16 %v3435
  %v4547 = vunpack.c.h.b16 %v3435
  %v4548 = vunpack.c.l.b16 %v3436
  %v4549 = vunpack.c.h.b16 %v3436
  %v4550 = vunpack.c.l.b16 %v3437
  %v4551 = vunpack.c.h.b16 %v3437
  %v4552 = vunpack.c.l.b16 %v3438
  %v4553 = vunpack.c.h.b16 %v3438
  %v4554 = vunpack.c.l.b16 %v3439
  %v4555 = vunpack.c.h.b16 %v3439
  %v4556 = vunpack.c.l.b16 %v3440
  %v4557 = vunpack.c.h.b16 %v3440
  %v4558 = vunpack.c.l.b16 %v3441
  %v4559 = vunpack.c.h.b16 %v3441
  %v4560 = vunpack.c.l.b16 %v3442
  %v4561 = vunpack.c.h.b16 %v3442
  %v4562 = vunpack.c.l.b16 %v3443
  %v4563 = vunpack.c.h.b16 %v3443
  %v4564 = vunpack.c.l.b16 %v3444
  %v4565 = vunpack.c.h.b16 %v3444
  %v4566 = vunpack.c.l.b16 %v3445
  %v4567 = vunpack.c.h.b16 %v3445
  %v4568 = vunpack.c.l.b16 %v3446
  %v4569 = vunpack.c.h.b16 %v3446
  %v4570 = vunpack.c.l.b16 %v3447
  %v4571 = vunpack.c.h.b16 %v3447
  %v4572 = vunpack.c.l.b16 %v3448
  %v4573 = vunpack.c.h.b16 %v3448
  %v4574 = vunpack.c.l.b16 %v3449
  %v4575 = vunpack.c.h.b16 %v3449
  %v4576 = vunpack.c.l.b16 %v3450
  %v4577 = vunpack.c.h.b16 %v3450
  %v4578 = vunpack.c.l.b16 %v3451
  %v4579 = vunpack.c.h.b16 %v3451
  %v4580 = vunpack.c.l.b16 %v3452
  %v4581 = vunpack.c.h.b16 %v3452
  %v4582 = vunpack.c.l.b16 %v3453
  %v4583 = vunpack.c.h.b16 %v3453
  %v4584 = vunpack.c.l.b16 %v3454
  %v4585 = vunpack.c.h.b16 %v3454
  %v4586 = vunpack.c.l.b16 %v3455
  %v4587 = vunpack.c.h.b16 %v3455
  %v4588 = vunpack.c.l.b16 %v3456
  %v4589 = vunpack.c.h.b16 %v3456
  %v4590 = vunpack.c.l.b16 %v3457
  %v4591 = vunpack.c.h.b16 %v3457
  %v4592 = vunpack.c.l.b16 %v3458
  %v4593 = vunpack.c.h.b16 %v3458
  %v4594 = vunpack.c.l.b16 %v3459
  %v4595 = vunpack.c.h.b16 %v3459
  %v4596 = vunpack.c.l.b16 %v3460
  %v4597 = vunpack.c.h.b16 %v3460
  %v4598 = vunpack.c.l.b16 %v3461
  %v4599 = vunpack.c.h.b16 %v3461
  %v4600 = vunpack.c.l.b16 %v3462
  %v4601 = vunpack.c.h.b16 %v3462
  %v4602 = vunpack.c.l.b16 %v3463
  %v4603 = vunpack.c.h.b16 %v3463
  %v4604 = vunpack.c.l.b16 %v3464
  %v4605 = vunpack.c.h.b16 %v3464
  %v4606 = vunpack.c.l.b16 %v3465
  %v4607 = vunpack.c.h.b16 %v3465
  %v4608 = vunpack.c.l.b16 %v3466
  %v4609 = vunpack.c.h.b16 %v3466
  %v4610 = vunpack.c.l.b16 %v3467
  %v4611 = vunpack.c.h.b16 %v3467
  %v4612 = vunpack.c.l.b16 %v3468
  %v4613 = vunpack.c.h.b16 %v3468
  %v4614 = vunpack.c.l.b16 %v3469
  %v4615 = vunpack.c.h.b16 %v3469
  %v4616 = vunpack.c.l.b16 %v3470
  %v4617 = vunpack.c.h.b16 %v3470
  %v4618 = vunpack.c.l.b16 %v3471
  %v4619 = vunpack.c.h.b16 %v3471
  %v4620 = vunpack.c.l.b16 %v3472
  %v4621 = vunpack.c.h.b16 %v3472
  %v4622 = vunpack.c.l.b16 %v3473
  %v4623 = vunpack.c.h.b16 %v3473
  %v4624 = vunpack.c.l.b16 %v3474
  %v4625 = vunpack.c.h.b16 %v3474
  %v4626 = vunpack.c.l.b16 %v3475
  %v4627 = vunpack.c.h.b16 %v3475
  %v4628 = vunpack.c.l.b16 %v3476
  %v4629 = vunpack.c.h.b16 %v3476
  %v4630 = vunpack.c.l.b16 %v3477
  %v4631 = vunpack.c.h.b16 %v3477
  %v4632 = vunpack.c.l.b16 %v3478
  %v4633 = vunpack.c.h.b16 %v3478
  %v4634 = vunpack.c.l.b16 %v3479
  %v4635 = vunpack.c.h.b16 %v3479
  %v4636 = vunpack.c.l.b16 %v3480
  %v4637 = vunpack.c.h.b16 %v3480
  %v4638 = vunpack.c.l.b16 %v3481
  %v4639 = vunpack.c.h.b16 %v3481
  %v4640 = vunpack.c.l.b16 %v3482
  %v4641 = vunpack.c.h.b16 %v3482
  %v4642 = vunpack.c.l.b16 %v3483
  %v4643 = vunpack.c.h.b16 %v3483
  %v4644 = vunpack.c.l.b16 %v3484
  %v4645 = vunpack.c.h.b16 %v3484
  %v4646 = vunpack.c.l.b16 %v3485
  %v4647 = vunpack.c.h.b16 %v3485
  %v4648 = vunpack.c.l.b16 %v3486
  %v4649 = vunpack.c.h.b16 %v3486
  %v4650 = vunpack.c.l.b16 %v3487
  %v4651 = vunpack.c.h.b16 %v3487
  %v4652 = vunpack.c.l.b16 %v3488
  %v4653 = vunpack.c.h.b16 %v3488
  %v4654 = vunpack.c.l.b16 %v3489
  %v4655 = vunpack.c.h.b16 %v3489
  %v4656 = vunpack.c.l.b16 %v3490
  %v4657 = vunpack.c.h.b16 %v3490
  %v4658 = vunpack.c.l.b16 %v3491
  %v4659 = vunpack.c.h.b16 %v3491
  %v4660 = vunpack.c.l.b16 %v3492
  %v4661 = vunpack.c.h.b16 %v3492
  %v4662 = vunpack.c.l.b16 %v3493
  %v4663 = vunpack.c.h.b16 %v3493
  %v4664 = vunpack.c.l.b16 %v3494
  %v4665 = vunpack.c.h.b16 %v3494
  %v4666 = vunpack.c.l.b16 %v3495
  %v4667 = vunpack.c.h.b16 %v3495
  %v4668 = vunpack.c.l.b16 %v3496
  %v4669 = vunpack.c.h.b16 %v3496
  %v4670 = vunpack.c.l.b16 %v3497
  %v4671 = vunpack.c.h.b16 %v3497
  %v4672 = vunpack.c.l.b16 %v3498
  %v4673 = vunpack.c.h.b16 %v3498
  %v4674 = vunpack.c.l.b16 %v3499
  %v4675 = vunpack.c.h.b16 %v3499
  %v4676 = vunpack.c.l.b16 %v3500
  %v4677 = vunpack.c.h.b16 %v3500
  %v4678 = vunpack.c.l.b16 %v3501
  %v4679 = vunpack.c.h.b16 %v3501
  %v4680 = vunpack.c.l.b16 %v3502
  %v4681 = vunpack.c.h.b16 %v3502
  %v4682 = vunpack.c.l.b16 %v3503
  %v4683 = vunpack.c.h.b16 %v3503
  %v4684 = vunpack.c.l.b16 %v3504
  %v4685 = vunpack.c.h.b16 %v3504
  %v4686 = vunpack.c.l.b16 %v3505
  %v4687 = vunpack.c.h.b16 %v3505
  %v4688 = vunpack.c.l.b16 %v3506
  %v4689 = vunpack.c.h.b16 %v3506
  %v4690 = vunpack.c.l.b16 %v3507
  %v4691 = vunpack.c.h.b16 %v3507
  %v4692 = vpack.c.b16 %v3930, %v3924
  %v4693 = vpack.c.b16 %v3931, %v3925
  %v4694 = vpack.c.b16 %v3932, %v3926
  %v4695 = vpack.c.b16 %v3933, %v3927
  %v4696 = vpack.c.b16 %v3934, %v3928
  %v4697 = vpack.c.b16 %v3935, %v3929
  %v4698 = vpack.c.b16 %v3942, %v3936
  %v4699 = vpack.c.b16 %v3943, %v3937
  %v4700 = vpack.c.b16 %v3944, %v3938
  %v4701 = vpack.c.b16 %v3945, %v3939
  %v4702 = vpack.c.b16 %v3946, %v3940
  %v4703 = vpack.c.b16 %v3947, %v3941
  %v4704 = vpack.c.b16 %v3954, %v3948
  %v4705 = vpack.c.b16 %v3955, %v3949
  %v4706 = vpack.c.b16 %v3956, %v3950
  %v4707 = vpack.c.b16 %v3957, %v3951
  %v4708 = vpack.c.b16 %v3958, %v3952
  %v4709 = vpack.c.b16 %v3959, %v3953
  %v4710 = vpack.c.b16 %v3966, %v3960
  %v4711 = vpack.c.b16 %v3967, %v3961
  %v4712 = vpack.c.b16 %v3968, %v3962
  %v4713 = vpack.c.b16 %v3969, %v3963
  %v4714 = vpack.c.b16 %v3970, %v3964
  %v4715 = vpack.c.b16 %v3971, %v3965
  %v4716 = vpack.c.b16 %v3978, %v3972
  %v4717 = vpack.c.b16 %v3979, %v3973
  %v4718 = vpack.c.b16 %v3980, %v3974
  %v4719 = vpack.c.b16 %v3981, %v3975
  %v4720 = vpack.c.b16 %v3982, %v3976
  %v4721 = vpack.c.b16 %v3983, %v3977
  %v4722 = vpack.c.b16 %v3990, %v3984
  %v4723 = vpack.c.b16 %v3991, %v3985
  %v4724 = vpack.c.b16 %v3992, %v3986
  %v4725 = vpack.c.b16 %v3993, %v3987
  %v4726 = vpack.c.b16 %v3994, %v3988
  %v4727 = vpack.c.b16 %v3995, %v3989
  %v4728 = vpack.c.b16 %v4002, %v3996
  %v4729 = vpack.c.b16 %v4003, %v3997
  %v4730 = vpack.c.b16 %v4004, %v3998
  %v4731 = vpack.c.b16 %v4005, %v3999
  %v4732 = vpack.c.b16 %v4006, %v4000
  %v4733 = vpack.c.b16 %v4007, %v4001
  %v4734 = vpack.c.b16 %v4014, %v4008
  %v4735 = vpack.c.b16 %v4015, %v4009
  %v4736 = vpack.c.b16 %v4016, %v4010
  %v4737 = vpack.c.b16 %v4017, %v4011
  %v4738 = vpack.c.b16 %v4018, %v4012
  %v4739 = vpack.c.b16 %v4019, %v4013
  %v4740 = vpack.c.b16 %v4026, %v4020
  %v4741 = vpack.c.b16 %v4027, %v4021
  %v4742 = vpack.c.b16 %v4028, %v4022
  %v4743 = vpack.c.b16 %v4029, %v4023
  %v4744 = vpack.c.b16 %v4030, %v4024
  %v4745 = vpack.c.b16 %v4031, %v4025
  %v4746 = vpack.c.b16 %v4038, %v4032
  %v4747 = vpack.c.b16 %v4039, %v4033
  %v4748 = vpack.c.b16 %v4040, %v4034
  %v4749 = vpack.c.b16 %v4041, %v4035
  %v4750 = vpack.c.b16 %v4042, %v4036
  %v4751 = vpack.c.b16 %v4043, %v4037
  %v4752 = vpack.c.b16 %v4050, %v4044
  %v4753 = vpack.c.b16 %v4051, %v4045
  %v4754 = vpack.c.b16 %v4052, %v4046
  %v4755 = vpack.c.b16 %v4053, %v4047
  %v4756 = vpack.c.b16 %v4054, %v4048
  %v4757 = vpack.c.b16 %v4055, %v4049
  %v4758 = vpack.c.b16 %v4062, %v4056
  %v4759 = vpack.c.b16 %v4063, %v4057
  %v4760 = vpack.c.b16 %v4064, %v4058
  %v4761 = vpack.c.b16 %v4065, %v4059
  %v4762 = vpack.c.b16 %v4066, %v4060
  %v4763 = vpack.c.b16 %v4067, %v4061
  %v4764 = vpack.c.b16 %v4074, %v4068
  %v4765 = vpack.c.b16 %v4075, %v4069
  %v4766 = vpack.c.b16 %v4076, %v4070
  %v4767 = vpack.c.b16 %v4077, %v4071
  %v4768 = vpack.c.b16 %v4078, %v4072
  %v4769 = vpack.c.b16 %v4079, %v4073
  %v4770 = vpack.c.b16 %v4086, %v4080
  %v4771 = vpack.c.b16 %v4087, %v4081
  %v4772 = vpack.c.b16 %v4088, %v4082
  %v4773 = vpack.c.b16 %v4089, %v4083
  %v4774 = vpack.c.b16 %v4090, %v4084
  %v4775 = vpack.c.b16 %v4091, %v4085
  %v4776 = vpack.c.b16 %v4098, %v4092
  %v4777 = vpack.c.b16 %v4099, %v4093
  %v4778 = vpack.c.b16 %v4100, %v4094
  %v4779 = vpack.c.b16 %v4101, %v4095
  %v4780 = vpack.c.b16 %v4102, %v4096
  %v4781 = vpack.c.b16 %v4103, %v4097
  %v4782 = vpack.c.b16 %v4110, %v4104
  %v4783 = vpack.c.b16 %v4111, %v4105
  %v4784 = vpack.c.b16 %v4112, %v4106
  %v4785 = vpack.c.b16 %v4113, %v4107
  %v4786 = vpack.c.b16 %v4114, %v4108
  %v4787 = vpack.c.b16 %v4115, %v4109
  %v4788 = vpack.c.b16 %v4122, %v4116
  %v4789 = vpack.c.b16 %v4123, %v4117
  %v4790 = vpack.c.b16 %v4124, %v4118
  %v4791 = vpack.c.b16 %v4125, %v4119
  %v4792 = vpack.c.b16 %v4126, %v4120
  %v4793 = vpack.c.b16 %v4127, %v4121
  %v4794 = vpack.c.b16 %v4134, %v4128
  %v4795 = vpack.c.b16 %v4135, %v4129
  %v4796 = vpack.c.b16 %v4136, %v4130
  %v4797 = vpack.c.b16 %v4137, %v4131
  %v4798 = vpack.c.b16 %v4138, %v4132
  %v4799 = vpack.c.b16 %v4139, %v4133
  %v4800 = vpack.c.b16 %v4146, %v4140
  %v4801 = vpack.c.b16 %v4147, %v4141
  %v4802 = vpack.c.b16 %v4148, %v4142
  %v4803 = vpack.c.b16 %v4149, %v4143
  %v4804 = vpack.c.b16 %v4150, %v4144
  %v4805 = vpack.c.b16 %v4151, %v4145
  %v4806 = vpack.c.b16 %v4158, %v4152
  %v4807 = vpack.c.b16 %v4159, %v4153
  %v4808 = vpack.c.b16 %v4160, %v4154
  %v4809 = vpack.c.b16 %v4161, %v4155
  %v4810 = vpack.c.b16 %v4162, %v4156
  %v4811 = vpack.c.b16 %v4163, %v4157
  %v4812 = vpack.c.b16 %v4170, %v4164
  %v4813 = vpack.c.b16 %v4171, %v4165
  %v4814 = vpack.c.b16 %v4172, %v4166
  %v4815 = vpack.c.b16 %v4173, %v4167
  %v4816 = vpack.c.b16 %v4174, %v4168
  %v4817 = vpack.c.b16 %v4175, %v4169
  %v4818 = vpack.c.b16 %v4182, %v4176
  %v4819 = vpack.c.b16 %v4183, %v4177
  %v4820 = vpack.c.b16 %v4184, %v4178
  %v4821 = vpack.c.b16 %v4185, %v4179
  %v4822 = vpack.c.b16 %v4186, %v4180
  %v4823 = vpack.c.b16 %v4187, %v4181
  %v4824 = vpack.c.b16 %v4194, %v4188
  %v4825 = vpack.c.b16 %v4195, %v4189
  %v4826 = vpack.c.b16 %v4196, %v4190
  %v4827 = vpack.c.b16 %v4197, %v4191
  %v4828 = vpack.c.b16 %v4198, %v4192
  %v4829 = vpack.c.b16 %v4199, %v4193
  %v4830 = vpack.c.b16 %v4206, %v4200
  %v4831 = vpack.c.b16 %v4207, %v4201
  %v4832 = vpack.c.b16 %v4208, %v4202
  %v4833 = vpack.c.b16 %v4209, %v4203
  %v4834 = vpack.c.b16 %v4210, %v4204
  %v4835 = vpack.c.b16 %v4211, %v4205
  %v4836 = vpack.c.b16 %v4218, %v4212
  %v4837 = vpack.c.b16 %v4219, %v4213
  %v4838 = vpack.c.b16 %v4220, %v4214
  %v4839 = vpack.c.b16 %v4221, %v4215
  %v4840 = vpack.c.b16 %v4222, %v4216
  %v4841 = vpack.c.b16 %v4223, %v4217
  %v4842 = vpack.c.b16 %v4230, %v4224
  %v4843 = vpack.c.b16 %v4231, %v4225
  %v4844 = vpack.c.b16 %v4232, %v4226
  %v4845 = vpack.c.b16 %v4233, %v4227
  %v4846 = vpack.c.b16 %v4234, %v4228
  %v4847 = vpack.c.b16 %v4235, %v4229
  %v4848 = vpack.c.b16 %v4242, %v4236
  %v4849 = vpack.c.b16 %v4243, %v4237
  %v4850 = vpack.c.b16 %v4244, %v4238
  %v4851 = vpack.c.b16 %v4245, %v4239
  %v4852 = vpack.c.b16 %v4246, %v4240
  %v4853 = vpack.c.b16 %v4247, %v4241
  %v4854 = vpack.c.b16 %v4254, %v4248
  %v4855 = vpack.c.b16 %v4255, %v4249
  %v4856 = vpack.c.b16 %v4256, %v4250
  %v4857 = vpack.c.b16 %v4257, %v4251
  %v4858 = vpack.c.b16 %v4258, %v4252
  %v4859 = vpack.c.b16 %v4259, %v4253
  %v4860 = vpack.c.b16 %v4266, %v4260
  %v4861 = vpack.c.b16 %v4267, %v4261
  %v4862 = vpack.c.b16 %v4268, %v4262
  %v4863 = vpack.c.b16 %v4269, %v4263
  %v4864 = vpack.c.b16 %v4270, %v4264
  %v4865 = vpack.c.b16 %v4271, %v4265
  %v4866 = vpack.c.b16 %v4278, %v4272
  %v4867 = vpack.c.b16 %v4279, %v4273
  %v4868 = vpack.c.b16 %v4280, %v4274
  %v4869 = vpack.c.b16 %v4281, %v4275
  %v4870 = vpack.c.b16 %v4282, %v4276
  %v4871 = vpack.c.b16 %v4283, %v4277
  %v4872 = vpack.c.b16 %v4290, %v4284
  %v4873 = vpack.c.b16 %v4291, %v4285
  %v4874 = vpack.c.b16 %v4292, %v4286
  %v4875 = vpack.c.b16 %v4293, %v4287
  %v4876 = vpack.c.b16 %v4294, %v4288
  %v4877 = vpack.c.b16 %v4295, %v4289
  %v4878 = vpack.c.b16 %v4302, %v4296
  %v4879 = vpack.c.b16 %v4303, %v4297
  %v4880 = vpack.c.b16 %v4304, %v4298
  %v4881 = vpack.c.b16 %v4305, %v4299
  %v4882 = vpack.c.b16 %v4306, %v4300
  %v4883 = vpack.c.b16 %v4307, %v4301
  %v4884 = vpack.c.b16 %v4314, %v4308
  %v4885 = vpack.c.b16 %v4315, %v4309
  %v4886 = vpack.c.b16 %v4316, %v4310
  %v4887 = vpack.c.b16 %v4317, %v4311
  %v4888 = vpack.c.b16 %v4318, %v4312
  %v4889 = vpack.c.b16 %v4319, %v4313
  %v4890 = vpack.c.b16 %v4326, %v4320
  %v4891 = vpack.c.b16 %v4327, %v4321
  %v4892 = vpack.c.b16 %v4328, %v4322
  %v4893 = vpack.c.b16 %v4329, %v4323
  %v4894 = vpack.c.b16 %v4330, %v4324
  %v4895 = vpack.c.b16 %v4331, %v4325
  %v4896 = vpack.c.b16 %v4338, %v4332
  %v4897 = vpack.c.b16 %v4339, %v4333
  %v4898 = vpack.c.b16 %v4340, %v4334
  %v4899 = vpack.c.b16 %v4341, %v4335
  %v4900 = vpack.c.b16 %v4342, %v4336
  %v4901 = vpack.c.b16 %v4343, %v4337
  %v4902 = vpack.c.b16 %v4350, %v4344
  %v4903 = vpack.c.b16 %v4351, %v4345
  %v4904 = vpack.c.b16 %v4352, %v4346
  %v4905 = vpack.c.b16 %v4353, %v4347
  %v4906 = vpack.c.b16 %v4354, %v4348
  %v4907 = vpack.c.b16 %v4355, %v4349
  %v4908 = vpack.c.b16 %v4362, %v4356
  %v4909 = vpack.c.b16 %v4363, %v4357
  %v4910 = vpack.c.b16 %v4364, %v4358
  %v4911 = vpack.c.b16 %v4365, %v4359
  %v4912 = vpack.c.b16 %v4366, %v4360
  %v4913 = vpack.c.b16 %v4367, %v4361
  %v4914 = vpack.c.b16 %v4374, %v4368
  %v4915 = vpack.c.b16 %v4375, %v4369
  %v4916 = vpack.c.b16 %v4376, %v4370
  %v4917 = vpack.c.b16 %v4377, %v4371
  %v4918 = vpack.c.b16 %v4378, %v4372
  %v4919 = vpack.c.b16 %v4379, %v4373
  %v4920 = vpack.c.b16 %v4386, %v4380
  %v4921 = vpack.c.b16 %v4387, %v4381
  %v4922 = vpack.c.b16 %v4388, %v4382
  %v4923 = vpack.c.b16 %v4389, %v4383
  %v4924 = vpack.c.b16 %v4390, %v4384
  %v4925 = vpack.c.b16 %v4391, %v4385
  %v4926 = vpack.c.b16 %v4398, %v4392
  %v4927 = vpack.c.b16 %v4399, %v4393
  %v4928 = vpack.c.b16 %v4400, %v4394
  %v4929 = vpack.c.b16 %v4401, %v4395
  %v4930 = vpack.c.b16 %v4402, %v4396
  %v4931 = vpack.c.b16 %v4403, %v4397
  %v4932 = vpack.c.b16 %v4410, %v4404
  %v4933 = vpack.c.b16 %v4411, %v4405
  %v4934 = vpack.c.b16 %v4412, %v4406
  %v4935 = vpack.c.b16 %v4413, %v4407
  %v4936 = vpack.c.b16 %v4414, %v4408
  %v4937 = vpack.c.b16 %v4415, %v4409
  %v4938 = vpack.c.b16 %v4422, %v4416
  %v4939 = vpack.c.b16 %v4423, %v4417
  %v4940 = vpack.c.b16 %v4424, %v4418
  %v4941 = vpack.c.b16 %v4425, %v4419
  %v4942 = vpack.c.b16 %v4426, %v4420
  %v4943 = vpack.c.b16 %v4427, %v4421
  %v4944 = vpack.c.b16 %v4434, %v4428
  %v4945 = vpack.c.b16 %v4435, %v4429
  %v4946 = vpack.c.b16 %v4436, %v4430
  %v4947 = vpack.c.b16 %v4437, %v4431
  %v4948 = vpack.c.b16 %v4438, %v4432
  %v4949 = vpack.c.b16 %v4439, %v4433
  %v4950 = vpack.c.b16 %v4446, %v4440
  %v4951 = vpack.c.b16 %v4447, %v4441
  %v4952 = vpack.c.b16 %v4448, %v4442
  %v4953 = vpack.c.b16 %v4449, %v4443
  %v4954 = vpack.c.b16 %v4450, %v4444
  %v4955 = vpack.c.b16 %v4451, %v4445
  %v4956 = vpack.c.b16 %v4458, %v4452
  %v4957 = vpack.c.b16 %v4459, %v4453
  %v4958 = vpack.c.b16 %v4460, %v4454
  %v4959 = vpack.c.b16 %v4461, %v4455
  %v4960 = vpack.c.b16 %v4462, %v4456
  %v4961 = vpack.c.b16 %v4463, %v4457
  %v4962 = vpack.c.b16 %v4470, %v4464
  %v4963 = vpack.c.b16 %v4471, %v4465
  %v4964 = vpack.c.b16 %v4472, %v4466
  %v4965 = vpack.c.b16 %v4473, %v4467
  %v4966 = vpack.c.b16 %v4474, %v4468
  %v4967 = vpack.c.b16 %v4475, %v4469
  %v4968 = vpack.c.b16 %v4482, %v4476
  %v4969 = vpack.c.b16 %v4483, %v4477
  %v4970 = vpack.c.b16 %v4484, %v4478
  %v4971 = vpack.c.b16 %v4485, %v4479
  %v4972 = vpack.c.b16 %v4486, %v4480
  %v4973 = vpack.c.b16 %v4487, %v4481
  %v4974 = vpack.c.b16 %v4494, %v4488
  %v4975 = vpack.c.b16 %v4495, %v4489
  %v4976 = vpack.c.b16 %v4496, %v4490
  %v4977 = vpack.c.b16 %v4497, %v4491
  %v4978 = vpack.c.b16 %v4498, %v4492
  %v4979 = vpack.c.b16 %v4499, %v4493
  %v4980 = vpack.c.b16 %v4506, %v4500
  %v4981 = vpack.c.b16 %v4507, %v4501
  %v4982 = vpack.c.b16 %v4508, %v4502
  %v4983 = vpack.c.b16 %v4509, %v4503
  %v4984 = vpack.c.b16 %v4510, %v4504
  %v4985 = vpack.c.b16 %v4511, %v4505
  %v4986 = vpack.c.b16 %v4518, %v4512
  %v4987 = vpack.c.b16 %v4519, %v4513
  %v4988 = vpack.c.b16 %v4520, %v4514
  %v4989 = vpack.c.b16 %v4521, %v4515
  %v4990 = vpack.c.b16 %v4522, %v4516
  %v4991 = vpack.c.b16 %v4523, %v4517
  %v4992 = vpack.c.b16 %v4530, %v4524
  %v4993 = vpack.c.b16 %v4531, %v4525
  %v4994 = vpack.c.b16 %v4532, %v4526
  %v4995 = vpack.c.b16 %v4533, %v4527
  %v4996 = vpack.c.b16 %v4534, %v4528
  %v4997 = vpack.c.b16 %v4535, %v4529
  %v4998 = vpack.c.b16 %v4542, %v4536
  %v4999 = vpack.c.b16 %v4543, %v4537
  %v5000 = vpack.c.b16 %v4544, %v4538
  %v5001 = vpack.c.b16 %v4545, %v4539
  %v5002 = vpack.c.b16 %v4546, %v4540
  %v5003 = vpack.c.b16 %v4547, %v4541
  %v5004 = vpack.c.b16 %v4554, %v4548
  %v5005 = vpack.c.b16 %v4555, %v4549
  %v5006 = vpack.c.b16 %v4556, %v4550
  %v5007 = vpack.c.b16 %v4557, %v4551
  %v5008 = vpack.c.b16 %v4558, %v4552
  %v5009 = vpack.c.b16 %v4559, %v4553
  %v5010 = vpack.c.b16 %v4566, %v4560
  %v5011 = vpack.c.b16 %v4567, %v4561
  %v5012 = vpack.c.b16 %v4568, %v4562
  %v5013 = vpack.c.b16 %v4569, %v4563
  %v5014 = vpack.c.b16 %v4570, %v4564
  %v5015 = vpack.c.b16 %v4571, %v4565
  %v5016 = vpack.c.b16 %v4578, %v4572
  %v5017 = vpack.c.b16 %v4579, %v4573
  %v5018 = vpack.c.b16 %v4580, %v4574
  %v5019 = vpack.c.b16 %v4581, %v4575
  %v5020 = vpack.c.b16 %v4582, %v4576
  %v5021 = vpack.c.b16 %v4583, %v4577
  %v5022 = vpack.c.b16 %v4590, %v4584
  %v5023 = vpack.c.b16 %v4591, %v4585
  %v5024 = vpack.c.b16 %v4592, %v4586
  %v5025 = vpack.c.b16 %v4593, %v4587
  %v5026 = vpack.c.b16 %v4594, %v4588
  %v5027 = vpack.c.b16 %v4595, %v4589
  %v5028 = vpack.c.b16 %v4602, %v4596
  %v5029 = vpack.c.b16 %v4603, %v4597
  %v5030 = vpack.c.b16 %v4604, %v4598
  %v5031 = vpack.c.b16 %v4605, %v4599
  %v5032 = vpack.c.b16 %v4606, %v4600
  %v5033 = vpack.c.b16 %v4607, %v4601
  %v5034 = vpack.c.b16 %v4614, %v4608
  %v5035 = vpack.c.b16 %v4615, %v4609
  %v5036 = vpack.c.b16 %v4616, %v4610
  %v5037 = vpack.c.b16 %v4617, %v4611
  %v5038 = vpack.c.b16 %v4618, %v4612
  %v5039 = vpack.c.b16 %v4619, %v4613
  %v5040 = vpack.c.b16 %v4626, %v4620
  %v5041 = vpack.c.b16 %v4627, %v4621
  %v5042 = vpack.c.b16 %v4628, %v4622
  %v5043 = vpack.c.b16 %v4629, %v4623
  %v5044 = vpack.c.b16 %v4630, %v4624
  %v5045 = vpack.c.b16 %v4631, %v4625
  %v5046 = vpack.c.b16 %v4638, %v4632
  %v5047 = vpack.c.b16 %v4639, %v4633
  %v5048 = vpack.c.b16 %v4640, %v4634
  %v5049 = vpack.c.b16 %v4641, %v4635
  %v5050 = vpack.c.b16 %v4642, %v4636
  %v5051 = vpack.c.b16 %v4643, %v4637
  %v5052 = vpack.c.b16 %v4650, %v4644
  %v5053 = vpack.c.b16 %v4651, %v4645
  %v5054 = vpack.c.b16 %v4652, %v4646
  %v5055 = vpack.c.b16 %v4653, %v4647
  %v5056 = vpack.c.b16 %v4654, %v4648
  %v5057 = vpack.c.b16 %v4655, %v4649
  %v5058 = vpack.c.b16 %v4662, %v4656
  %v5059 = vpack.c.b16 %v4663, %v4657
  %v5060 = vpack.c.b16 %v4664, %v4658
  %v5061 = vpack.c.b16 %v4665, %v4659
  %v5062 = vpack.c.b16 %v4666, %v4660
  %v5063 = vpack.c.b16 %v4667, %v4661
  %v5064 = vpack.c.b16 %v4674, %v4668
  %v5065 = vpack.c.b16 %v4675, %v4669
  %v5066 = vpack.c.b16 %v4676, %v4670
  %v5067 = vpack.c.b16 %v4677, %v4671
  %v5068 = vpack.c.b16 %v4678, %v4672
  %v5069 = vpack.c.b16 %v4679, %v4673
  %v5070 = vpack.c.b16 %v4686, %v4680
  %v5071 = vpack.c.b16 %v4687, %v4681
  %v5072 = vpack.c.b16 %v4688, %v4682
  %v5073 = vpack.c.b16 %v4689, %v4683
  %v5074 = vpack.c.b16 %v4690, %v4684
  %v5075 = vpack.c.b16 %v4691, %v4685
  %5460 = vmatprep.subr.bf16.mxu0 %v4735
  %5461 = vmatpush1.bf16.msra.mxu0 %v4734
  %5462 = vmatprep.subr.bf16.mxu0 %v4729
  %5463 = vmatpush1.bf16.msra.mxu0 %v4728
  %5464 = vmatprep.subr.bf16.mxu0 %v4723
  %5465 = vmatpush1.bf16.msra.mxu0 %v4722
  %5466 = vmatprep.subr.bf16.mxu0 %v4717
  %5467 = vmatpush1.bf16.msra.mxu0 %v4716
  %5468 = vmatprep.subr.bf16.mxu0 %v4711
  %5469 = vmatpush1.bf16.msra.mxu0 %v4710
  %5470 = vmatprep.subr.bf16.mxu0 %v4705
  %5471 = vmatpush1.bf16.msra.mxu0 %v4704
  %5472 = vmatprep.subr.bf16.mxu0 %v4699
  %5473 = vmatpush1.bf16.msra.mxu0 %v4698
  %5474 = vmatprep.subr.bf16.mxu0 %v4693
  %5475 = vmatpush1.bf16.msra.mxu0 %v4692
  %5476 = vmatprep.subr.bf16.mxu0 %v4783
  %5477 = vmatpush2.bf16.msra.mxu0 %v4782
  %5478 = vmatprep.subr.bf16.mxu0 %v4777
  %5479 = vmatpush2.bf16.msra.mxu0 %v4776
  %5480 = vmatprep.subr.bf16.mxu0 %v4771
  %5481 = vmatpush2.bf16.msra.mxu0 %v4770
  %5482 = vmatprep.subr.bf16.mxu0 %v4765
  %5483 = vmatpush2.bf16.msra.mxu0 %v4764
  %5484 = vmatprep.subr.bf16.mxu0 %v4759
  %5485 = vmatpush2.bf16.msra.mxu0 %v4758
  %5486 = vmatprep.subr.bf16.mxu0 %v4753
  %5487 = vmatpush2.bf16.msra.mxu0 %v4752
  %5488 = vmatprep.subr.bf16.mxu0 %v4747
  %5489 = vmatpush2.bf16.msra.mxu0 %v4746
  %5490 = vmatprep.subr.bf16.mxu0 %v4741
  %5491 = vmatpush2.bf16.msra.mxu0 %v4740
  %5492 = vmatprep.mubr.bf16.mxu0 %v3117
  %5493 = vmatmul.mubr.bf16.gmra.mxu0 %v3116
  %v5494 = vpop.f32.mrf.mxu0
  %v5495 = vadd.f32 %v3513, %v5494
  %v5496 = vpop.f32.mrf.mxu0
  %v5497 = vadd.f32 %v3517, %v5496
  %v5498 = vpop.f32.mrf.mxu0
  %v5499 = vadd.f32 %v3513, %v5498
  %v5500 = vpop.f32.mrf.mxu0
  %v5501 = vadd.f32 %v3517, %v5500
  %5502 = vdwg.mxu0
  %5503 = vmatprep.subr.bf16.mxu0 %v4831
  %5504 = vmatpush1.bf16.msra.mxu0 %v4830
  %5505 = vmatprep.subr.bf16.mxu0 %v4825
  %5506 = vmatpush1.bf16.msra.mxu0 %v4824
  %5507 = vmatprep.subr.bf16.mxu0 %v4819
  %5508 = vmatpush1.bf16.msra.mxu0 %v4818
  %5509 = vmatprep.subr.bf16.mxu0 %v4813
  %5510 = vmatpush1.bf16.msra.mxu0 %v4812
  %5511 = vmatprep.subr.bf16.mxu0 %v4807
  %5512 = vmatpush1.bf16.msra.mxu0 %v4806
  %5513 = vmatprep.subr.bf16.mxu0 %v4801
  %5514 = vmatpush1.bf16.msra.mxu0 %v4800
  %5515 = vmatprep.subr.bf16.mxu0 %v4795
  %5516 = vmatpush1.bf16.msra.mxu0 %v4794
  %5517 = vmatprep.subr.bf16.mxu0 %v4789
  %5518 = vmatpush1.bf16.msra.mxu0 %v4788
  %5519 = vmatprep.subr.bf16.mxu0 %v4879
  %5520 = vmatpush2.bf16.msra.mxu0 %v4878
  %5521 = vmatprep.subr.bf16.mxu0 %v4873
  %5522 = vmatpush2.bf16.msra.mxu0 %v4872
  %5523 = vmatprep.subr.bf16.mxu0 %v4867
  %5524 = vmatpush2.bf16.msra.mxu0 %v4866
  %5525 = vmatprep.subr.bf16.mxu0 %v4861
  %5526 = vmatpush2.bf16.msra.mxu0 %v4860
  %5527 = vmatprep.subr.bf16.mxu0 %v4855
  %5528 = vmatpush2.bf16.msra.mxu0 %v4854
  %5529 = vmatprep.subr.bf16.mxu0 %v4849
  %5530 = vmatpush2.bf16.msra.mxu0 %v4848
  %5531 = vmatprep.subr.bf16.mxu0 %v4843
  %5532 = vmatpush2.bf16.msra.mxu0 %v4842
  %5533 = vmatprep.subr.bf16.mxu0 %v4837
  %5534 = vmatpush2.bf16.msra.mxu0 %v4836
  %5535 = vmatprep.mubr.bf16.mxu0 %v3119
  %5536 = vmatmul.mubr.bf16.gmra.mxu0 %v3118
  %v5537 = vpop.f32.mrf.mxu0
  %v5538 = vadd.f32 %v5495, %v5537
  %v5539 = vpop.f32.mrf.mxu0
  %v5540 = vadd.f32 %v5497, %v5539
  %v5541 = vpop.f32.mrf.mxu0
  %v5542 = vadd.f32 %v5499, %v5541
  %v5543 = vpop.f32.mrf.mxu0
  %v5544 = vadd.f32 %v5501, %v5543
  %5545 = vdwg.mxu0
  %5546 = vmatprep.subr.bf16.mxu0 %v4927
  %5547 = vmatpush1.bf16.msra.mxu0 %v4926
  %5548 = vmatprep.subr.bf16.mxu0 %v4921
  %5549 = vmatpush1.bf16.msra.mxu0 %v4920
  %5550 = vmatprep.subr.bf16.mxu0 %v4915
  %5551 = vmatpush1.bf16.msra.mxu0 %v4914
  %5552 = vmatprep.subr.bf16.mxu0 %v4909
  %5553 = vmatpush1.bf16.msra.mxu0 %v4908
  %5554 = vmatprep.subr.bf16.mxu0 %v4903
  %5555 = vmatpush1.bf16.msra.mxu0 %v4902
  %5556 = vmatprep.subr.bf16.mxu0 %v4897
  %5557 = vmatpush1.bf16.msra.mxu0 %v4896
  %5558 = vmatprep.subr.bf16.mxu0 %v4891
  %5559 = vmatpush1.bf16.msra.mxu0 %v4890
  %5560 = vmatprep.subr.bf16.mxu0 %v4885
  %5561 = vmatpush1.bf16.msra.mxu0 %v4884
  %5562 = vmatprep.subr.bf16.mxu0 %v4975
  %5563 = vmatpush2.bf16.msra.mxu0 %v4974
  %5564 = vmatprep.subr.bf16.mxu0 %v4969
  %5565 = vmatpush2.bf16.msra.mxu0 %v4968
  %5566 = vmatprep.subr.bf16.mxu0 %v4963
  %5567 = vmatpush2.bf16.msra.mxu0 %v4962
  %5568 = vmatprep.subr.bf16.mxu0 %v4957
  %5569 = vmatpush2.bf16.msra.mxu0 %v4956
  %5570 = vmatprep.subr.bf16.mxu0 %v4951
  %5571 = vmatpush2.bf16.msra.mxu0 %v4950
  %5572 = vmatprep.subr.bf16.mxu0 %v4945
  %5573 = vmatpush2.bf16.msra.mxu0 %v4944
  %5574 = vmatprep.subr.bf16.mxu0 %v4939
  %5575 = vmatpush2.bf16.msra.mxu0 %v4938
  %5576 = vmatprep.subr.bf16.mxu0 %v4933
  %5577 = vmatpush2.bf16.msra.mxu0 %v4932
  %5578 = vmatprep.mubr.bf16.mxu0 %v3121
  %5579 = vmatmul.mubr.bf16.gmra.mxu0 %v3120
  %v5580 = vpop.f32.mrf.mxu0
  %v5581 = vadd.f32 %v5538, %v5580
  %v5582 = vpop.f32.mrf.mxu0
  %v5583 = vadd.f32 %v5540, %v5582
  %v5584 = vpop.f32.mrf.mxu0
  %v5585 = vadd.f32 %v5542, %v5584
  %v5586 = vpop.f32.mrf.mxu0
  %v5587 = vadd.f32 %v5544, %v5586
  %5588 = vdwg.mxu0
  %5589 = vmatprep.subr.bf16.mxu0 %v5023
  %5590 = vmatpush1.bf16.msra.mxu0 %v5022
  %5591 = vmatprep.subr.bf16.mxu0 %v5017
  %5592 = vmatpush1.bf16.msra.mxu0 %v5016
  %5593 = vmatprep.subr.bf16.mxu0 %v5011
  %5594 = vmatpush1.bf16.msra.mxu0 %v5010
  %5595 = vmatprep.subr.bf16.mxu0 %v5005
  %5596 = vmatpush1.bf16.msra.mxu0 %v5004
  %5597 = vmatprep.subr.bf16.mxu0 %v4999
  %5598 = vmatpush1.bf16.msra.mxu0 %v4998
  %5599 = vmatprep.subr.bf16.mxu0 %v4993
  %5600 = vmatpush1.bf16.msra.mxu0 %v4992
  %5601 = vmatprep.subr.bf16.mxu0 %v4987
  %5602 = vmatpush1.bf16.msra.mxu0 %v4986
  %5603 = vmatprep.subr.bf16.mxu0 %v4981
  %5604 = vmatpush1.bf16.msra.mxu0 %v4980
  %5605 = vmatprep.subr.bf16.mxu0 %v5071
  %5606 = vmatpush2.bf16.msra.mxu0 %v5070
  %5607 = vmatprep.subr.bf16.mxu0 %v5065
  %5608 = vmatpush2.bf16.msra.mxu0 %v5064
  %5609 = vmatprep.subr.bf16.mxu0 %v5059
  %5610 = vmatpush2.bf16.msra.mxu0 %v5058
  %5611 = vmatprep.subr.bf16.mxu0 %v5053
  %5612 = vmatpush2.bf16.msra.mxu0 %v5052
  %5613 = vmatprep.subr.bf16.mxu0 %v5047
  %5614 = vmatpush2.bf16.msra.mxu0 %v5046
  %5615 = vmatprep.subr.bf16.mxu0 %v5041
  %5616 = vmatpush2.bf16.msra.mxu0 %v5040
  %5617 = vmatprep.subr.bf16.mxu0 %v5035
  %5618 = vmatpush2.bf16.msra.mxu0 %v5034
  %5619 = vmatprep.subr.bf16.mxu0 %v5029
  %5620 = vmatpush2.bf16.msra.mxu0 %v5028
  %5621 = vmatprep.mubr.bf16.mxu0 %v3123
  %5622 = vmatmul.mubr.bf16.gmra.mxu0 %v3122
  %v5623 = vpop.f32.mrf.mxu0
  %v5624 = vadd.f32 %v5581, %v5623
  %v5625 = vpop.f32.mrf.mxu0
  %v5626 = vadd.f32 %v5583, %v5625
  %v5627 = vpop.f32.mrf.mxu0
  %v5628 = vadd.f32 %v5585, %v5627
  %v5629 = vpop.f32.mrf.mxu0
  %v5630 = vadd.f32 %v5587, %v5629
  %5631 = vdwg.mxu0
  %5632 = vmatprep.subr.bf16.mxu0 %v4737
  %5633 = vmatpush1.bf16.msra.mxu0 %v4736
  %5634 = vmatprep.subr.bf16.mxu0 %v4731
  %5635 = vmatpush1.bf16.msra.mxu0 %v4730
  %5636 = vmatprep.subr.bf16.mxu0 %v4725
  %5637 = vmatpush1.bf16.msra.mxu0 %v4724
  %5638 = vmatprep.subr.bf16.mxu0 %v4719
  %5639 = vmatpush1.bf16.msra.mxu0 %v4718
  %5640 = vmatprep.subr.bf16.mxu0 %v4713
  %5641 = vmatpush1.bf16.msra.mxu0 %v4712
  %5642 = vmatprep.subr.bf16.mxu0 %v4707
  %5643 = vmatpush1.bf16.msra.mxu0 %v4706
  %5644 = vmatprep.subr.bf16.mxu0 %v4701
  %5645 = vmatpush1.bf16.msra.mxu0 %v4700
  %5646 = vmatprep.subr.bf16.mxu0 %v4695
  %5647 = vmatpush1.bf16.msra.mxu0 %v4694
  %5648 = vmatprep.subr.bf16.mxu0 %v4785
  %5649 = vmatpush2.bf16.msra.mxu0 %v4784
  %5650 = vmatprep.subr.bf16.mxu0 %v4779
  %5651 = vmatpush2.bf16.msra.mxu0 %v4778
  %5652 = vmatprep.subr.bf16.mxu0 %v4773
  %5653 = vmatpush2.bf16.msra.mxu0 %v4772
  %5654 = vmatprep.subr.bf16.mxu0 %v4767
  %5655 = vmatpush2.bf16.msra.mxu0 %v4766
  %5656 = vmatprep.subr.bf16.mxu0 %v4761
  %5657 = vmatpush2.bf16.msra.mxu0 %v4760
  %5658 = vmatprep.subr.bf16.mxu0 %v4755
  %5659 = vmatpush2.bf16.msra.mxu0 %v4754
  %5660 = vmatprep.subr.bf16.mxu0 %v4749
  %5661 = vmatpush2.bf16.msra.mxu0 %v4748
  %5662 = vmatprep.subr.bf16.mxu0 %v4743
  %5663 = vmatpush2.bf16.msra.mxu0 %v4742
  %5664 = vmatprep.mubr.bf16.mxu0 %v3117
  %5665 = vmatmul.mubr.bf16.gmra.mxu0 %v3116
  %v5666 = vpop.f32.mrf.mxu0
  %v5667 = vadd.f32 %v3521, %v5666
  %v5668 = vpop.f32.mrf.mxu0
  %v5669 = vadd.f32 %v3525, %v5668
  %v5670 = vpop.f32.mrf.mxu0
  %v5671 = vadd.f32 %v3521, %v5670
  %v5672 = vpop.f32.mrf.mxu0
  %v5673 = vadd.f32 %v3525, %v5672
  %5674 = vdwg.mxu0
  %5675 = vmatprep.subr.bf16.mxu0 %v4833
  %5676 = vmatpush1.bf16.msra.mxu0 %v4832
  %5677 = vmatprep.subr.bf16.mxu0 %v4827
  %5678 = vmatpush1.bf16.msra.mxu0 %v4826
  %5679 = vmatprep.subr.bf16.mxu0 %v4821
  %5680 = vmatpush1.bf16.msra.mxu0 %v4820
  %5681 = vmatprep.subr.bf16.mxu0 %v4815
  %5682 = vmatpush1.bf16.msra.mxu0 %v4814
  %5683 = vmatprep.subr.bf16.mxu0 %v4809
  %5684 = vmatpush1.bf16.msra.mxu0 %v4808
  %5685 = vmatprep.subr.bf16.mxu0 %v4803
  %5686 = vmatpush1.bf16.msra.mxu0 %v4802
  %5687 = vmatprep.subr.bf16.mxu0 %v4797
  %5688 = vmatpush1.bf16.msra.mxu0 %v4796
  %5689 = vmatprep.subr.bf16.mxu0 %v4791
  %5690 = vmatpush1.bf16.msra.mxu0 %v4790
  %5691 = vmatprep.subr.bf16.mxu0 %v4881
  %5692 = vmatpush2.bf16.msra.mxu0 %v4880
  %5693 = vmatprep.subr.bf16.mxu0 %v4875
  %5694 = vmatpush2.bf16.msra.mxu0 %v4874
  %5695 = vmatprep.subr.bf16.mxu0 %v4869
  %5696 = vmatpush2.bf16.msra.mxu0 %v4868
  %5697 = vmatprep.subr.bf16.mxu0 %v4863
  %5698 = vmatpush2.bf16.msra.mxu0 %v4862
  %5699 = vmatprep.subr.bf16.mxu0 %v4857
  %5700 = vmatpush2.bf16.msra.mxu0 %v4856
  %5701 = vmatprep.subr.bf16.mxu0 %v4851
  %5702 = vmatpush2.bf16.msra.mxu0 %v4850
  %5703 = vmatprep.subr.bf16.mxu0 %v4845
  %5704 = vmatpush2.bf16.msra.mxu0 %v4844
  %5705 = vmatprep.subr.bf16.mxu0 %v4839
  %5706 = vmatpush2.bf16.msra.mxu0 %v4838
  %5707 = vmatprep.mubr.bf16.mxu0 %v3119
  %5708 = vmatmul.mubr.bf16.gmra.mxu0 %v3118
  %v5709 = vpop.f32.mrf.mxu0
  %v5710 = vadd.f32 %v5667, %v5709
  %v5711 = vpop.f32.mrf.mxu0
  %v5712 = vadd.f32 %v5669, %v5711
  %v5713 = vpop.f32.mrf.mxu0
  %v5714 = vadd.f32 %v5671, %v5713
  %v5715 = vpop.f32.mrf.mxu0
  %v5716 = vadd.f32 %v5673, %v5715
  %5717 = vdwg.mxu0
  %5718 = vmatprep.subr.bf16.mxu0 %v4929
  %5719 = vmatpush1.bf16.msra.mxu0 %v4928
  %5720 = vmatprep.subr.bf16.mxu0 %v4923
  %5721 = vmatpush1.bf16.msra.mxu0 %v4922
  %5722 = vmatprep.subr.bf16.mxu0 %v4917
  %5723 = vmatpush1.bf16.msra.mxu0 %v4916
  %5724 = vmatprep.subr.bf16.mxu0 %v4911
  %5725 = vmatpush1.bf16.msra.mxu0 %v4910
  %5726 = vmatprep.subr.bf16.mxu0 %v4905
  %5727 = vmatpush1.bf16.msra.mxu0 %v4904
  %5728 = vmatprep.subr.bf16.mxu0 %v4899
  %5729 = vmatpush1.bf16.msra.mxu0 %v4898
  %5730 = vmatprep.subr.bf16.mxu0 %v4893
  %5731 = vmatpush1.bf16.msra.mxu0 %v4892
  %5732 = vmatprep.subr.bf16.mxu0 %v4887
  %5733 = vmatpush1.bf16.msra.mxu0 %v4886
  %5734 = vmatprep.subr.bf16.mxu0 %v4977
  %5735 = vmatpush2.bf16.msra.mxu0 %v4976
  %5736 = vmatprep.subr.bf16.mxu0 %v4971
  %5737 = vmatpush2.bf16.msra.mxu0 %v4970
  %5738 = vmatprep.subr.bf16.mxu0 %v4965
  %5739 = vmatpush2.bf16.msra.mxu0 %v4964
  %5740 = vmatprep.subr.bf16.mxu0 %v4959
  %5741 = vmatpush2.bf16.msra.mxu0 %v4958
  %5742 = vmatprep.subr.bf16.mxu0 %v4953
  %5743 = vmatpush2.bf16.msra.mxu0 %v4952
  %5744 = vmatprep.subr.bf16.mxu0 %v4947
  %5745 = vmatpush2.bf16.msra.mxu0 %v4946
  %5746 = vmatprep.subr.bf16.mxu0 %v4941
  %5747 = vmatpush2.bf16.msra.mxu0 %v4940
  %5748 = vmatprep.subr.bf16.mxu0 %v4935
  %5749 = vmatpush2.bf16.msra.mxu0 %v4934
  %5750 = vmatprep.mubr.bf16.mxu0 %v3121
  %5751 = vmatmul.mubr.bf16.gmra.mxu0 %v3120
  %v5752 = vpop.f32.mrf.mxu0
  %v5753 = vadd.f32 %v5710, %v5752
  %v5754 = vpop.f32.mrf.mxu0
  %v5755 = vadd.f32 %v5712, %v5754
  %v5756 = vpop.f32.mrf.mxu0
  %v5757 = vadd.f32 %v5714, %v5756
  %v5758 = vpop.f32.mrf.mxu0
  %v5759 = vadd.f32 %v5716, %v5758
  %5760 = vdwg.mxu0
  %5761 = vmatprep.subr.bf16.mxu0 %v5025
  %5762 = vmatpush1.bf16.msra.mxu0 %v5024
  %5763 = vmatprep.subr.bf16.mxu0 %v5019
  %5764 = vmatpush1.bf16.msra.mxu0 %v5018
  %5765 = vmatprep.subr.bf16.mxu0 %v5013
  %5766 = vmatpush1.bf16.msra.mxu0 %v5012
  %5767 = vmatprep.subr.bf16.mxu0 %v5007
  %5768 = vmatpush1.bf16.msra.mxu0 %v5006
  %5769 = vmatprep.subr.bf16.mxu0 %v5001
  %5770 = vmatpush1.bf16.msra.mxu0 %v5000
  %5771 = vmatprep.subr.bf16.mxu0 %v4995
  %5772 = vmatpush1.bf16.msra.mxu0 %v4994
  %5773 = vmatprep.subr.bf16.mxu0 %v4989
  %5774 = vmatpush1.bf16.msra.mxu0 %v4988
  %5775 = vmatprep.subr.bf16.mxu0 %v4983
  %5776 = vmatpush1.bf16.msra.mxu0 %v4982
  %5777 = vmatprep.subr.bf16.mxu0 %v5073
  %5778 = vmatpush2.bf16.msra.mxu0 %v5072
  %5779 = vmatprep.subr.bf16.mxu0 %v5067
  %5780 = vmatpush2.bf16.msra.mxu0 %v5066
  %5781 = vmatprep.subr.bf16.mxu0 %v5061
  %5782 = vmatpush2.bf16.msra.mxu0 %v5060
  %5783 = vmatprep.subr.bf16.mxu0 %v5055
  %5784 = vmatpush2.bf16.msra.mxu0 %v5054
  %5785 = vmatprep.subr.bf16.mxu0 %v5049
  %5786 = vmatpush2.bf16.msra.mxu0 %v5048
  %5787 = vmatprep.subr.bf16.mxu0 %v5043
  %5788 = vmatpush2.bf16.msra.mxu0 %v5042
  %5789 = vmatprep.subr.bf16.mxu0 %v5037
  %5790 = vmatpush2.bf16.msra.mxu0 %v5036
  %5791 = vmatprep.subr.bf16.mxu0 %v5031
  %5792 = vmatpush2.bf16.msra.mxu0 %v5030
  %5793 = vmatprep.mubr.bf16.mxu0 %v3123
  %5794 = vmatmul.mubr.bf16.gmra.mxu0 %v3122
  %v5795 = vpop.f32.mrf.mxu0
  %v5796 = vadd.f32 %v5753, %v5795
  %v5797 = vpop.f32.mrf.mxu0
  %v5798 = vadd.f32 %v5755, %v5797
  %v5799 = vpop.f32.mrf.mxu0
  %v5800 = vadd.f32 %v5757, %v5799
  %v5801 = vpop.f32.mrf.mxu0
  %v5802 = vadd.f32 %v5759, %v5801
  %5803 = vdwg.mxu0
  %5804 = vmatprep.subr.bf16.mxu0 %v4739
  %5805 = vmatpush1.bf16.msra.mxu0 %v4738
  %5806 = vmatprep.subr.bf16.mxu0 %v4733
  %5807 = vmatpush1.bf16.msra.mxu0 %v4732
  %5808 = vmatprep.subr.bf16.mxu0 %v4727
  %5809 = vmatpush1.bf16.msra.mxu0 %v4726
  %5810 = vmatprep.subr.bf16.mxu0 %v4721
  %5811 = vmatpush1.bf16.msra.mxu0 %v4720
  %5812 = vmatprep.subr.bf16.mxu0 %v4715
  %5813 = vmatpush1.bf16.msra.mxu0 %v4714
  %5814 = vmatprep.subr.bf16.mxu0 %v4709
  %5815 = vmatpush1.bf16.msra.mxu0 %v4708
  %5816 = vmatprep.subr.bf16.mxu0 %v4703
  %5817 = vmatpush1.bf16.msra.mxu0 %v4702
  %5818 = vmatprep.subr.bf16.mxu0 %v4697
  %5819 = vmatpush1.bf16.msra.mxu0 %v4696
  %5820 = vmatprep.subr.bf16.mxu0 %v4787
  %5821 = vmatpush2.bf16.msra.mxu0 %v4786
  %5822 = vmatprep.subr.bf16.mxu0 %v4781
  %5823 = vmatpush2.bf16.msra.mxu0 %v4780
  %5824 = vmatprep.subr.bf16.mxu0 %v4775
  %5825 = vmatpush2.bf16.msra.mxu0 %v4774
  %5826 = vmatprep.subr.bf16.mxu0 %v4769
  %5827 = vmatpush2.bf16.msra.mxu0 %v4768
  %5828 = vmatprep.subr.bf16.mxu0 %v4763
  %5829 = vmatpush2.bf16.msra.mxu0 %v4762
  %5830 = vmatprep.subr.bf16.mxu0 %v4757
  %5831 = vmatpush2.bf16.msra.mxu0 %v4756
  %5832 = vmatprep.subr.bf16.mxu0 %v4751
  %5833 = vmatpush2.bf16.msra.mxu0 %v4750
  %5834 = vmatprep.subr.bf16.mxu0 %v4745
  %5835 = vmatpush2.bf16.msra.mxu0 %v4744
  %5836 = vmatprep.mubr.bf16.mxu0 %v3117
  %5837 = vmatmul.mubr.bf16.gmra.mxu0 %v3116
  %v5838 = vpop.f32.mrf.mxu0
  %v5839 = vadd.f32 %v3529, %v5838
  %v5840 = vpop.f32.mrf.mxu0
  %v5841 = vadd.f32 %v3533, %v5840
  %v5842 = vpop.f32.mrf.mxu0
  %v5843 = vadd.f32 %v3529, %v5842
  %v5844 = vpop.f32.mrf.mxu0
  %v5845 = vadd.f32 %v3533, %v5844
  %5846 = vdwg.mxu0
  %5847 = vmatprep.subr.bf16.mxu0 %v4835
  %5848 = vmatpush1.bf16.msra.mxu0 %v4834
  %5849 = vmatprep.subr.bf16.mxu0 %v4829
  %5850 = vmatpush1.bf16.msra.mxu0 %v4828
  %5851 = vmatprep.subr.bf16.mxu0 %v4823
  %5852 = vmatpush1.bf16.msra.mxu0 %v4822
  %5853 = vmatprep.subr.bf16.mxu0 %v4817
  %5854 = vmatpush1.bf16.msra.mxu0 %v4816
  %5855 = vmatprep.subr.bf16.mxu0 %v4811
  %5856 = vmatpush1.bf16.msra.mxu0 %v4810
  %5857 = vmatprep.subr.bf16.mxu0 %v4805
  %5858 = vmatpush1.bf16.msra.mxu0 %v4804
  %5859 = vmatprep.subr.bf16.mxu0 %v4799
  %5860 = vmatpush1.bf16.msra.mxu0 %v4798
  %5861 = vmatprep.subr.bf16.mxu0 %v4793
  %5862 = vmatpush1.bf16.msra.mxu0 %v4792
  %5863 = vmatprep.subr.bf16.mxu0 %v4883
  %5864 = vmatpush2.bf16.msra.mxu0 %v4882
  %5865 = vmatprep.subr.bf16.mxu0 %v4877
  %5866 = vmatpush2.bf16.msra.mxu0 %v4876
  %5867 = vmatprep.subr.bf16.mxu0 %v4871
  %5868 = vmatpush2.bf16.msra.mxu0 %v4870
  %5869 = vmatprep.subr.bf16.mxu0 %v4865
  %5870 = vmatpush2.bf16.msra.mxu0 %v4864
  %5871 = vmatprep.subr.bf16.mxu0 %v4859
  %5872 = vmatpush2.bf16.msra.mxu0 %v4858
  %5873 = vmatprep.subr.bf16.mxu0 %v4853
  %5874 = vmatpush2.bf16.msra.mxu0 %v4852
  %5875 = vmatprep.subr.bf16.mxu0 %v4847
  %5876 = vmatpush2.bf16.msra.mxu0 %v4846
  %5877 = vmatprep.subr.bf16.mxu0 %v4841
  %5878 = vmatpush2.bf16.msra.mxu0 %v4840
  %5879 = vmatprep.mubr.bf16.mxu0 %v3119
  %5880 = vmatmul.mubr.bf16.gmra.mxu0 %v3118
  %v5881 = vpop.f32.mrf.mxu0
  %v5882 = vadd.f32 %v5839, %v5881
  %v5883 = vpop.f32.mrf.mxu0
  %v5884 = vadd.f32 %v5841, %v5883
  %v5885 = vpop.f32.mrf.mxu0
  %v5886 = vadd.f32 %v5843, %v5885
  %v5887 = vpop.f32.mrf.mxu0
  %v5888 = vadd.f32 %v5845, %v5887
  %5889 = vdwg.mxu0
  %5890 = vmatprep.subr.bf16.mxu0 %v4931
  %5891 = vmatpush1.bf16.msra.mxu0 %v4930
  %5892 = vmatprep.subr.bf16.mxu0 %v4925
  %5893 = vmatpush1.bf16.msra.mxu0 %v4924
  %5894 = vmatprep.subr.bf16.mxu0 %v4919
  %5895 = vmatpush1.bf16.msra.mxu0 %v4918
  %5896 = vmatprep.subr.bf16.mxu0 %v4913
  %5897 = vmatpush1.bf16.msra.mxu0 %v4912
  %5898 = vmatprep.subr.bf16.mxu0 %v4907
  %5899 = vmatpush1.bf16.msra.mxu0 %v4906
  %5900 = vmatprep.subr.bf16.mxu0 %v4901
  %5901 = vmatpush1.bf16.msra.mxu0 %v4900
  %5902 = vmatprep.subr.bf16.mxu0 %v4895
  %5903 = vmatpush1.bf16.msra.mxu0 %v4894
  %5904 = vmatprep.subr.bf16.mxu0 %v4889
  %5905 = vmatpush1.bf16.msra.mxu0 %v4888
  %5906 = vmatprep.subr.bf16.mxu0 %v4979
  %5907 = vmatpush2.bf16.msra.mxu0 %v4978
  %5908 = vmatprep.subr.bf16.mxu0 %v4973
  %5909 = vmatpush2.bf16.msra.mxu0 %v4972
  %5910 = vmatprep.subr.bf16.mxu0 %v4967
  %5911 = vmatpush2.bf16.msra.mxu0 %v4966
  %5912 = vmatprep.subr.bf16.mxu0 %v4961
  %5913 = vmatpush2.bf16.msra.mxu0 %v4960
  %5914 = vmatprep.subr.bf16.mxu0 %v4955
  %5915 = vmatpush2.bf16.msra.mxu0 %v4954
  %5916 = vmatprep.subr.bf16.mxu0 %v4949
  %5917 = vmatpush2.bf16.msra.mxu0 %v4948
  %5918 = vmatprep.subr.bf16.mxu0 %v4943
  %5919 = vmatpush2.bf16.msra.mxu0 %v4942
  %5920 = vmatprep.subr.bf16.mxu0 %v4937
  %5921 = vmatpush2.bf16.msra.mxu0 %v4936
  %5922 = vmatprep.mubr.bf16.mxu0 %v3121
  %5923 = vmatmul.mubr.bf16.gmra.mxu0 %v3120
  %v5924 = vpop.f32.mrf.mxu0
  %v5925 = vadd.f32 %v5882, %v5924
  %v5926 = vpop.f32.mrf.mxu0
  %v5927 = vadd.f32 %v5884, %v5926
  %v5928 = vpop.f32.mrf.mxu0
  %v5929 = vadd.f32 %v5886, %v5928
  %v5930 = vpop.f32.mrf.mxu0
  %v5931 = vadd.f32 %v5888, %v5930
  %5932 = vdwg.mxu0
  %5933 = vmatprep.subr.bf16.mxu0 %v5027
  %5934 = vmatpush1.bf16.msra.mxu0 %v5026
  %5935 = vmatprep.subr.bf16.mxu0 %v5021
  %5936 = vmatpush1.bf16.msra.mxu0 %v5020
  %5937 = vmatprep.subr.bf16.mxu0 %v5015
  %5938 = vmatpush1.bf16.msra.mxu0 %v5014
  %5939 = vmatprep.subr.bf16.mxu0 %v5009
  %5940 = vmatpush1.bf16.msra.mxu0 %v5008
  %5941 = vmatprep.subr.bf16.mxu0 %v5003
  %5942 = vmatpush1.bf16.msra.mxu0 %v5002
  %5943 = vmatprep.subr.bf16.mxu0 %v4997
  %5944 = vmatpush1.bf16.msra.mxu0 %v4996
  %5945 = vmatprep.subr.bf16.mxu0 %v4991
  %5946 = vmatpush1.bf16.msra.mxu0 %v4990
  %5947 = vmatprep.subr.bf16.mxu0 %v4985
  %5948 = vmatpush1.bf16.msra.mxu0 %v4984
  %5949 = vmatprep.subr.bf16.mxu0 %v5075
  %5950 = vmatpush2.bf16.msra.mxu0 %v5074
  %5951 = vmatprep.subr.bf16.mxu0 %v5069
  %5952 = vmatpush2.bf16.msra.mxu0 %v5068
  %5953 = vmatprep.subr.bf16.mxu0 %v5063
  %5954 = vmatpush2.bf16.msra.mxu0 %v5062
  %5955 = vmatprep.subr.bf16.mxu0 %v5057
  %5956 = vmatpush2.bf16.msra.mxu0 %v5056
  %5957 = vmatprep.subr.bf16.mxu0 %v5051
  %5958 = vmatpush2.bf16.msra.mxu0 %v5050
  %5959 = vmatprep.subr.bf16.mxu0 %v5045
  %5960 = vmatpush2.bf16.msra.mxu0 %v5044
  %5961 = vmatprep.subr.bf16.mxu0 %v5039
  %5962 = vmatpush2.bf16.msra.mxu0 %v5038
  %5963 = vmatprep.subr.bf16.mxu0 %v5033
  %5964 = vmatpush2.bf16.msra.mxu0 %v5032
  %5965 = vmatprep.mubr.bf16.mxu0 %v3123
  %5966 = vmatmul.mubr.bf16.gmra.mxu0 %v3122
  %v5967 = vpop.f32.mrf.mxu0
  %v5968 = vadd.f32 %v5925, %v5967
  %v5969 = vpop.f32.mrf.mxu0
  %v5970 = vadd.f32 %v5927, %v5969
  %v5971 = vpop.f32.mrf.mxu0
  %v5972 = vadd.f32 %v5929, %v5971
  %v5973 = vpop.f32.mrf.mxu0
  %v5974 = vadd.f32 %v5931, %v5973
  %5975 = vdwg.mxu0
  %v5976 = vadd.f32 %v220, %v5624
  %v5977 = vadd.f32 %v221, %v5626
  %v5978 = vadd.f32 %v222, %v5796
  %v5979 = vadd.f32 %v223, %v5798
  %v5980 = vadd.f32 %v224, %v5968
  %v5981 = vadd.f32 %v225, %v5970
  %v5982 = vadd.f32 %v226, %v5628
  %v5983 = vadd.f32 %v227, %v5630
  %v5984 = vadd.f32 %v228, %v5800
  %v5985 = vadd.f32 %v229, %v5802
  %v5986 = vadd.f32 %v230, %v5972
  %v5987 = vadd.f32 %v231, %v5974
  %v5988 = vld [vmem:[%s8] sm:$0x3f]
  %v5989 = vld [vmem:[%s9] sm:$0x3f]
  %v5990 = vadd.f32 %v5976, %v5977
  %v5991 = vadd.f32 %v5990, %v5978
  %v5992 = vadd.f32 %v5991, %v5979
  %v5993 = vadd.f32 %v5992, %v5980
  %v5994 = vadd.f32 %v5993, %v5981
  %5995 = vadd.xlane.f32.xlu0 %v5994
  %v5996 = vpop.xlane.xlu0 %5995
  %v5997 = vadd.f32 %v5982, %v5983
  %v5998 = vadd.f32 %v5997, %v5984
  %v5999 = vadd.f32 %v5998, %v5985
  %v6000 = vadd.f32 %v5999, %v5986
  %v6001 = vadd.f32 %v6000, %v5987
  %6002 = vadd.xlane.f32.xlu0 %v6001
  %v6003 = vpop.xlane.xlu0 %6002
  %v6004 = vmul.f32 %v5996, %v87
  %v6005 = vmul.f32 %v6003, %v87
  %v6006 = vsub.f32 %v5976, %v6004
  %v6007 = vsub.f32 %v5977, %v6004
  %v6008 = vsub.f32 %v5978, %v6004
  %v6009 = vsub.f32 %v5979, %v6004
  %v6010 = vsub.f32 %v5980, %v6004
  %v6011 = vsub.f32 %v5981, %v6004
  %v6012 = vsub.f32 %v5982, %v6005
  %v6013 = vsub.f32 %v5983, %v6005
  %v6014 = vsub.f32 %v5984, %v6005
  %v6015 = vsub.f32 %v5985, %v6005
  %v6016 = vsub.f32 %v5986, %v6005
  %v6017 = vsub.f32 %v5987, %v6005
  %v6018 = vmul.f32 %v6006, %v6006
  %v6019 = vmul.f32 %v6007, %v6007
  %v6020 = vmul.f32 %v6008, %v6008
  %v6021 = vmul.f32 %v6009, %v6009
  %v6022 = vmul.f32 %v6010, %v6010
  %v6023 = vmul.f32 %v6011, %v6011
  %v6024 = vmul.f32 %v6012, %v6012
  %v6025 = vmul.f32 %v6013, %v6013
  %v6026 = vmul.f32 %v6014, %v6014
  %v6027 = vmul.f32 %v6015, %v6015
  %v6028 = vmul.f32 %v6016, %v6016
  %v6029 = vmul.f32 %v6017, %v6017
  %v6030 = vadd.f32 %v6018, %v6019
  %v6031 = vadd.f32 %v6030, %v6020
  %v6032 = vadd.f32 %v6031, %v6021
  %v6033 = vadd.f32 %v6032, %v6022
  %v6034 = vadd.f32 %v6033, %v6023
  %6035 = vadd.xlane.f32.xlu0 %v6034
  %v6036 = vpop.xlane.xlu0 %6035
  %v6037 = vadd.f32 %v6024, %v6025
  %v6038 = vadd.f32 %v6037, %v6026
  %v6039 = vadd.f32 %v6038, %v6027
  %v6040 = vadd.f32 %v6039, %v6028
  %v6041 = vadd.f32 %v6040, %v6029
  %6042 = vadd.xlane.f32.xlu0 %v6041
  %v6043 = vpop.xlane.xlu0 %6042
  %v6044 = vmul.f32 %v6036, %v87
  %v6045 = vmul.f32 %v6043, %v87
  %v6046 = vadd.f32 %v6044, 1e-05
  %v6047 = vadd.f32 %v6045, 1e-05
  %v6048 = vrsqrt.pop %v6046
  %v6049 = vrsqrt.pop %v6047
  %v6050 = vmul.f32 %v6006, %v6048
  %v6051 = vmul.f32 %v6007, %v6048
  %v6052 = vmul.f32 %v6008, %v6048
  %v6053 = vmul.f32 %v6009, %v6048
  %v6054 = vmul.f32 %v6010, %v6048
  %v6055 = vmul.f32 %v6011, %v6048
  %v6056 = vmul.f32 %v6012, %v6049
  %v6057 = vmul.f32 %v6013, %v6049
  %v6058 = vmul.f32 %v6014, %v6049
  %v6059 = vmul.f32 %v6015, %v6049
  %v6060 = vmul.f32 %v6016, %v6049
  %v6061 = vmul.f32 %v6017, %v6049
  %v6063 = vlaneseq
  %v6064 = vshrl.u32 %v6063, 7
  %v6065 = vsub.s32 0, %v6064
  %v6066 = vrot.slane %v5988, %v6065
  %v6067 = vlaneseq
  %v6068 = vshrl.u32 %v6067, 7
  %v6069 = vsub.s32 1, %v6068
  %v6070 = vrot.slane %v5988, %v6069
  %v6071 = vlaneseq
  %v6072 = vshrl.u32 %v6071, 7
  %v6073 = vsub.s32 2, %v6072
  %v6074 = vrot.slane %v5988, %v6073
  %v6075 = vlaneseq
  %v6076 = vshrl.u32 %v6075, 7
  %v6077 = vsub.s32 3, %v6076
  %v6078 = vrot.slane %v5988, %v6077
  %v6079 = vlaneseq
  %v6080 = vshrl.u32 %v6079, 7
  %v6081 = vsub.s32 4, %v6080
  %v6082 = vrot.slane %v5988, %v6081
  %v6083 = vlaneseq
  %v6084 = vshrl.u32 %v6083, 7
  %v6085 = vsub.s32 5, %v6084
  %v6086 = vrot.slane %v5988, %v6085
  %v6093 = vmul.f32 %v6050, %v6066
  %v6094 = vmul.f32 %v6051, %v6070
  %v6095 = vmul.f32 %v6052, %v6074
  %v6096 = vmul.f32 %v6053, %v6078
  %v6097 = vmul.f32 %v6054, %v6082
  %v6098 = vmul.f32 %v6055, %v6086
  %v6099 = vmul.f32 %v6056, %v6066
  %v6100 = vmul.f32 %v6057, %v6070
  %v6101 = vmul.f32 %v6058, %v6074
  %v6102 = vmul.f32 %v6059, %v6078
  %v6103 = vmul.f32 %v6060, %v6082
  %v6104 = vmul.f32 %v6061, %v6086
  %v6106 = vlaneseq
  %v6107 = vshrl.u32 %v6106, 7
  %v6108 = vsub.s32 0, %v6107
  %v6109 = vrot.slane %v5989, %v6108
  %v6110 = vlaneseq
  %v6111 = vshrl.u32 %v6110, 7
  %v6112 = vsub.s32 1, %v6111
  %v6113 = vrot.slane %v5989, %v6112
  %v6114 = vlaneseq
  %v6115 = vshrl.u32 %v6114, 7
  %v6116 = vsub.s32 2, %v6115
  %v6117 = vrot.slane %v5989, %v6116
  %v6118 = vlaneseq
  %v6119 = vshrl.u32 %v6118, 7
  %v6120 = vsub.s32 3, %v6119
  %v6121 = vrot.slane %v5989, %v6120
  %v6122 = vlaneseq
  %v6123 = vshrl.u32 %v6122, 7
  %v6124 = vsub.s32 4, %v6123
  %v6125 = vrot.slane %v5989, %v6124
  %v6126 = vlaneseq
  %v6127 = vshrl.u32 %v6126, 7
  %v6128 = vsub.s32 5, %v6127
  %v6129 = vrot.slane %v5989, %v6128
  %v6136 = vadd.f32 %v6093, %v6109
  %v6137 = vadd.f32 %v6094, %v6113
  %v6138 = vadd.f32 %v6095, %v6117
  %v6139 = vadd.f32 %v6096, %v6121
  %v6140 = vadd.f32 %v6097, %v6125
  %v6141 = vadd.f32 %v6098, %v6129
  %v6142 = vadd.f32 %v6099, %v6109
  %v6143 = vadd.f32 %v6100, %v6113
  %v6144 = vadd.f32 %v6101, %v6117
  %v6145 = vadd.f32 %v6102, %v6121
  %v6146 = vadd.f32 %v6103, %v6125
  %v6147 = vadd.f32 %v6104, %v6129
  %6148 = vst [vmem:[%s10] sm:$0xff] %v6136
  %6149 = vst [vmem:[%s10 + $0x8] sm:$0xff] %v6137
  %6150 = vst [vmem:[%s10 + $0x10] sm:$0xff] %v6138
  %6151 = vst [vmem:[%s10 + $0x18] sm:$0xff] %v6139
  %6152 = vst [vmem:[%s10 + $0x20] sm:$0xff] %v6140
  %6153 = vst [vmem:[%s10 + $0x28] sm:$0xff] %v6141
  %6154 = vst [vmem:[%s10 + $0x30] sm:$0xff] %v6142
  %6155 = vst [vmem:[%s10 + $0x38] sm:$0xff] %v6143
  %6156 = vst [vmem:[%s10 + $0x40] sm:$0xff] %v6144
  %6157 = vst [vmem:[%s10 + $0x48] sm:$0xff] %v6145
  %6158 = vst [vmem:[%s10 + $0x50] sm:$0xff] %v6146
  %6159 = vst [vmem:[%s10 + $0x58] sm:$0xff] %v6147
  // Predicated region
  $region42: #{gpt_forward.8} parent=0 // pred_check
    _
  $region43: #{gpt_forward.8} parent=0 // pred_check_branch
    %6161 = sbr.rel (0) target = $region45
  $region44: #{gpt_forward.8} parent=0 // pred_region
    _
  $region45: #{gpt_forward.8} parent=0 // pred_fallthru
    _
  // Predicated region
  $region46: #{gpt_forward.8} parent=0 // pred_check
    _
  $region47: #{gpt_forward.8} parent=0 // pred_check_branch
    %6163 = sbr.rel (0) target = $region49
  $region48: #{gpt_forward.8} parent=0 // pred_region
    _
  $region49: #{gpt_forward.8} parent=0 // pred_fallthru
    _

</llo_original>
